<compile_context>
chip_gen: v6e
topology: v6e:2x2x1
jax: 0.10.0
libtpu: 0.0.40
codegen_flags: <defaults>
</compile_context>

<pallas_src>
import functools

import jax
import jax.numpy as jnp
from jax import lax
from jax.experimental import pallas as pl
from jax.experimental.pallas import tpu as pltpu  # noqa: F401


# ---------------------------------------------------------------------------
# Fused Pallas kernel: conv1+ReLU -> conv2+ReLU -> conv3+ReLU -> Linear
# Everything is a 2-D f32 value; only ref reads, static slices, jnp.dot,
# broadcast adds and maximum are used.
# ---------------------------------------------------------------------------
def _encoder_fused_kernel(xg_ref, w1_ref, b1_ref, w2_ref, b2_ref,
                          w3_ref, b3_ref, wl_ref, bl_ref, o_ref,
                          *, taps, l3, batch):
    f32 = jnp.float32

    # ---- conv1 + ReLU : one lane-dense matmul over all nested patch columns.
    # xg_ref: (taps, taps*taps*l3*batch), columns ordered (k2, k3, l3, b).
    a1 = jnp.dot(w1_ref[...], xg_ref[...], preferred_element_type=f32)
    a1 = jnp.maximum(a1 + b1_ref[...], 0.0)            # (C1, taps*taps*l3*B)

    # ---- conv2 + ReLU : accumulate over the 7 taps (k2) ---------------------
    n2 = taps * l3 * batch
    acc2 = jnp.dot(w2_ref[0], a1[:, :n2], preferred_element_type=f32)
    for k2 in range(1, taps):
        acc2 = acc2 + jnp.dot(w2_ref[k2], a1[:, k2 * n2:(k2 + 1) * n2],
                              preferred_element_type=f32)
    a2 = jnp.maximum(acc2 + b2_ref[...], 0.0)           # (C2, taps*l3*B)

    # ---- conv3 + ReLU : accumulate over the 7 taps (k3) ---------------------
    n3 = l3 * batch
    acc3 = jnp.dot(w3_ref[0], a2[:, :n3], preferred_element_type=f32)
    for k3 in range(1, taps):
        acc3 = acc3 + jnp.dot(w3_ref[k3], a2[:, k3 * n3:(k3 + 1) * n3],
                              preferred_element_type=f32)
    a3 = jnp.maximum(acc3 + b3_ref[...], 0.0)           # (C3, l3*B)

    # ---- Linear : accumulate over the 27 output positions l3 ----------------
    out = jnp.dot(wl_ref[0], a3[:, :batch], preferred_element_type=f32)
    for j in range(1, l3):
        out = out + jnp.dot(wl_ref[j], a3[:, j * batch:(j + 1) * batch],
                            preferred_element_type=f32)
    o_ref[...] = (out + bl_ref[...]).astype(o_ref.dtype)   # (latent, B)


# ---------------------------------------------------------------------------
# Wrapper: tiny XLA-side glue (input gather + weight permutations) + one call.
# ---------------------------------------------------------------------------
def encoder_blue_forward(params, x):
    """x: (B, 1, L0) -> (B, 1, latent_dim), matching Encoder_Blue.forward."""
    K = 7
    B, _, _ = x.shape
    filters = params["w1"].shape[0]
    C3 = 4 * filters
    latent = params["wl"].shape[0]
    L3 = params["wl"].shape[1] // C3            # = 27 for this module

    # Nested im2col of the raw input (one small gather on a 14 KB tensor).
    # pos[k1,k2,k3,l3] = 64*l3 + 16*k3 + 4*k2 + k1  (composition of 3 stride-4 convs)
    k = jnp.arange(K)
    base = 4 * k[:, None, None] + 16 * k[None, :, None] + 64 * jnp.arange(L3)[None, None, :]
    pos = k[:, None, None, None] + base[None, :, :, :]          # (K, K, K, L3)
    g = x[:, 0, :][:, pos]                                      # (B, k1, k2, k3, l3)
    xg = jnp.transpose(g, (1, 2, 3, 4, 0)).reshape(K, K * K * L3 * B)

    # Weight prep (hoisted out of the kernel, all trivially cheap).
    w1 = params["w1"][:, 0, :]                                  # (C1, K)
    w2 = jnp.transpose(params["w2"], (2, 0, 1))                 # (K, C2, C1)
    w3 = jnp.transpose(params["w3"], (2, 0, 1))                 # (K, C3, C2)
    # Fold torch's channel-major .view() into the Linear weight: wl[l3, o, c3]
    wl = jnp.transpose(params["wl"].reshape(latent, C3, L3), (2, 0, 1))
    b1 = params["b1"][:, None]
    b2 = params["b2"][:, None]
    b3 = params["b3"][:, None]
    bl = params["bl"][:, None]

    def full(shape):
        return pl.BlockSpec(shape, lambda: (0,) * len(shape))

    out = pl.pallas_call(
        functools.partial(_encoder_fused_kernel, taps=K, l3=L3, batch=B),
        out_shape=jax.ShapeDtypeStruct((latent, B), jnp.float32),
        in_specs=[full(xg.shape), full(w1.shape), full(b1.shape),
                  full(w2.shape), full(b2.shape),
                  full(w3.shape), full(b3.shape),
                  full(wl.shape), full(bl.shape)],
        out_specs=full((latent, B)),
    )(xg, w1, b1, w2, b2, w3, b3, wl, bl)

    return out.T.reshape(B, 1, latent)


encoder_blue_forward_jit = jax.jit(encoder_blue_forward)


# ---------------------------------------------------------------------------
# Pure-JAX reference (for the correctness check)
# ---------------------------------------------------------------------------
def encoder_blue_reference(params, x, filters):
    def conv(x, w, b, stride):
        y = lax.conv_general_dilated(
            x, w, window_strides=(stride,), padding="VALID",
            dimension_numbers=("NCH", "OIH", "NCH"))
        return y + b[None, :, None]

    x = jax.nn.relu(conv(x, params["w1"], params["b1"], 4))
    x = jax.nn.relu(conv(x, params["w2"], params["b2"], 4))
    x = conv(x, params["w3"], params["b3"], 4)
    B = x.shape[0]
    x = jax.nn.relu(x.reshape(B, 1, 4 * filters * 27))
    y = jnp.einsum("bif,of->bio", x, params["wl"]) + params["bl"]
    return y


# ---------------------------------------------------------------------------
# Deterministic parameter init (PyTorch-style uniform bounds)
# ---------------------------------------------------------------------------
def init_params(key, filters, latent_dim):
    def uniform(key, shape, fan_in):
        bound = 1.0 / jnp.sqrt(fan_in)
        return jax.random.uniform(key, shape, jnp.float32, -bound, bound)

    ks = jax.random.split(key, 8)
    p = {}
    p["w1"] = uniform(ks[0], (filters, 1, 7), 1 * 7)
    p["b1"] = uniform(ks[1], (filters,), 1 * 7)
    p["w2"] = uniform(ks[2], (2 * filters, filters, 7), filters * 7)
    p["b2"] = uniform(ks[3], (2 * filters,), filters * 7)
    p["w3"] = uniform(ks[4], (4 * filters, 2 * filters, 7), 2 * filters * 7)
    p["b3"] = uniform(ks[5], (4 * filters,), 2 * filters * 7)
    feat = 4 * filters * 27
    p["wl"] = uniform(ks[6], (latent_dim, feat), feat)
    p["bl"] = uniform(ks[7], (latent_dim,), feat)
    return p


if __name__ == "__main__":
    filters = 4
    latent_dim = 8
    batch = 2
    # The Linear layer requires the conv stack to end at length 27:
    # L3=27 <- L2=111 <- L1=447 <- L0=1791 (kernel=7, stride=4, valid padding).
    L0 = 1791

    key = jax.random.PRNGKey(0)
    pkey, xkey = jax.random.split(key)
    params = init_params(pkey, filters, latent_dim)
    x = jax.random.normal(xkey, (batch, 1, L0), dtype=jnp.float32)

    out = encoder_blue_forward_jit(params, x)
    out = jax.block_until_ready(out)

    ref = jax.block_until_ready(encoder_blue_reference(params, x, filters))
    assert out.shape == (batch, 1, latent_dim), out.shape
    max_err = float(jnp.max(jnp.abs(out - ref)))
    assert jnp.allclose(out, ref, atol=2e-4, rtol=2e-4), max_err
    print("KERNEL_OK")
</pallas_src>

<mosaic_0001>
module attributes {stable_mosaic.version = 11 : i64} {
  func.func @_encoder_fused_kernel(%arg0: memref<7x2646xf32, #tpu.memory_space<vmem>>, %arg1: memref<4x7xf32, #tpu.memory_space<vmem>>, %arg2: memref<4x1xf32, #tpu.memory_space<vmem>>, %arg3: memref<7x8x4xf32, #tpu.memory_space<vmem>>, %arg4: memref<8x1xf32, #tpu.memory_space<vmem>>, %arg5: memref<7x16x8xf32, #tpu.memory_space<vmem>>, %arg6: memref<16x1xf32, #tpu.memory_space<vmem>>, %arg7: memref<27x8x16xf32, #tpu.memory_space<vmem>>, %arg8: memref<8x1xf32, #tpu.memory_space<vmem>>, %arg9: memref<8x2xf32, #tpu.memory_space<vmem>>) attributes {dimension_semantics = [], scalar_prefetch = 0 : i64, scratch_operands = 0 : i64, tpu.core_type = #tpu.core_type<tc>} {
    %c0 = arith.constant 0 : index
    %c0_0 = arith.constant 0 : index
    %0 = vector.load %arg1[%c0, %c0_0] : memref<4x7xf32, #tpu.memory_space<vmem>>, vector<4x7xf32>
    %c0_1 = arith.constant 0 : index
    %c0_2 = arith.constant 0 : index
    %1 = vector.load %arg0[%c0_1, %c0_2] : memref<7x2646xf32, #tpu.memory_space<vmem>>, vector<7x2646xf32>
    %cst = arith.constant dense<0.000000e+00> : vector<4x2646xf32>
    %2 = tpu.matmul %0, %1, %cst {dimension_numbers = #tpu.dot_dimension_numbers<[1], [0], [0], [1], [0, 0, 1, 1], [], []>} : vector<4x7xf32>, vector<7x2646xf32>, vector<4x2646xf32> -> vector<4x2646xf32>
    %c0_3 = arith.constant 0 : index
    %c0_4 = arith.constant 0 : index
    %3 = vector.load %arg2[%c0_3, %c0_4] : memref<4x1xf32, #tpu.memory_space<vmem>>, vector<4x1xf32>
    %4 = vector.broadcast %3 : vector<4x1xf32> to vector<4x2646xf32>
    %5 = arith.addf %2, %4 : vector<4x2646xf32>
    %cst_5 = arith.constant 0.000000e+00 : f32
    %6 = vector.broadcast %cst_5 : f32 to vector<4x2646xf32>
    %7 = arith.maximumf %5, %6 : vector<4x2646xf32>
    %c0_6 = arith.constant 0 : index
    %c0_7 = arith.constant 0 : index
    %c0_8 = arith.constant 0 : index
    %8 = vector.load %arg3[%c0_6, %c0_7, %c0_8] : memref<7x8x4xf32, #tpu.memory_space<vmem>>, vector<1x8x4xf32>
    %9 = vector.shape_cast %8 : vector<1x8x4xf32> to vector<8x4xf32>
    %10 = vector.extract_strided_slice %7 {offsets = [0, 0], sizes = [4, 378], strides = [1, 1]} : vector<4x2646xf32> to vector<4x378xf32>
    %cst_9 = arith.constant dense<0.000000e+00> : vector<8x378xf32>
    %11 = tpu.matmul %9, %10, %cst_9 {dimension_numbers = #tpu.dot_dimension_numbers<[1], [0], [0], [1], [0, 0, 1, 1], [], []>} : vector<8x4xf32>, vector<4x378xf32>, vector<8x378xf32> -> vector<8x378xf32>
    %c1 = arith.constant 1 : index
    %c0_10 = arith.constant 0 : index
    %c0_11 = arith.constant 0 : index
    %12 = vector.load %arg3[%c1, %c0_10, %c0_11] : memref<7x8x4xf32, #tpu.memory_space<vmem>>, vector<1x8x4xf32>
    %13 = vector.shape_cast %12 : vector<1x8x4xf32> to vector<8x4xf32>
    %14 = vector.extract_strided_slice %7 {offsets = [0, 378], sizes = [4, 378], strides = [1, 1]} : vector<4x2646xf32> to vector<4x378xf32>
    %cst_12 = arith.constant dense<0.000000e+00> : vector<8x378xf32>
    %15 = tpu.matmul %13, %14, %cst_12 {dimension_numbers = #tpu.dot_dimension_numbers<[1], [0], [0], [1], [0, 0, 1, 1], [], []>} : vector<8x4xf32>, vector<4x378xf32>, vector<8x378xf32> -> vector<8x378xf32>
    %16 = arith.addf %11, %15 : vector<8x378xf32>
    %c2 = arith.constant 2 : index
    %c0_13 = arith.constant 0 : index
    %c0_14 = arith.constant 0 : index
    %17 = vector.load %arg3[%c2, %c0_13, %c0_14] : memref<7x8x4xf32, #tpu.memory_space<vmem>>, vector<1x8x4xf32>
    %18 = vector.shape_cast %17 : vector<1x8x4xf32> to vector<8x4xf32>
    %19 = vector.extract_strided_slice %7 {offsets = [0, 756], sizes = [4, 378], strides = [1, 1]} : vector<4x2646xf32> to vector<4x378xf32>
    %cst_15 = arith.constant dense<0.000000e+00> : vector<8x378xf32>
    %20 = tpu.matmul %18, %19, %cst_15 {dimension_numbers = #tpu.dot_dimension_numbers<[1], [0], [0], [1], [0, 0, 1, 1], [], []>} : vector<8x4xf32>, vector<4x378xf32>, vector<8x378xf32> -> vector<8x378xf32>
    %21 = arith.addf %16, %20 : vector<8x378xf32>
    %c3 = arith.constant 3 : index
    %c0_16 = arith.constant 0 : index
    %c0_17 = arith.constant 0 : index
    %22 = vector.load %arg3[%c3, %c0_16, %c0_17] : memref<7x8x4xf32, #tpu.memory_space<vmem>>, vector<1x8x4xf32>
    %23 = vector.shape_cast %22 : vector<1x8x4xf32> to vector<8x4xf32>
    %24 = vector.extract_strided_slice %7 {offsets = [0, 1134], sizes = [4, 378], strides = [1, 1]} : vector<4x2646xf32> to vector<4x378xf32>
    %cst_18 = arith.constant dense<0.000000e+00> : vector<8x378xf32>
    %25 = tpu.matmul %23, %24, %cst_18 {dimension_numbers = #tpu.dot_dimension_numbers<[1], [0], [0], [1], [0, 0, 1, 1], [], []>} : vector<8x4xf32>, vector<4x378xf32>, vector<8x378xf32> -> vector<8x378xf32>
    %26 = arith.addf %21, %25 : vector<8x378xf32>
    %c4 = arith.constant 4 : index
    %c0_19 = arith.constant 0 : index
    %c0_20 = arith.constant 0 : index
    %27 = vector.load %arg3[%c4, %c0_19, %c0_20] : memref<7x8x4xf32, #tpu.memory_space<vmem>>, vector<1x8x4xf32>
    %28 = vector.shape_cast %27 : vector<1x8x4xf32> to vector<8x4xf32>
    %29 = vector.extract_strided_slice %7 {offsets = [0, 1512], sizes = [4, 378], strides = [1, 1]} : vector<4x2646xf32> to vector<4x378xf32>
    %cst_21 = arith.constant dense<0.000000e+00> : vector<8x378xf32>
    %30 = tpu.matmul %28, %29, %cst_21 {dimension_numbers = #tpu.dot_dimension_numbers<[1], [0], [0], [1], [0, 0, 1, 1], [], []>} : vector<8x4xf32>, vector<4x378xf32>, vector<8x378xf32> -> vector<8x378xf32>
    %31 = arith.addf %26, %30 : vector<8x378xf32>
    %c5 = arith.constant 5 : index
    %c0_22 = arith.constant 0 : index
    %c0_23 = arith.constant 0 : index
    %32 = vector.load %arg3[%c5, %c0_22, %c0_23] : memref<7x8x4xf32, #tpu.memory_space<vmem>>, vector<1x8x4xf32>
    %33 = vector.shape_cast %32 : vector<1x8x4xf32> to vector<8x4xf32>
    %34 = vector.extract_strided_slice %7 {offsets = [0, 1890], sizes = [4, 378], strides = [1, 1]} : vector<4x2646xf32> to vector<4x378xf32>
    %cst_24 = arith.constant dense<0.000000e+00> : vector<8x378xf32>
    %35 = tpu.matmul %33, %34, %cst_24 {dimension_numbers = #tpu.dot_dimension_numbers<[1], [0], [0], [1], [0, 0, 1, 1], [], []>} : vector<8x4xf32>, vector<4x378xf32>, vector<8x378xf32> -> vector<8x378xf32>
    %36 = arith.addf %31, %35 : vector<8x378xf32>
    %c6 = arith.constant 6 : index
    %c0_25 = arith.constant 0 : index
    %c0_26 = arith.constant 0 : index
    %37 = vector.load %arg3[%c6, %c0_25, %c0_26] : memref<7x8x4xf32, #tpu.memory_space<vmem>>, vector<1x8x4xf32>
    %38 = vector.shape_cast %37 : vector<1x8x4xf32> to vector<8x4xf32>
    %39 = vector.extract_strided_slice %7 {offsets = [0, 2268], sizes = [4, 378], strides = [1, 1]} : vector<4x2646xf32> to vector<4x378xf32>
    %cst_27 = arith.constant dense<0.000000e+00> : vector<8x378xf32>
    %40 = tpu.matmul %38, %39, %cst_27 {dimension_numbers = #tpu.dot_dimension_numbers<[1], [0], [0], [1], [0, 0, 1, 1], [], []>} : vector<8x4xf32>, vector<4x378xf32>, vector<8x378xf32> -> vector<8x378xf32>
    %41 = arith.addf %36, %40 : vector<8x378xf32>
    %c0_28 = arith.constant 0 : index
    %c0_29 = arith.constant 0 : index
    %42 = vector.load %arg4[%c0_28, %c0_29] : memref<8x1xf32, #tpu.memory_space<vmem>>, vector<8x1xf32>
    %43 = vector.broadcast %42 : vector<8x1xf32> to vector<8x378xf32>
    %44 = arith.addf %41, %43 : vector<8x378xf32>
    %cst_30 = arith.constant 0.000000e+00 : f32
    %45 = vector.broadcast %cst_30 : f32 to vector<8x378xf32>
    %46 = arith.maximumf %44, %45 : vector<8x378xf32>
    %c0_31 = arith.constant 0 : index
    %c0_32 = arith.constant 0 : index
    %c0_33 = arith.constant 0 : index
    %47 = vector.load %arg5[%c0_31, %c0_32, %c0_33] : memref<7x16x8xf32, #tpu.memory_space<vmem>>, vector<1x16x8xf32>
    %48 = vector.shape_cast %47 : vector<1x16x8xf32> to vector<16x8xf32>
    %49 = vector.extract_strided_slice %46 {offsets = [0, 0], sizes = [8, 54], strides = [1, 1]} : vector<8x378xf32> to vector<8x54xf32>
    %cst_34 = arith.constant dense<0.000000e+00> : vector<16x54xf32>
    %50 = tpu.matmul %48, %49, %cst_34 {dimension_numbers = #tpu.dot_dimension_numbers<[1], [0], [0], [1], [0, 0, 1, 1], [], []>} : vector<16x8xf32>, vector<8x54xf32>, vector<16x54xf32> -> vector<16x54xf32>
    %c1_35 = arith.constant 1 : index
    %c0_36 = arith.constant 0 : index
    %c0_37 = arith.constant 0 : index
    %51 = vector.load %arg5[%c1_35, %c0_36, %c0_37] : memref<7x16x8xf32, #tpu.memory_space<vmem>>, vector<1x16x8xf32>
    %52 = vector.shape_cast %51 : vector<1x16x8xf32> to vector<16x8xf32>
    %53 = vector.extract_strided_slice %46 {offsets = [0, 54], sizes = [8, 54], strides = [1, 1]} : vector<8x378xf32> to vector<8x54xf32>
    %cst_38 = arith.constant dense<0.000000e+00> : vector<16x54xf32>
    %54 = tpu.matmul %52, %53, %cst_38 {dimension_numbers = #tpu.dot_dimension_numbers<[1], [0], [0], [1], [0, 0, 1, 1], [], []>} : vector<16x8xf32>, vector<8x54xf32>, vector<16x54xf32> -> vector<16x54xf32>
    %55 = arith.addf %50, %54 : vector<16x54xf32>
    %c2_39 = arith.constant 2 : index
    %c0_40 = arith.constant 0 : index
    %c0_41 = arith.constant 0 : index
    %56 = vector.load %arg5[%c2_39, %c0_40, %c0_41] : memref<7x16x8xf32, #tpu.memory_space<vmem>>, vector<1x16x8xf32>
    %57 = vector.shape_cast %56 : vector<1x16x8xf32> to vector<16x8xf32>
    %58 = vector.extract_strided_slice %46 {offsets = [0, 108], sizes = [8, 54], strides = [1, 1]} : vector<8x378xf32> to vector<8x54xf32>
    %cst_42 = arith.constant dense<0.000000e+00> : vector<16x54xf32>
    %59 = tpu.matmul %57, %58, %cst_42 {dimension_numbers = #tpu.dot_dimension_numbers<[1], [0], [0], [1], [0, 0, 1, 1], [], []>} : vector<16x8xf32>, vector<8x54xf32>, vector<16x54xf32> -> vector<16x54xf32>
    %60 = arith.addf %55, %59 : vector<16x54xf32>
    %c3_43 = arith.constant 3 : index
    %c0_44 = arith.constant 0 : index
    %c0_45 = arith.constant 0 : index
    %61 = vector.load %arg5[%c3_43, %c0_44, %c0_45] : memref<7x16x8xf32, #tpu.memory_space<vmem>>, vector<1x16x8xf32>
    %62 = vector.shape_cast %61 : vector<1x16x8xf32> to vector<16x8xf32>
    %63 = vector.extract_strided_slice %46 {offsets = [0, 162], sizes = [8, 54], strides = [1, 1]} : vector<8x378xf32> to vector<8x54xf32>
    %cst_46 = arith.constant dense<0.000000e+00> : vector<16x54xf32>
    %64 = tpu.matmul %62, %63, %cst_46 {dimension_numbers = #tpu.dot_dimension_numbers<[1], [0], [0], [1], [0, 0, 1, 1], [], []>} : vector<16x8xf32>, vector<8x54xf32>, vector<16x54xf32> -> vector<16x54xf32>
    %65 = arith.addf %60, %64 : vector<16x54xf32>
    %c4_47 = arith.constant 4 : index
    %c0_48 = arith.constant 0 : index
    %c0_49 = arith.constant 0 : index
    %66 = vector.load %arg5[%c4_47, %c0_48, %c0_49] : memref<7x16x8xf32, #tpu.memory_space<vmem>>, vector<1x16x8xf32>
    %67 = vector.shape_cast %66 : vector<1x16x8xf32> to vector<16x8xf32>
    %68 = vector.extract_strided_slice %46 {offsets = [0, 216], sizes = [8, 54], strides = [1, 1]} : vector<8x378xf32> to vector<8x54xf32>
    %cst_50 = arith.constant dense<0.000000e+00> : vector<16x54xf32>
    %69 = tpu.matmul %67, %68, %cst_50 {dimension_numbers = #tpu.dot_dimension_numbers<[1], [0], [0], [1], [0, 0, 1, 1], [], []>} : vector<16x8xf32>, vector<8x54xf32>, vector<16x54xf32> -> vector<16x54xf32>
    %70 = arith.addf %65, %69 : vector<16x54xf32>
    %c5_51 = arith.constant 5 : index
    %c0_52 = arith.constant 0 : index
    %c0_53 = arith.constant 0 : index
    %71 = vector.load %arg5[%c5_51, %c0_52, %c0_53] : memref<7x16x8xf32, #tpu.memory_space<vmem>>, vector<1x16x8xf32>
    %72 = vector.shape_cast %71 : vector<1x16x8xf32> to vector<16x8xf32>
    %73 = vector.extract_strided_slice %46 {offsets = [0, 270], sizes = [8, 54], strides = [1, 1]} : vector<8x378xf32> to vector<8x54xf32>
    %cst_54 = arith.constant dense<0.000000e+00> : vector<16x54xf32>
    %74 = tpu.matmul %72, %73, %cst_54 {dimension_numbers = #tpu.dot_dimension_numbers<[1], [0], [0], [1], [0, 0, 1, 1], [], []>} : vector<16x8xf32>, vector<8x54xf32>, vector<16x54xf32> -> vector<16x54xf32>
    %75 = arith.addf %70, %74 : vector<16x54xf32>
    %c6_55 = arith.constant 6 : index
    %c0_56 = arith.constant 0 : index
    %c0_57 = arith.constant 0 : index
    %76 = vector.load %arg5[%c6_55, %c0_56, %c0_57] : memref<7x16x8xf32, #tpu.memory_space<vmem>>, vector<1x16x8xf32>
    %77 = vector.shape_cast %76 : vector<1x16x8xf32> to vector<16x8xf32>
    %78 = vector.extract_strided_slice %46 {offsets = [0, 324], sizes = [8, 54], strides = [1, 1]} : vector<8x378xf32> to vector<8x54xf32>
    %cst_58 = arith.constant dense<0.000000e+00> : vector<16x54xf32>
    %79 = tpu.matmul %77, %78, %cst_58 {dimension_numbers = #tpu.dot_dimension_numbers<[1], [0], [0], [1], [0, 0, 1, 1], [], []>} : vector<16x8xf32>, vector<8x54xf32>, vector<16x54xf32> -> vector<16x54xf32>
    %80 = arith.addf %75, %79 : vector<16x54xf32>
    %c0_59 = arith.constant 0 : index
    %c0_60 = arith.constant 0 : index
    %81 = vector.load %arg6[%c0_59, %c0_60] : memref<16x1xf32, #tpu.memory_space<vmem>>, vector<16x1xf32>
    %82 = vector.broadcast %81 : vector<16x1xf32> to vector<16x54xf32>
    %83 = arith.addf %80, %82 : vector<16x54xf32>
    %cst_61 = arith.constant 0.000000e+00 : f32
    %84 = vector.broadcast %cst_61 : f32 to vector<16x54xf32>
    %85 = arith.maximumf %83, %84 : vector<16x54xf32>
    %c0_62 = arith.constant 0 : index
    %c0_63 = arith.constant 0 : index
    %c0_64 = arith.constant 0 : index
    %86 = vector.load %arg7[%c0_62, %c0_63, %c0_64] : memref<27x8x16xf32, #tpu.memory_space<vmem>>, vector<1x8x16xf32>
    %87 = vector.shape_cast %86 : vector<1x8x16xf32> to vector<8x16xf32>
    %88 = vector.extract_strided_slice %85 {offsets = [0, 0], sizes = [16, 2], strides = [1, 1]} : vector<16x54xf32> to vector<16x2xf32>
    %cst_65 = arith.constant dense<0.000000e+00> : vector<8x2xf32>
    %89 = tpu.matmul %87, %88, %cst_65 {dimension_numbers = #tpu.dot_dimension_numbers<[1], [0], [0], [1], [0, 0, 1, 1], [], []>} : vector<8x16xf32>, vector<16x2xf32>, vector<8x2xf32> -> vector<8x2xf32>
    %c1_66 = arith.constant 1 : index
    %c0_67 = arith.constant 0 : index
    %c0_68 = arith.constant 0 : index
    %90 = vector.load %arg7[%c1_66, %c0_67, %c0_68] : memref<27x8x16xf32, #tpu.memory_space<vmem>>, vector<1x8x16xf32>
    %91 = vector.shape_cast %90 : vector<1x8x16xf32> to vector<8x16xf32>
    %92 = vector.extract_strided_slice %85 {offsets = [0, 2], sizes = [16, 2], strides = [1, 1]} : vector<16x54xf32> to vector<16x2xf32>
    %cst_69 = arith.constant dense<0.000000e+00> : vector<8x2xf32>
    %93 = tpu.matmul %91, %92, %cst_69 {dimension_numbers = #tpu.dot_dimension_numbers<[1], [0], [0], [1], [0, 0, 1, 1], [], []>} : vector<8x16xf32>, vector<16x2xf32>, vector<8x2xf32> -> vector<8x2xf32>
    %94 = arith.addf %89, %93 : vector<8x2xf32>
    %c2_70 = arith.constant 2 : index
    %c0_71 = arith.constant 0 : index
    %c0_72 = arith.constant 0 : index
    %95 = vector.load %arg7[%c2_70, %c0_71, %c0_72] : memref<27x8x16xf32, #tpu.memory_space<vmem>>, vector<1x8x16xf32>
    %96 = vector.shape_cast %95 : vector<1x8x16xf32> to vector<8x16xf32>
    %97 = vector.extract_strided_slice %85 {offsets = [0, 4], sizes = [16, 2], strides = [1, 1]} : vector<16x54xf32> to vector<16x2xf32>
    %cst_73 = arith.constant dense<0.000000e+00> : vector<8x2xf32>
    %98 = tpu.matmul %96, %97, %cst_73 {dimension_numbers = #tpu.dot_dimension_numbers<[1], [0], [0], [1], [0, 0, 1, 1], [], []>} : vector<8x16xf32>, vector<16x2xf32>, vector<8x2xf32> -> vector<8x2xf32>
    %99 = arith.addf %94, %98 : vector<8x2xf32>
    %c3_74 = arith.constant 3 : index
    %c0_75 = arith.constant 0 : index
    %c0_76 = arith.constant 0 : index
    %100 = vector.load %arg7[%c3_74, %c0_75, %c0_76] : memref<27x8x16xf32, #tpu.memory_space<vmem>>, vector<1x8x16xf32>
    %101 = vector.shape_cast %100 : vector<1x8x16xf32> to vector<8x16xf32>
    %102 = vector.extract_strided_slice %85 {offsets = [0, 6], sizes = [16, 2], strides = [1, 1]} : vector<16x54xf32> to vector<16x2xf32>
    %cst_77 = arith.constant dense<0.000000e+00> : vector<8x2xf32>
    %103 = tpu.matmul %101, %102, %cst_77 {dimension_numbers = #tpu.dot_dimension_numbers<[1], [0], [0], [1], [0, 0, 1, 1], [], []>} : vector<8x16xf32>, vector<16x2xf32>, vector<8x2xf32> -> vector<8x2xf32>
    %104 = arith.addf %99, %103 : vector<8x2xf32>
    %c4_78 = arith.constant 4 : index
    %c0_79 = arith.constant 0 : index
    %c0_80 = arith.constant 0 : index
    %105 = vector.load %arg7[%c4_78, %c0_79, %c0_80] : memref<27x8x16xf32, #tpu.memory_space<vmem>>, vector<1x8x16xf32>
    %106 = vector.shape_cast %105 : vector<1x8x16xf32> to vector<8x16xf32>
    %107 = vector.extract_strided_slice %85 {offsets = [0, 8], sizes = [16, 2], strides = [1, 1]} : vector<16x54xf32> to vector<16x2xf32>
    %cst_81 = arith.constant dense<0.000000e+00> : vector<8x2xf32>
    %108 = tpu.matmul %106, %107, %cst_81 {dimension_numbers = #tpu.dot_dimension_numbers<[1], [0], [0], [1], [0, 0, 1, 1], [], []>} : vector<8x16xf32>, vector<16x2xf32>, vector<8x2xf32> -> vector<8x2xf32>
    %109 = arith.addf %104, %108 : vector<8x2xf32>
    %c5_82 = arith.constant 5 : index
    %c0_83 = arith.constant 0 : index
    %c0_84 = arith.constant 0 : index
    %110 = vector.load %arg7[%c5_82, %c0_83, %c0_84] : memref<27x8x16xf32, #tpu.memory_space<vmem>>, vector<1x8x16xf32>
    %111 = vector.shape_cast %110 : vector<1x8x16xf32> to vector<8x16xf32>
    %112 = vector.extract_strided_slice %85 {offsets = [0, 10], sizes = [16, 2], strides = [1, 1]} : vector<16x54xf32> to vector<16x2xf32>
    %cst_85 = arith.constant dense<0.000000e+00> : vector<8x2xf32>
    %113 = tpu.matmul %111, %112, %cst_85 {dimension_numbers = #tpu.dot_dimension_numbers<[1], [0], [0], [1], [0, 0, 1, 1], [], []>} : vector<8x16xf32>, vector<16x2xf32>, vector<8x2xf32> -> vector<8x2xf32>
    %114 = arith.addf %109, %113 : vector<8x2xf32>
    %c6_86 = arith.constant 6 : index
    %c0_87 = arith.constant 0 : index
    %c0_88 = arith.constant 0 : index
    %115 = vector.load %arg7[%c6_86, %c0_87, %c0_88] : memref<27x8x16xf32, #tpu.memory_space<vmem>>, vector<1x8x16xf32>
    %116 = vector.shape_cast %115 : vector<1x8x16xf32> to vector<8x16xf32>
    %117 = vector.extract_strided_slice %85 {offsets = [0, 12], sizes = [16, 2], strides = [1, 1]} : vector<16x54xf32> to vector<16x2xf32>
    %cst_89 = arith.constant dense<0.000000e+00> : vector<8x2xf32>
    %118 = tpu.matmul %116, %117, %cst_89 {dimension_numbers = #tpu.dot_dimension_numbers<[1], [0], [0], [1], [0, 0, 1, 1], [], []>} : vector<8x16xf32>, vector<16x2xf32>, vector<8x2xf32> -> vector<8x2xf32>
    %119 = arith.addf %114, %118 : vector<8x2xf32>
    %c7 = arith.constant 7 : index
    %c0_90 = arith.constant 0 : index
    %c0_91 = arith.constant 0 : index
    %120 = vector.load %arg7[%c7, %c0_90, %c0_91] : memref<27x8x16xf32, #tpu.memory_space<vmem>>, vector<1x8x16xf32>
    %121 = vector.shape_cast %120 : vector<1x8x16xf32> to vector<8x16xf32>
    %122 = vector.extract_strided_slice %85 {offsets = [0, 14], sizes = [16, 2], strides = [1, 1]} : vector<16x54xf32> to vector<16x2xf32>
    %cst_92 = arith.constant dense<0.000000e+00> : vector<8x2xf32>
    %123 = tpu.matmul %121, %122, %cst_92 {dimension_numbers = #tpu.dot_dimension_numbers<[1], [0], [0], [1], [0, 0, 1, 1], [], []>} : vector<8x16xf32>, vector<16x2xf32>, vector<8x2xf32> -> vector<8x2xf32>
    %124 = arith.addf %119, %123 : vector<8x2xf32>
    %c8 = arith.constant 8 : index
    %c0_93 = arith.constant 0 : index
    %c0_94 = arith.constant 0 : index
    %125 = vector.load %arg7[%c8, %c0_93, %c0_94] : memref<27x8x16xf32, #tpu.memory_space<vmem>>, vector<1x8x16xf32>
    %126 = vector.shape_cast %125 : vector<1x8x16xf32> to vector<8x16xf32>
    %127 = vector.extract_strided_slice %85 {offsets = [0, 16], sizes = [16, 2], strides = [1, 1]} : vector<16x54xf32> to vector<16x2xf32>
    %cst_95 = arith.constant dense<0.000000e+00> : vector<8x2xf32>
    %128 = tpu.matmul %126, %127, %cst_95 {dimension_numbers = #tpu.dot_dimension_numbers<[1], [0], [0], [1], [0, 0, 1, 1], [], []>} : vector<8x16xf32>, vector<16x2xf32>, vector<8x2xf32> -> vector<8x2xf32>
    %129 = arith.addf %124, %128 : vector<8x2xf32>
    %c9 = arith.constant 9 : index
    %c0_96 = arith.constant 0 : index
    %c0_97 = arith.constant 0 : index
    %130 = vector.load %arg7[%c9, %c0_96, %c0_97] : memref<27x8x16xf32, #tpu.memory_space<vmem>>, vector<1x8x16xf32>
    %131 = vector.shape_cast %130 : vector<1x8x16xf32> to vector<8x16xf32>
    %132 = vector.extract_strided_slice %85 {offsets = [0, 18], sizes = [16, 2], strides = [1, 1]} : vector<16x54xf32> to vector<16x2xf32>
    %cst_98 = arith.constant dense<0.000000e+00> : vector<8x2xf32>
    %133 = tpu.matmul %131, %132, %cst_98 {dimension_numbers = #tpu.dot_dimension_numbers<[1], [0], [0], [1], [0, 0, 1, 1], [], []>} : vector<8x16xf32>, vector<16x2xf32>, vector<8x2xf32> -> vector<8x2xf32>
    %134 = arith.addf %129, %133 : vector<8x2xf32>
    %c10 = arith.constant 10 : index
    %c0_99 = arith.constant 0 : index
    %c0_100 = arith.constant 0 : index
    %135 = vector.load %arg7[%c10, %c0_99, %c0_100] : memref<27x8x16xf32, #tpu.memory_space<vmem>>, vector<1x8x16xf32>
    %136 = vector.shape_cast %135 : vector<1x8x16xf32> to vector<8x16xf32>
    %137 = vector.extract_strided_slice %85 {offsets = [0, 20], sizes = [16, 2], strides = [1, 1]} : vector<16x54xf32> to vector<16x2xf32>
    %cst_101 = arith.constant dense<0.000000e+00> : vector<8x2xf32>
    %138 = tpu.matmul %136, %137, %cst_101 {dimension_numbers = #tpu.dot_dimension_numbers<[1], [0], [0], [1], [0, 0, 1, 1], [], []>} : vector<8x16xf32>, vector<16x2xf32>, vector<8x2xf32> -> vector<8x2xf32>
    %139 = arith.addf %134, %138 : vector<8x2xf32>
    %c11 = arith.constant 11 : index
    %c0_102 = arith.constant 0 : index
    %c0_103 = arith.constant 0 : index
    %140 = vector.load %arg7[%c11, %c0_102, %c0_103] : memref<27x8x16xf32, #tpu.memory_space<vmem>>, vector<1x8x16xf32>
    %141 = vector.shape_cast %140 : vector<1x8x16xf32> to vector<8x16xf32>
    %142 = vector.extract_strided_slice %85 {offsets = [0, 22], sizes = [16, 2], strides = [1, 1]} : vector<16x54xf32> to vector<16x2xf32>
    %cst_104 = arith.constant dense<0.000000e+00> : vector<8x2xf32>
    %143 = tpu.matmul %141, %142, %cst_104 {dimension_numbers = #tpu.dot_dimension_numbers<[1], [0], [0], [1], [0, 0, 1, 1], [], []>} : vector<8x16xf32>, vector<16x2xf32>, vector<8x2xf32> -> vector<8x2xf32>
    %144 = arith.addf %139, %143 : vector<8x2xf32>
    %c12 = arith.constant 12 : index
    %c0_105 = arith.constant 0 : index
    %c0_106 = arith.constant 0 : index
    %145 = vector.load %arg7[%c12, %c0_105, %c0_106] : memref<27x8x16xf32, #tpu.memory_space<vmem>>, vector<1x8x16xf32>
    %146 = vector.shape_cast %145 : vector<1x8x16xf32> to vector<8x16xf32>
    %147 = vector.extract_strided_slice %85 {offsets = [0, 24], sizes = [16, 2], strides = [1, 1]} : vector<16x54xf32> to vector<16x2xf32>
    %cst_107 = arith.constant dense<0.000000e+00> : vector<8x2xf32>
    %148 = tpu.matmul %146, %147, %cst_107 {dimension_numbers = #tpu.dot_dimension_numbers<[1], [0], [0], [1], [0, 0, 1, 1], [], []>} : vector<8x16xf32>, vector<16x2xf32>, vector<8x2xf32> -> vector<8x2xf32>
    %149 = arith.addf %144, %148 : vector<8x2xf32>
    %c13 = arith.constant 13 : index
    %c0_108 = arith.constant 0 : index
    %c0_109 = arith.constant 0 : index
    %150 = vector.load %arg7[%c13, %c0_108, %c0_109] : memref<27x8x16xf32, #tpu.memory_space<vmem>>, vector<1x8x16xf32>
    %151 = vector.shape_cast %150 : vector<1x8x16xf32> to vector<8x16xf32>
    %152 = vector.extract_strided_slice %85 {offsets = [0, 26], sizes = [16, 2], strides = [1, 1]} : vector<16x54xf32> to vector<16x2xf32>
    %cst_110 = arith.constant dense<0.000000e+00> : vector<8x2xf32>
    %153 = tpu.matmul %151, %152, %cst_110 {dimension_numbers = #tpu.dot_dimension_numbers<[1], [0], [0], [1], [0, 0, 1, 1], [], []>} : vector<8x16xf32>, vector<16x2xf32>, vector<8x2xf32> -> vector<8x2xf32>
    %154 = arith.addf %149, %153 : vector<8x2xf32>
    %c14 = arith.constant 14 : index
    %c0_111 = arith.constant 0 : index
    %c0_112 = arith.constant 0 : index
    %155 = vector.load %arg7[%c14, %c0_111, %c0_112] : memref<27x8x16xf32, #tpu.memory_space<vmem>>, vector<1x8x16xf32>
    %156 = vector.shape_cast %155 : vector<1x8x16xf32> to vector<8x16xf32>
    %157 = vector.extract_strided_slice %85 {offsets = [0, 28], sizes = [16, 2], strides = [1, 1]} : vector<16x54xf32> to vector<16x2xf32>
    %cst_113 = arith.constant dense<0.000000e+00> : vector<8x2xf32>
    %158 = tpu.matmul %156, %157, %cst_113 {dimension_numbers = #tpu.dot_dimension_numbers<[1], [0], [0], [1], [0, 0, 1, 1], [], []>} : vector<8x16xf32>, vector<16x2xf32>, vector<8x2xf32> -> vector<8x2xf32>
    %159 = arith.addf %154, %158 : vector<8x2xf32>
    %c15 = arith.constant 15 : index
    %c0_114 = arith.constant 0 : index
    %c0_115 = arith.constant 0 : index
    %160 = vector.load %arg7[%c15, %c0_114, %c0_115] : memref<27x8x16xf32, #tpu.memory_space<vmem>>, vector<1x8x16xf32>
    %161 = vector.shape_cast %160 : vector<1x8x16xf32> to vector<8x16xf32>
    %162 = vector.extract_strided_slice %85 {offsets = [0, 30], sizes = [16, 2], strides = [1, 1]} : vector<16x54xf32> to vector<16x2xf32>
    %cst_116 = arith.constant dense<0.000000e+00> : vector<8x2xf32>
    %163 = tpu.matmul %161, %162, %cst_116 {dimension_numbers = #tpu.dot_dimension_numbers<[1], [0], [0], [1], [0, 0, 1, 1], [], []>} : vector<8x16xf32>, vector<16x2xf32>, vector<8x2xf32> -> vector<8x2xf32>
    %164 = arith.addf %159, %163 : vector<8x2xf32>
    %c16 = arith.constant 16 : index
    %c0_117 = arith.constant 0 : index
    %c0_118 = arith.constant 0 : index
    %165 = vector.load %arg7[%c16, %c0_117, %c0_118] : memref<27x8x16xf32, #tpu.memory_space<vmem>>, vector<1x8x16xf32>
    %166 = vector.shape_cast %165 : vector<1x8x16xf32> to vector<8x16xf32>
    %167 = vector.extract_strided_slice %85 {offsets = [0, 32], sizes = [16, 2], strides = [1, 1]} : vector<16x54xf32> to vector<16x2xf32>
    %cst_119 = arith.constant dense<0.000000e+00> : vector<8x2xf32>
    %168 = tpu.matmul %166, %167, %cst_119 {dimension_numbers = #tpu.dot_dimension_numbers<[1], [0], [0], [1], [0, 0, 1, 1], [], []>} : vector<8x16xf32>, vector<16x2xf32>, vector<8x2xf32> -> vector<8x2xf32>
    %169 = arith.addf %164, %168 : vector<8x2xf32>
    %c17 = arith.constant 17 : index
    %c0_120 = arith.constant 0 : index
    %c0_121 = arith.constant 0 : index
    %170 = vector.load %arg7[%c17, %c0_120, %c0_121] : memref<27x8x16xf32, #tpu.memory_space<vmem>>, vector<1x8x16xf32>
    %171 = vector.shape_cast %170 : vector<1x8x16xf32> to vector<8x16xf32>
    %172 = vector.extract_strided_slice %85 {offsets = [0, 34], sizes = [16, 2], strides = [1, 1]} : vector<16x54xf32> to vector<16x2xf32>
    %cst_122 = arith.constant dense<0.000000e+00> : vector<8x2xf32>
    %173 = tpu.matmul %171, %172, %cst_122 {dimension_numbers = #tpu.dot_dimension_numbers<[1], [0], [0], [1], [0, 0, 1, 1], [], []>} : vector<8x16xf32>, vector<16x2xf32>, vector<8x2xf32> -> vector<8x2xf32>
    %174 = arith.addf %169, %173 : vector<8x2xf32>
    %c18 = arith.constant 18 : index
    %c0_123 = arith.constant 0 : index
    %c0_124 = arith.constant 0 : index
    %175 = vector.load %arg7[%c18, %c0_123, %c0_124] : memref<27x8x16xf32, #tpu.memory_space<vmem>>, vector<1x8x16xf32>
    %176 = vector.shape_cast %175 : vector<1x8x16xf32> to vector<8x16xf32>
    %177 = vector.extract_strided_slice %85 {offsets = [0, 36], sizes = [16, 2], strides = [1, 1]} : vector<16x54xf32> to vector<16x2xf32>
    %cst_125 = arith.constant dense<0.000000e+00> : vector<8x2xf32>
    %178 = tpu.matmul %176, %177, %cst_125 {dimension_numbers = #tpu.dot_dimension_numbers<[1], [0], [0], [1], [0, 0, 1, 1], [], []>} : vector<8x16xf32>, vector<16x2xf32>, vector<8x2xf32> -> vector<8x2xf32>
    %179 = arith.addf %174, %178 : vector<8x2xf32>
    %c19 = arith.constant 19 : index
    %c0_126 = arith.constant 0 : index
    %c0_127 = arith.constant 0 : index
    %180 = vector.load %arg7[%c19, %c0_126, %c0_127] : memref<27x8x16xf32, #tpu.memory_space<vmem>>, vector<1x8x16xf32>
    %181 = vector.shape_cast %180 : vector<1x8x16xf32> to vector<8x16xf32>
    %182 = vector.extract_strided_slice %85 {offsets = [0, 38], sizes = [16, 2], strides = [1, 1]} : vector<16x54xf32> to vector<16x2xf32>
    %cst_128 = arith.constant dense<0.000000e+00> : vector<8x2xf32>
    %183 = tpu.matmul %181, %182, %cst_128 {dimension_numbers = #tpu.dot_dimension_numbers<[1], [0], [0], [1], [0, 0, 1, 1], [], []>} : vector<8x16xf32>, vector<16x2xf32>, vector<8x2xf32> -> vector<8x2xf32>
    %184 = arith.addf %179, %183 : vector<8x2xf32>
    %c20 = arith.constant 20 : index
    %c0_129 = arith.constant 0 : index
    %c0_130 = arith.constant 0 : index
    %185 = vector.load %arg7[%c20, %c0_129, %c0_130] : memref<27x8x16xf32, #tpu.memory_space<vmem>>, vector<1x8x16xf32>
    %186 = vector.shape_cast %185 : vector<1x8x16xf32> to vector<8x16xf32>
    %187 = vector.extract_strided_slice %85 {offsets = [0, 40], sizes = [16, 2], strides = [1, 1]} : vector<16x54xf32> to vector<16x2xf32>
    %cst_131 = arith.constant dense<0.000000e+00> : vector<8x2xf32>
    %188 = tpu.matmul %186, %187, %cst_131 {dimension_numbers = #tpu.dot_dimension_numbers<[1], [0], [0], [1], [0, 0, 1, 1], [], []>} : vector<8x16xf32>, vector<16x2xf32>, vector<8x2xf32> -> vector<8x2xf32>
    %189 = arith.addf %184, %188 : vector<8x2xf32>
    %c21 = arith.constant 21 : index
    %c0_132 = arith.constant 0 : index
    %c0_133 = arith.constant 0 : index
    %190 = vector.load %arg7[%c21, %c0_132, %c0_133] : memref<27x8x16xf32, #tpu.memory_space<vmem>>, vector<1x8x16xf32>
    %191 = vector.shape_cast %190 : vector<1x8x16xf32> to vector<8x16xf32>
    %192 = vector.extract_strided_slice %85 {offsets = [0, 42], sizes = [16, 2], strides = [1, 1]} : vector<16x54xf32> to vector<16x2xf32>
    %cst_134 = arith.constant dense<0.000000e+00> : vector<8x2xf32>
    %193 = tpu.matmul %191, %192, %cst_134 {dimension_numbers = #tpu.dot_dimension_numbers<[1], [0], [0], [1], [0, 0, 1, 1], [], []>} : vector<8x16xf32>, vector<16x2xf32>, vector<8x2xf32> -> vector<8x2xf32>
    %194 = arith.addf %189, %193 : vector<8x2xf32>
    %c22 = arith.constant 22 : index
    %c0_135 = arith.constant 0 : index
    %c0_136 = arith.constant 0 : index
    %195 = vector.load %arg7[%c22, %c0_135, %c0_136] : memref<27x8x16xf32, #tpu.memory_space<vmem>>, vector<1x8x16xf32>
    %196 = vector.shape_cast %195 : vector<1x8x16xf32> to vector<8x16xf32>
    %197 = vector.extract_strided_slice %85 {offsets = [0, 44], sizes = [16, 2], strides = [1, 1]} : vector<16x54xf32> to vector<16x2xf32>
    %cst_137 = arith.constant dense<0.000000e+00> : vector<8x2xf32>
    %198 = tpu.matmul %196, %197, %cst_137 {dimension_numbers = #tpu.dot_dimension_numbers<[1], [0], [0], [1], [0, 0, 1, 1], [], []>} : vector<8x16xf32>, vector<16x2xf32>, vector<8x2xf32> -> vector<8x2xf32>
    %199 = arith.addf %194, %198 : vector<8x2xf32>
    %c23 = arith.constant 23 : index
    %c0_138 = arith.constant 0 : index
    %c0_139 = arith.constant 0 : index
    %200 = vector.load %arg7[%c23, %c0_138, %c0_139] : memref<27x8x16xf32, #tpu.memory_space<vmem>>, vector<1x8x16xf32>
    %201 = vector.shape_cast %200 : vector<1x8x16xf32> to vector<8x16xf32>
    %202 = vector.extract_strided_slice %85 {offsets = [0, 46], sizes = [16, 2], strides = [1, 1]} : vector<16x54xf32> to vector<16x2xf32>
    %cst_140 = arith.constant dense<0.000000e+00> : vector<8x2xf32>
    %203 = tpu.matmul %201, %202, %cst_140 {dimension_numbers = #tpu.dot_dimension_numbers<[1], [0], [0], [1], [0, 0, 1, 1], [], []>} : vector<8x16xf32>, vector<16x2xf32>, vector<8x2xf32> -> vector<8x2xf32>
    %204 = arith.addf %199, %203 : vector<8x2xf32>
    %c24 = arith.constant 24 : index
    %c0_141 = arith.constant 0 : index
    %c0_142 = arith.constant 0 : index
    %205 = vector.load %arg7[%c24, %c0_141, %c0_142] : memref<27x8x16xf32, #tpu.memory_space<vmem>>, vector<1x8x16xf32>
    %206 = vector.shape_cast %205 : vector<1x8x16xf32> to vector<8x16xf32>
    %207 = vector.extract_strided_slice %85 {offsets = [0, 48], sizes = [16, 2], strides = [1, 1]} : vector<16x54xf32> to vector<16x2xf32>
    %cst_143 = arith.constant dense<0.000000e+00> : vector<8x2xf32>
    %208 = tpu.matmul %206, %207, %cst_143 {dimension_numbers = #tpu.dot_dimension_numbers<[1], [0], [0], [1], [0, 0, 1, 1], [], []>} : vector<8x16xf32>, vector<16x2xf32>, vector<8x2xf32> -> vector<8x2xf32>
    %209 = arith.addf %204, %208 : vector<8x2xf32>
    %c25 = arith.constant 25 : index
    %c0_144 = arith.constant 0 : index
    %c0_145 = arith.constant 0 : index
    %210 = vector.load %arg7[%c25, %c0_144, %c0_145] : memref<27x8x16xf32, #tpu.memory_space<vmem>>, vector<1x8x16xf32>
    %211 = vector.shape_cast %210 : vector<1x8x16xf32> to vector<8x16xf32>
    %212 = vector.extract_strided_slice %85 {offsets = [0, 50], sizes = [16, 2], strides = [1, 1]} : vector<16x54xf32> to vector<16x2xf32>
    %cst_146 = arith.constant dense<0.000000e+00> : vector<8x2xf32>
    %213 = tpu.matmul %211, %212, %cst_146 {dimension_numbers = #tpu.dot_dimension_numbers<[1], [0], [0], [1], [0, 0, 1, 1], [], []>} : vector<8x16xf32>, vector<16x2xf32>, vector<8x2xf32> -> vector<8x2xf32>
    %214 = arith.addf %209, %213 : vector<8x2xf32>
    %c26 = arith.constant 26 : index
    %c0_147 = arith.constant 0 : index
    %c0_148 = arith.constant 0 : index
    %215 = vector.load %arg7[%c26, %c0_147, %c0_148] : memref<27x8x16xf32, #tpu.memory_space<vmem>>, vector<1x8x16xf32>
    %216 = vector.shape_cast %215 : vector<1x8x16xf32> to vector<8x16xf32>
    %217 = vector.extract_strided_slice %85 {offsets = [0, 52], sizes = [16, 2], strides = [1, 1]} : vector<16x54xf32> to vector<16x2xf32>
    %cst_149 = arith.constant dense<0.000000e+00> : vector<8x2xf32>
    %218 = tpu.matmul %216, %217, %cst_149 {dimension_numbers = #tpu.dot_dimension_numbers<[1], [0], [0], [1], [0, 0, 1, 1], [], []>} : vector<8x16xf32>, vector<16x2xf32>, vector<8x2xf32> -> vector<8x2xf32>
    %219 = arith.addf %214, %218 : vector<8x2xf32>
    %c0_150 = arith.constant 0 : index
    %c0_151 = arith.constant 0 : index
    %220 = vector.load %arg8[%c0_150, %c0_151] : memref<8x1xf32, #tpu.memory_space<vmem>>, vector<8x1xf32>
    %221 = vector.broadcast %220 : vector<8x1xf32> to vector<8x2xf32>
    %222 = arith.addf %219, %221 : vector<8x2xf32>
    %c0_152 = arith.constant 0 : index
    %c0_153 = arith.constant 0 : index
    %223 = vector.load %arg9[%c0_152, %c0_153] : memref<8x2xf32, #tpu.memory_space<vmem>>, vector<8x2xf32>
    tpu.vector_store %arg9[%c0_152, %c0_153], %222 {strides = array<i32>} : memref<8x2xf32, #tpu.memory_space<vmem>>, vector<8x2xf32>,
    return
  }
}

</mosaic_0001>

<llo_original>
// kernel: encoder_blue_forward.1
$region0: #{encoder_blue_forward.1}
  #allocation0 [shape = 'u32[]', space=smem, size = 0x4, offset = 0x4, fixed_abs, tag = 'smem constant byte address 0x4 - core index']
  #allocation1 [shape = 'u32[144,128]{1,0:T(1,128)}', space=vmem, size = 0x12000, scoped, tag = 'internal scratch']
  %s0 = inlined_call_operand.vmem [shape: f32[7,2646], index: 0, kind: input, shape index: {}]
  %s1 = inlined_call_operand.vmem [shape: f32[4,7], index: 1, kind: input, shape index: {}]
  %s2 = inlined_call_operand.vmem [shape: f32[4,1], index: 2, kind: input, shape index: {}]
  %s3 = inlined_call_operand.vmem [shape: f32[7,8,4], index: 3, kind: input, shape index: {}]
  %s4 = inlined_call_operand.vmem [shape: f32[8,1], index: 4, kind: input, shape index: {}]
  %s5 = inlined_call_operand.vmem [shape: f32[7,16,8], index: 5, kind: input, shape index: {}]
  %s6 = inlined_call_operand.vmem [shape: f32[16,1], index: 6, kind: input, shape index: {}]
  %s7 = inlined_call_operand.vmem [shape: f32[27,8,16], index: 7, kind: input, shape index: {}]
  %s8 = inlined_call_operand.vmem [shape: f32[8,1], index: 8, kind: input, shape index: {}]
  %s9 = inlined_call_operand.vmem [shape: f32[8,2], index: 9, kind: output, shape index: {}]
  %s10 = sld [smem:[#allocation0]]
  $region46: #{encoder_blue_forward.1} parent=0
    _
  %s12 = ssub.s32 1, %s10
  %s13 = scalar_select 0, %s12, %s10
  // Predicated region
  $region2: #{encoder_blue_forward.1} parent=0 // pred_check
    _
  $region3: #{encoder_blue_forward.1} parent=0 // pred_check_branch
    %15 = sbr.rel (0) target = $region5
  $region4: #{encoder_blue_forward.1} parent=0 // pred_region
    _
  $region5: #{encoder_blue_forward.1} parent=0 // pred_fallthru
    _
  // Predicated region
  $region6: #{encoder_blue_forward.1} parent=0 // pred_check
    _
  $region7: #{encoder_blue_forward.1} parent=0 // pred_check_branch
    %17 = sbr.rel (0) target = $region9
  $region8: #{encoder_blue_forward.1} parent=0 // pred_region
    _
  $region9: #{encoder_blue_forward.1} parent=0 // pred_fallthru
    _
  // Predicated region
  $region10: #{encoder_blue_forward.1} parent=0 // pred_check
    _
  $region11: #{encoder_blue_forward.1} parent=0 // pred_check_branch
    %19 = sbr.rel (0) target = $region13
  $region12: #{encoder_blue_forward.1} parent=0 // pred_region
    _
  $region13: #{encoder_blue_forward.1} parent=0 // pred_fallthru
    _
  // Predicated region
  $region14: #{encoder_blue_forward.1} parent=0 // pred_check
    _
  $region15: #{encoder_blue_forward.1} parent=0 // pred_check_branch
    %21 = sbr.rel (0) target = $region17
  $region16: #{encoder_blue_forward.1} parent=0 // pred_region
    _
  $region17: #{encoder_blue_forward.1} parent=0 // pred_fallthru
    _
  // Predicated region
  $region18: #{encoder_blue_forward.1} parent=0 // pred_check
    _
  $region19: #{encoder_blue_forward.1} parent=0 // pred_check_branch
    %23 = sbr.rel (0) target = $region21
  $region20: #{encoder_blue_forward.1} parent=0 // pred_region
    _
  $region21: #{encoder_blue_forward.1} parent=0 // pred_fallthru
    _
  // Predicated region
  $region22: #{encoder_blue_forward.1} parent=0 // pred_check
    _
  $region23: #{encoder_blue_forward.1} parent=0 // pred_check_branch
    %25 = sbr.rel (0) target = $region25
  $region24: #{encoder_blue_forward.1} parent=0 // pred_region
    _
  $region25: #{encoder_blue_forward.1} parent=0 // pred_fallthru
    _
  // Predicated region
  $region26: #{encoder_blue_forward.1} parent=0 // pred_check
    _
  $region27: #{encoder_blue_forward.1} parent=0 // pred_check_branch
    %27 = sbr.rel (0) target = $region29
  $region28: #{encoder_blue_forward.1} parent=0 // pred_region
    _
  $region29: #{encoder_blue_forward.1} parent=0 // pred_fallthru
    _
  // Predicated region
  $region30: #{encoder_blue_forward.1} parent=0 // pred_check
    _
  $region31: #{encoder_blue_forward.1} parent=0 // pred_check_branch
    %29 = sbr.rel (0) target = $region33
  $region32: #{encoder_blue_forward.1} parent=0 // pred_region
    _
  $region33: #{encoder_blue_forward.1} parent=0 // pred_fallthru
    _
  // Predicated region
  $region34: #{encoder_blue_forward.1} parent=0 // pred_check
    _
  $region35: #{encoder_blue_forward.1} parent=0 // pred_check_branch
    %31 = sbr.rel (0) target = $region37
  $region36: #{encoder_blue_forward.1} parent=0 // pred_region
    _
  $region37: #{encoder_blue_forward.1} parent=0 // pred_fallthru
    _
  %v32 = vld [vmem:[%s1] sm:$0xf]
  %v33 = vld [vmem:[%s0] sm:$0x7f]
  %v34 = vld [vmem:[%s0 + $0x8] sm:$0x7f]
  %v35 = vld [vmem:[%s0 + $0x10] sm:$0x7f]
  %v36 = vld [vmem:[%s0 + $0x18] sm:$0x7f]
  %v37 = vld [vmem:[%s0 + $0x20] sm:$0x7f]
  %v38 = vld [vmem:[%s0 + $0x28] sm:$0x7f]
  %v39 = vld [vmem:[%s0 + $0x30] sm:$0x7f]
  %v40 = vld [vmem:[%s0 + $0x38] sm:$0x7f]
  %v41 = vld [vmem:[%s0 + $0x40] sm:$0x7f]
  %v42 = vld [vmem:[%s0 + $0x48] sm:$0x7f]
  %v43 = vld [vmem:[%s0 + $0x50] sm:$0x7f]
  %v44 = vld [vmem:[%s0 + $0x58] sm:$0x7f]
  %v45 = vld [vmem:[%s0 + $0x60] sm:$0x7f]
  %v46 = vld [vmem:[%s0 + $0x68] sm:$0x7f]
  %v47 = vld [vmem:[%s0 + $0x70] sm:$0x7f]
  %v48 = vld [vmem:[%s0 + $0x78] sm:$0x7f]
  %v49 = vld [vmem:[%s0 + $0x80] sm:$0x7f]
  %v50 = vld [vmem:[%s0 + $0x88] sm:$0x7f]
  %v51 = vld [vmem:[%s0 + $0x90] sm:$0x7f]
  %v52 = vld [vmem:[%s0 + $0x98] sm:$0x7f]
  %v53 = vld [vmem:[%s0 + $0xa0] sm:$0x7f]
  %v54 = vld [vmem:[%s2] sm:$0xf]
  %56 = vset.pattern.permute.xlu0 0
  %57 = vperm.xlu0 %56, %v54
  %v58 = vpop.permute.xlu0 %57
  %vm60 = vcmask 56320
  %v62 = vsel %vm60, %v32, 0
  %vm64 = vcmask 1046528
  %v66 = vsel %vm64, %v33, 0
  %v69 = vsel %vm64, %v34, 0
  %v72 = vsel %vm64, %v35, 0
  %v75 = vsel %vm64, %v36, 0
  %v78 = vsel %vm64, %v37, 0
  %v81 = vsel %vm64, %v38, 0
  %v84 = vsel %vm64, %v39, 0
  %v87 = vsel %vm64, %v40, 0
  %v90 = vsel %vm64, %v41, 0
  %v93 = vsel %vm64, %v42, 0
  %v96 = vsel %vm64, %v43, 0
  %v99 = vsel %vm64, %v44, 0
  %v102 = vsel %vm64, %v45, 0
  %v105 = vsel %vm64, %v46, 0
  %v108 = vsel %vm64, %v47, 0
  %v111 = vsel %vm64, %v48, 0
  %v114 = vsel %vm64, %v49, 0
  %v117 = vsel %vm64, %v50, 0
  %v120 = vsel %vm64, %v51, 0
  %v123 = vsel %vm64, %v52, 0
  %v126 = vsel %vm64, %v53, 0
  %128 = vmatprep.subr.mxu0 0.0
  %129 = vmatpush1.msra.mxu0 0.0
  %130 = vmatprep.subr.mxu0 0.0
  %131 = vmatpush1.msra.mxu0 0.0
  %132 = vmatprep.subr.mxu0 0.0
  %133 = vmatpush1.msra.mxu0 0.0
  %134 = vmatprep.subr.mxu0 0.0
  %135 = vmatpush1.msra.mxu0 0.0
  %136 = vmatprep.subr.mxu0 0.0
  %137 = vmatpush1.msra.mxu0 0.0
  %138 = vmatprep.subr.mxu0 0.0
  %139 = vmatpush1.msra.mxu0 0.0
  %140 = vmatprep.subr.mxu0 0.0
  %141 = vmatpush1.msra.mxu0 0.0
  %142 = vmatprep.subr.mxu0 0.0
  %143 = vmatpush1.msra.mxu0 0.0
  %144 = vmatprep.subr.mxu0 0.0
  %145 = vmatpush1.msra.mxu0 0.0
  %146 = vmatprep.subr.mxu0 0.0
  %147 = vmatpush1.msra.mxu0 0.0
  %148 = vmatprep.subr.mxu0 0.0
  %149 = vmatpush1.msra.mxu0 0.0
  %150 = vmatprep.subr.mxu0 0.0
  %151 = vmatpush1.msra.mxu0 0.0
  %152 = vmatprep.subr.mxu0 0.0
  %153 = vmatpush1.msra.mxu0 0.0
  %154 = vmatprep.subr.mxu0 0.0
  %155 = vmatpush1.msra.mxu0 0.0
  %156 = vmatprep.subr.mxu0 0.0
  %157 = vmatpush1.msra.mxu0 0.0
  %158 = vmatprep.subr.mxu0 %v69
  %159 = vmatpush1.msra.mxu0 %v66
  %160 = vmatprep.subr.mxu0 0.0
  %161 = vmatpush2.msra.mxu0 0.0
  %162 = vmatprep.subr.mxu0 0.0
  %163 = vmatpush2.msra.mxu0 0.0
  %164 = vmatprep.subr.mxu0 0.0
  %165 = vmatpush2.msra.mxu0 0.0
  %166 = vmatprep.subr.mxu0 0.0
  %167 = vmatpush2.msra.mxu0 0.0
  %168 = vmatprep.subr.mxu0 0.0
  %169 = vmatpush2.msra.mxu0 0.0
  %170 = vmatprep.subr.mxu0 0.0
  %171 = vmatpush2.msra.mxu0 0.0
  %172 = vmatprep.subr.mxu0 0.0
  %173 = vmatpush2.msra.mxu0 0.0
  %174 = vmatprep.subr.mxu0 0.0
  %175 = vmatpush2.msra.mxu0 0.0
  %176 = vmatprep.subr.mxu0 0.0
  %177 = vmatpush2.msra.mxu0 0.0
  %178 = vmatprep.subr.mxu0 0.0
  %179 = vmatpush2.msra.mxu0 0.0
  %180 = vmatprep.subr.mxu0 0.0
  %181 = vmatpush2.msra.mxu0 0.0
  %182 = vmatprep.subr.mxu0 0.0
  %183 = vmatpush2.msra.mxu0 0.0
  %184 = vmatprep.subr.mxu0 0.0
  %185 = vmatpush2.msra.mxu0 0.0
  %186 = vmatprep.subr.mxu0 0.0
  %187 = vmatpush2.msra.mxu0 0.0
  %188 = vmatprep.subr.mxu0 0.0
  %189 = vmatpush2.msra.mxu0 0.0
  %190 = vmatprep.subr.mxu0 0.0
  %191 = vmatpush2.msra.mxu0 0.0
  %192 = vmatprep.mubr.f32.mxu0 0.0
  %193 = vmatmul.mubr.f32.gmra.mxu0 %v62
  %v194 = vpop.f32.mrf.mxu0
  %v195 = vadd.f32 %v58, %v194
  %v196 = vpop.f32.mrf.mxu0
  %v197 = vadd.f32 %v58, %v196
  %198 = vdwg.mxu0
  %199 = vmatprep.subr.mxu0 0.0
  %200 = vmatpush1.msra.mxu0 0.0
  %201 = vmatprep.subr.mxu0 0.0
  %202 = vmatpush1.msra.mxu0 0.0
  %203 = vmatprep.subr.mxu0 0.0
  %204 = vmatpush1.msra.mxu0 0.0
  %205 = vmatprep.subr.mxu0 0.0
  %206 = vmatpush1.msra.mxu0 0.0
  %207 = vmatprep.subr.mxu0 0.0
  %208 = vmatpush1.msra.mxu0 0.0
  %209 = vmatprep.subr.mxu0 0.0
  %210 = vmatpush1.msra.mxu0 0.0
  %211 = vmatprep.subr.mxu0 0.0
  %212 = vmatpush1.msra.mxu0 0.0
  %213 = vmatprep.subr.mxu0 0.0
  %214 = vmatpush1.msra.mxu0 0.0
  %215 = vmatprep.subr.mxu0 0.0
  %216 = vmatpush1.msra.mxu0 0.0
  %217 = vmatprep.subr.mxu0 0.0
  %218 = vmatpush1.msra.mxu0 0.0
  %219 = vmatprep.subr.mxu0 0.0
  %220 = vmatpush1.msra.mxu0 0.0
  %221 = vmatprep.subr.mxu0 0.0
  %222 = vmatpush1.msra.mxu0 0.0
  %223 = vmatprep.subr.mxu0 0.0
  %224 = vmatpush1.msra.mxu0 0.0
  %225 = vmatprep.subr.mxu0 0.0
  %226 = vmatpush1.msra.mxu0 0.0
  %227 = vmatprep.subr.mxu0 0.0
  %228 = vmatpush1.msra.mxu0 0.0
  %229 = vmatprep.subr.mxu0 %v75
  %230 = vmatpush1.msra.mxu0 %v72
  %231 = vmatprep.subr.mxu0 0.0
  %232 = vmatpush2.msra.mxu0 0.0
  %233 = vmatprep.subr.mxu0 0.0
  %234 = vmatpush2.msra.mxu0 0.0
  %235 = vmatprep.subr.mxu0 0.0
  %236 = vmatpush2.msra.mxu0 0.0
  %237 = vmatprep.subr.mxu0 0.0
  %238 = vmatpush2.msra.mxu0 0.0
  %239 = vmatprep.subr.mxu0 0.0
  %240 = vmatpush2.msra.mxu0 0.0
  %241 = vmatprep.subr.mxu0 0.0
  %242 = vmatpush2.msra.mxu0 0.0
  %243 = vmatprep.subr.mxu0 0.0
  %244 = vmatpush2.msra.mxu0 0.0
  %245 = vmatprep.subr.mxu0 0.0
  %246 = vmatpush2.msra.mxu0 0.0
  %247 = vmatprep.subr.mxu0 0.0
  %248 = vmatpush2.msra.mxu0 0.0
  %249 = vmatprep.subr.mxu0 0.0
  %250 = vmatpush2.msra.mxu0 0.0
  %251 = vmatprep.subr.mxu0 0.0
  %252 = vmatpush2.msra.mxu0 0.0
  %253 = vmatprep.subr.mxu0 0.0
  %254 = vmatpush2.msra.mxu0 0.0
  %255 = vmatprep.subr.mxu0 0.0
  %256 = vmatpush2.msra.mxu0 0.0
  %257 = vmatprep.subr.mxu0 0.0
  %258 = vmatpush2.msra.mxu0 0.0
  %259 = vmatprep.subr.mxu0 0.0
  %260 = vmatpush2.msra.mxu0 0.0
  %261 = vmatprep.subr.mxu0 0.0
  %262 = vmatpush2.msra.mxu0 0.0
  %263 = vmatprep.mubr.f32.mxu0 0.0
  %264 = vmatmul.mubr.f32.gmra.mxu0 %v62
  %v265 = vpop.f32.mrf.mxu0
  %v266 = vadd.f32 %v58, %v265
  %v267 = vpop.f32.mrf.mxu0
  %v268 = vadd.f32 %v58, %v267
  %269 = vdwg.mxu0
  %270 = vmatprep.subr.mxu0 0.0
  %271 = vmatpush1.msra.mxu0 0.0
  %272 = vmatprep.subr.mxu0 0.0
  %273 = vmatpush1.msra.mxu0 0.0
  %274 = vmatprep.subr.mxu0 0.0
  %275 = vmatpush1.msra.mxu0 0.0
  %276 = vmatprep.subr.mxu0 0.0
  %277 = vmatpush1.msra.mxu0 0.0
  %278 = vmatprep.subr.mxu0 0.0
  %279 = vmatpush1.msra.mxu0 0.0
  %280 = vmatprep.subr.mxu0 0.0
  %281 = vmatpush1.msra.mxu0 0.0
  %282 = vmatprep.subr.mxu0 0.0
  %283 = vmatpush1.msra.mxu0 0.0
  %284 = vmatprep.subr.mxu0 0.0
  %285 = vmatpush1.msra.mxu0 0.0
  %286 = vmatprep.subr.mxu0 0.0
  %287 = vmatpush1.msra.mxu0 0.0
  %288 = vmatprep.subr.mxu0 0.0
  %289 = vmatpush1.msra.mxu0 0.0
  %290 = vmatprep.subr.mxu0 0.0
  %291 = vmatpush1.msra.mxu0 0.0
  %292 = vmatprep.subr.mxu0 0.0
  %293 = vmatpush1.msra.mxu0 0.0
  %294 = vmatprep.subr.mxu0 0.0
  %295 = vmatpush1.msra.mxu0 0.0
  %296 = vmatprep.subr.mxu0 0.0
  %297 = vmatpush1.msra.mxu0 0.0
  %298 = vmatprep.subr.mxu0 0.0
  %299 = vmatpush1.msra.mxu0 0.0
  %300 = vmatprep.subr.mxu0 %v81
  %301 = vmatpush1.msra.mxu0 %v78
  %302 = vmatprep.subr.mxu0 0.0
  %303 = vmatpush2.msra.mxu0 0.0
  %304 = vmatprep.subr.mxu0 0.0
  %305 = vmatpush2.msra.mxu0 0.0
  %306 = vmatprep.subr.mxu0 0.0
  %307 = vmatpush2.msra.mxu0 0.0
  %308 = vmatprep.subr.mxu0 0.0
  %309 = vmatpush2.msra.mxu0 0.0
  %310 = vmatprep.subr.mxu0 0.0
  %311 = vmatpush2.msra.mxu0 0.0
  %312 = vmatprep.subr.mxu0 0.0
  %313 = vmatpush2.msra.mxu0 0.0
  %314 = vmatprep.subr.mxu0 0.0
  %315 = vmatpush2.msra.mxu0 0.0
  %316 = vmatprep.subr.mxu0 0.0
  %317 = vmatpush2.msra.mxu0 0.0
  %318 = vmatprep.subr.mxu0 0.0
  %319 = vmatpush2.msra.mxu0 0.0
  %320 = vmatprep.subr.mxu0 0.0
  %321 = vmatpush2.msra.mxu0 0.0
  %322 = vmatprep.subr.mxu0 0.0
  %323 = vmatpush2.msra.mxu0 0.0
  %324 = vmatprep.subr.mxu0 0.0
  %325 = vmatpush2.msra.mxu0 0.0
  %326 = vmatprep.subr.mxu0 0.0
  %327 = vmatpush2.msra.mxu0 0.0
  %328 = vmatprep.subr.mxu0 0.0
  %329 = vmatpush2.msra.mxu0 0.0
  %330 = vmatprep.subr.mxu0 0.0
  %331 = vmatpush2.msra.mxu0 0.0
  %332 = vmatprep.subr.mxu0 0.0
  %333 = vmatpush2.msra.mxu0 0.0
  %334 = vmatprep.mubr.f32.mxu0 0.0
  %335 = vmatmul.mubr.f32.gmra.mxu0 %v62
  %v336 = vpop.f32.mrf.mxu0
  %v337 = vadd.f32 %v58, %v336
  %v338 = vpop.f32.mrf.mxu0
  %v339 = vadd.f32 %v58, %v338
  %340 = vdwg.mxu0
  %341 = vmatprep.subr.mxu0 0.0
  %342 = vmatpush1.msra.mxu0 0.0
  %343 = vmatprep.subr.mxu0 0.0
  %344 = vmatpush1.msra.mxu0 0.0
  %345 = vmatprep.subr.mxu0 0.0
  %346 = vmatpush1.msra.mxu0 0.0
  %347 = vmatprep.subr.mxu0 0.0
  %348 = vmatpush1.msra.mxu0 0.0
  %349 = vmatprep.subr.mxu0 0.0
  %350 = vmatpush1.msra.mxu0 0.0
  %351 = vmatprep.subr.mxu0 0.0
  %352 = vmatpush1.msra.mxu0 0.0
  %353 = vmatprep.subr.mxu0 0.0
  %354 = vmatpush1.msra.mxu0 0.0
  %355 = vmatprep.subr.mxu0 0.0
  %356 = vmatpush1.msra.mxu0 0.0
  %357 = vmatprep.subr.mxu0 0.0
  %358 = vmatpush1.msra.mxu0 0.0
  %359 = vmatprep.subr.mxu0 0.0
  %360 = vmatpush1.msra.mxu0 0.0
  %361 = vmatprep.subr.mxu0 0.0
  %362 = vmatpush1.msra.mxu0 0.0
  %363 = vmatprep.subr.mxu0 0.0
  %364 = vmatpush1.msra.mxu0 0.0
  %365 = vmatprep.subr.mxu0 0.0
  %366 = vmatpush1.msra.mxu0 0.0
  %367 = vmatprep.subr.mxu0 0.0
  %368 = vmatpush1.msra.mxu0 0.0
  %369 = vmatprep.subr.mxu0 0.0
  %370 = vmatpush1.msra.mxu0 0.0
  %371 = vmatprep.subr.mxu0 %v87
  %372 = vmatpush1.msra.mxu0 %v84
  %373 = vmatprep.subr.mxu0 0.0
  %374 = vmatpush2.msra.mxu0 0.0
  %375 = vmatprep.subr.mxu0 0.0
  %376 = vmatpush2.msra.mxu0 0.0
  %377 = vmatprep.subr.mxu0 0.0
  %378 = vmatpush2.msra.mxu0 0.0
  %379 = vmatprep.subr.mxu0 0.0
  %380 = vmatpush2.msra.mxu0 0.0
  %381 = vmatprep.subr.mxu0 0.0
  %382 = vmatpush2.msra.mxu0 0.0
  %383 = vmatprep.subr.mxu0 0.0
  %384 = vmatpush2.msra.mxu0 0.0
  %385 = vmatprep.subr.mxu0 0.0
  %386 = vmatpush2.msra.mxu0 0.0
  %387 = vmatprep.subr.mxu0 0.0
  %388 = vmatpush2.msra.mxu0 0.0
  %389 = vmatprep.subr.mxu0 0.0
  %390 = vmatpush2.msra.mxu0 0.0
  %391 = vmatprep.subr.mxu0 0.0
  %392 = vmatpush2.msra.mxu0 0.0
  %393 = vmatprep.subr.mxu0 0.0
  %394 = vmatpush2.msra.mxu0 0.0
  %395 = vmatprep.subr.mxu0 0.0
  %396 = vmatpush2.msra.mxu0 0.0
  %397 = vmatprep.subr.mxu0 0.0
  %398 = vmatpush2.msra.mxu0 0.0
  %399 = vmatprep.subr.mxu0 0.0
  %400 = vmatpush2.msra.mxu0 0.0
  %401 = vmatprep.subr.mxu0 0.0
  %402 = vmatpush2.msra.mxu0 0.0
  %403 = vmatprep.subr.mxu0 0.0
  %404 = vmatpush2.msra.mxu0 0.0
  %405 = vmatprep.mubr.f32.mxu0 0.0
  %406 = vmatmul.mubr.f32.gmra.mxu0 %v62
  %v407 = vpop.f32.mrf.mxu0
  %v408 = vadd.f32 %v58, %v407
  %v409 = vpop.f32.mrf.mxu0
  %v410 = vadd.f32 %v58, %v409
  %411 = vdwg.mxu0
  %412 = vmatprep.subr.mxu0 0.0
  %413 = vmatpush1.msra.mxu0 0.0
  %414 = vmatprep.subr.mxu0 0.0
  %415 = vmatpush1.msra.mxu0 0.0
  %416 = vmatprep.subr.mxu0 0.0
  %417 = vmatpush1.msra.mxu0 0.0
  %418 = vmatprep.subr.mxu0 0.0
  %419 = vmatpush1.msra.mxu0 0.0
  %420 = vmatprep.subr.mxu0 0.0
  %421 = vmatpush1.msra.mxu0 0.0
  %422 = vmatprep.subr.mxu0 0.0
  %423 = vmatpush1.msra.mxu0 0.0
  %424 = vmatprep.subr.mxu0 0.0
  %425 = vmatpush1.msra.mxu0 0.0
  %426 = vmatprep.subr.mxu0 0.0
  %427 = vmatpush1.msra.mxu0 0.0
  %428 = vmatprep.subr.mxu0 0.0
  %429 = vmatpush1.msra.mxu0 0.0
  %430 = vmatprep.subr.mxu0 0.0
  %431 = vmatpush1.msra.mxu0 0.0
  %432 = vmatprep.subr.mxu0 0.0
  %433 = vmatpush1.msra.mxu0 0.0
  %434 = vmatprep.subr.mxu0 0.0
  %435 = vmatpush1.msra.mxu0 0.0
  %436 = vmatprep.subr.mxu0 0.0
  %437 = vmatpush1.msra.mxu0 0.0
  %438 = vmatprep.subr.mxu0 0.0
  %439 = vmatpush1.msra.mxu0 0.0
  %440 = vmatprep.subr.mxu0 0.0
  %441 = vmatpush1.msra.mxu0 0.0
  %442 = vmatprep.subr.mxu0 %v93
  %443 = vmatpush1.msra.mxu0 %v90
  %444 = vmatprep.subr.mxu0 0.0
  %445 = vmatpush2.msra.mxu0 0.0
  %446 = vmatprep.subr.mxu0 0.0
  %447 = vmatpush2.msra.mxu0 0.0
  %448 = vmatprep.subr.mxu0 0.0
  %449 = vmatpush2.msra.mxu0 0.0
  %450 = vmatprep.subr.mxu0 0.0
  %451 = vmatpush2.msra.mxu0 0.0
  %452 = vmatprep.subr.mxu0 0.0
  %453 = vmatpush2.msra.mxu0 0.0
  %454 = vmatprep.subr.mxu0 0.0
  %455 = vmatpush2.msra.mxu0 0.0
  %456 = vmatprep.subr.mxu0 0.0
  %457 = vmatpush2.msra.mxu0 0.0
  %458 = vmatprep.subr.mxu0 0.0
  %459 = vmatpush2.msra.mxu0 0.0
  %460 = vmatprep.subr.mxu0 0.0
  %461 = vmatpush2.msra.mxu0 0.0
  %462 = vmatprep.subr.mxu0 0.0
  %463 = vmatpush2.msra.mxu0 0.0
  %464 = vmatprep.subr.mxu0 0.0
  %465 = vmatpush2.msra.mxu0 0.0
  %466 = vmatprep.subr.mxu0 0.0
  %467 = vmatpush2.msra.mxu0 0.0
  %468 = vmatprep.subr.mxu0 0.0
  %469 = vmatpush2.msra.mxu0 0.0
  %470 = vmatprep.subr.mxu0 0.0
  %471 = vmatpush2.msra.mxu0 0.0
  %472 = vmatprep.subr.mxu0 0.0
  %473 = vmatpush2.msra.mxu0 0.0
  %474 = vmatprep.subr.mxu0 0.0
  %475 = vmatpush2.msra.mxu0 0.0
  %476 = vmatprep.mubr.f32.mxu0 0.0
  %477 = vmatmul.mubr.f32.gmra.mxu0 %v62
  %v478 = vpop.f32.mrf.mxu0
  %v479 = vadd.f32 %v58, %v478
  %v480 = vpop.f32.mrf.mxu0
  %v481 = vadd.f32 %v58, %v480
  %482 = vdwg.mxu0
  %483 = vmatprep.subr.mxu0 0.0
  %484 = vmatpush1.msra.mxu0 0.0
  %485 = vmatprep.subr.mxu0 0.0
  %486 = vmatpush1.msra.mxu0 0.0
  %487 = vmatprep.subr.mxu0 0.0
  %488 = vmatpush1.msra.mxu0 0.0
  %489 = vmatprep.subr.mxu0 0.0
  %490 = vmatpush1.msra.mxu0 0.0
  %491 = vmatprep.subr.mxu0 0.0
  %492 = vmatpush1.msra.mxu0 0.0
  %493 = vmatprep.subr.mxu0 0.0
  %494 = vmatpush1.msra.mxu0 0.0
  %495 = vmatprep.subr.mxu0 0.0
  %496 = vmatpush1.msra.mxu0 0.0
  %497 = vmatprep.subr.mxu0 0.0
  %498 = vmatpush1.msra.mxu0 0.0
  %499 = vmatprep.subr.mxu0 0.0
  %500 = vmatpush1.msra.mxu0 0.0
  %501 = vmatprep.subr.mxu0 0.0
  %502 = vmatpush1.msra.mxu0 0.0
  %503 = vmatprep.subr.mxu0 0.0
  %504 = vmatpush1.msra.mxu0 0.0
  %505 = vmatprep.subr.mxu0 0.0
  %506 = vmatpush1.msra.mxu0 0.0
  %507 = vmatprep.subr.mxu0 0.0
  %508 = vmatpush1.msra.mxu0 0.0
  %509 = vmatprep.subr.mxu0 0.0
  %510 = vmatpush1.msra.mxu0 0.0
  %511 = vmatprep.subr.mxu0 0.0
  %512 = vmatpush1.msra.mxu0 0.0
  %513 = vmatprep.subr.mxu0 %v99
  %514 = vmatpush1.msra.mxu0 %v96
  %515 = vmatprep.subr.mxu0 0.0
  %516 = vmatpush2.msra.mxu0 0.0
  %517 = vmatprep.subr.mxu0 0.0
  %518 = vmatpush2.msra.mxu0 0.0
  %519 = vmatprep.subr.mxu0 0.0
  %520 = vmatpush2.msra.mxu0 0.0
  %521 = vmatprep.subr.mxu0 0.0
  %522 = vmatpush2.msra.mxu0 0.0
  %523 = vmatprep.subr.mxu0 0.0
  %524 = vmatpush2.msra.mxu0 0.0
  %525 = vmatprep.subr.mxu0 0.0
  %526 = vmatpush2.msra.mxu0 0.0
  %527 = vmatprep.subr.mxu0 0.0
  %528 = vmatpush2.msra.mxu0 0.0
  %529 = vmatprep.subr.mxu0 0.0
  %530 = vmatpush2.msra.mxu0 0.0
  %531 = vmatprep.subr.mxu0 0.0
  %532 = vmatpush2.msra.mxu0 0.0
  %533 = vmatprep.subr.mxu0 0.0
  %534 = vmatpush2.msra.mxu0 0.0
  %535 = vmatprep.subr.mxu0 0.0
  %536 = vmatpush2.msra.mxu0 0.0
  %537 = vmatprep.subr.mxu0 0.0
  %538 = vmatpush2.msra.mxu0 0.0
  %539 = vmatprep.subr.mxu0 0.0
  %540 = vmatpush2.msra.mxu0 0.0
  %541 = vmatprep.subr.mxu0 0.0
  %542 = vmatpush2.msra.mxu0 0.0
  %543 = vmatprep.subr.mxu0 0.0
  %544 = vmatpush2.msra.mxu0 0.0
  %545 = vmatprep.subr.mxu0 0.0
  %546 = vmatpush2.msra.mxu0 0.0
  %547 = vmatprep.mubr.f32.mxu0 0.0
  %548 = vmatmul.mubr.f32.gmra.mxu0 %v62
  %v549 = vpop.f32.mrf.mxu0
  %v550 = vadd.f32 %v58, %v549
  %v551 = vpop.f32.mrf.mxu0
  %v552 = vadd.f32 %v58, %v551
  %553 = vdwg.mxu0
  %554 = vmatprep.subr.mxu0 0.0
  %555 = vmatpush1.msra.mxu0 0.0
  %556 = vmatprep.subr.mxu0 0.0
  %557 = vmatpush1.msra.mxu0 0.0
  %558 = vmatprep.subr.mxu0 0.0
  %559 = vmatpush1.msra.mxu0 0.0
  %560 = vmatprep.subr.mxu0 0.0
  %561 = vmatpush1.msra.mxu0 0.0
  %562 = vmatprep.subr.mxu0 0.0
  %563 = vmatpush1.msra.mxu0 0.0
  %564 = vmatprep.subr.mxu0 0.0
  %565 = vmatpush1.msra.mxu0 0.0
  %566 = vmatprep.subr.mxu0 0.0
  %567 = vmatpush1.msra.mxu0 0.0
  %568 = vmatprep.subr.mxu0 0.0
  %569 = vmatpush1.msra.mxu0 0.0
  %570 = vmatprep.subr.mxu0 0.0
  %571 = vmatpush1.msra.mxu0 0.0
  %572 = vmatprep.subr.mxu0 0.0
  %573 = vmatpush1.msra.mxu0 0.0
  %574 = vmatprep.subr.mxu0 0.0
  %575 = vmatpush1.msra.mxu0 0.0
  %576 = vmatprep.subr.mxu0 0.0
  %577 = vmatpush1.msra.mxu0 0.0
  %578 = vmatprep.subr.mxu0 0.0
  %579 = vmatpush1.msra.mxu0 0.0
  %580 = vmatprep.subr.mxu0 0.0
  %581 = vmatpush1.msra.mxu0 0.0
  %582 = vmatprep.subr.mxu0 0.0
  %583 = vmatpush1.msra.mxu0 0.0
  %584 = vmatprep.subr.mxu0 %v105
  %585 = vmatpush1.msra.mxu0 %v102
  %586 = vmatprep.subr.mxu0 0.0
  %587 = vmatpush2.msra.mxu0 0.0
  %588 = vmatprep.subr.mxu0 0.0
  %589 = vmatpush2.msra.mxu0 0.0
  %590 = vmatprep.subr.mxu0 0.0
  %591 = vmatpush2.msra.mxu0 0.0
  %592 = vmatprep.subr.mxu0 0.0
  %593 = vmatpush2.msra.mxu0 0.0
  %594 = vmatprep.subr.mxu0 0.0
  %595 = vmatpush2.msra.mxu0 0.0
  %596 = vmatprep.subr.mxu0 0.0
  %597 = vmatpush2.msra.mxu0 0.0
  %598 = vmatprep.subr.mxu0 0.0
  %599 = vmatpush2.msra.mxu0 0.0
  %600 = vmatprep.subr.mxu0 0.0
  %601 = vmatpush2.msra.mxu0 0.0
  %602 = vmatprep.subr.mxu0 0.0
  %603 = vmatpush2.msra.mxu0 0.0
  %604 = vmatprep.subr.mxu0 0.0
  %605 = vmatpush2.msra.mxu0 0.0
  %606 = vmatprep.subr.mxu0 0.0
  %607 = vmatpush2.msra.mxu0 0.0
  %608 = vmatprep.subr.mxu0 0.0
  %609 = vmatpush2.msra.mxu0 0.0
  %610 = vmatprep.subr.mxu0 0.0
  %611 = vmatpush2.msra.mxu0 0.0
  %612 = vmatprep.subr.mxu0 0.0
  %613 = vmatpush2.msra.mxu0 0.0
  %614 = vmatprep.subr.mxu0 0.0
  %615 = vmatpush2.msra.mxu0 0.0
  %616 = vmatprep.subr.mxu0 0.0
  %617 = vmatpush2.msra.mxu0 0.0
  %618 = vmatprep.mubr.f32.mxu0 0.0
  %619 = vmatmul.mubr.f32.gmra.mxu0 %v62
  %v620 = vpop.f32.mrf.mxu0
  %v621 = vadd.f32 %v58, %v620
  %v622 = vpop.f32.mrf.mxu0
  %v623 = vadd.f32 %v58, %v622
  %624 = vdwg.mxu0
  %625 = vmatprep.subr.mxu0 0.0
  %626 = vmatpush1.msra.mxu0 0.0
  %627 = vmatprep.subr.mxu0 0.0
  %628 = vmatpush1.msra.mxu0 0.0
  %629 = vmatprep.subr.mxu0 0.0
  %630 = vmatpush1.msra.mxu0 0.0
  %631 = vmatprep.subr.mxu0 0.0
  %632 = vmatpush1.msra.mxu0 0.0
  %633 = vmatprep.subr.mxu0 0.0
  %634 = vmatpush1.msra.mxu0 0.0
  %635 = vmatprep.subr.mxu0 0.0
  %636 = vmatpush1.msra.mxu0 0.0
  %637 = vmatprep.subr.mxu0 0.0
  %638 = vmatpush1.msra.mxu0 0.0
  %639 = vmatprep.subr.mxu0 0.0
  %640 = vmatpush1.msra.mxu0 0.0
  %641 = vmatprep.subr.mxu0 0.0
  %642 = vmatpush1.msra.mxu0 0.0
  %643 = vmatprep.subr.mxu0 0.0
  %644 = vmatpush1.msra.mxu0 0.0
  %645 = vmatprep.subr.mxu0 0.0
  %646 = vmatpush1.msra.mxu0 0.0
  %647 = vmatprep.subr.mxu0 0.0
  %648 = vmatpush1.msra.mxu0 0.0
  %649 = vmatprep.subr.mxu0 0.0
  %650 = vmatpush1.msra.mxu0 0.0
  %651 = vmatprep.subr.mxu0 0.0
  %652 = vmatpush1.msra.mxu0 0.0
  %653 = vmatprep.subr.mxu0 0.0
  %654 = vmatpush1.msra.mxu0 0.0
  %655 = vmatprep.subr.mxu0 %v111
  %656 = vmatpush1.msra.mxu0 %v108
  %657 = vmatprep.subr.mxu0 0.0
  %658 = vmatpush2.msra.mxu0 0.0
  %659 = vmatprep.subr.mxu0 0.0
  %660 = vmatpush2.msra.mxu0 0.0
  %661 = vmatprep.subr.mxu0 0.0
  %662 = vmatpush2.msra.mxu0 0.0
  %663 = vmatprep.subr.mxu0 0.0
  %664 = vmatpush2.msra.mxu0 0.0
  %665 = vmatprep.subr.mxu0 0.0
  %666 = vmatpush2.msra.mxu0 0.0
  %667 = vmatprep.subr.mxu0 0.0
  %668 = vmatpush2.msra.mxu0 0.0
  %669 = vmatprep.subr.mxu0 0.0
  %670 = vmatpush2.msra.mxu0 0.0
  %671 = vmatprep.subr.mxu0 0.0
  %672 = vmatpush2.msra.mxu0 0.0
  %673 = vmatprep.subr.mxu0 0.0
  %674 = vmatpush2.msra.mxu0 0.0
  %675 = vmatprep.subr.mxu0 0.0
  %676 = vmatpush2.msra.mxu0 0.0
  %677 = vmatprep.subr.mxu0 0.0
  %678 = vmatpush2.msra.mxu0 0.0
  %679 = vmatprep.subr.mxu0 0.0
  %680 = vmatpush2.msra.mxu0 0.0
  %681 = vmatprep.subr.mxu0 0.0
  %682 = vmatpush2.msra.mxu0 0.0
  %683 = vmatprep.subr.mxu0 0.0
  %684 = vmatpush2.msra.mxu0 0.0
  %685 = vmatprep.subr.mxu0 0.0
  %686 = vmatpush2.msra.mxu0 0.0
  %687 = vmatprep.subr.mxu0 0.0
  %688 = vmatpush2.msra.mxu0 0.0
  %689 = vmatprep.mubr.f32.mxu0 0.0
  %690 = vmatmul.mubr.f32.gmra.mxu0 %v62
  %v691 = vpop.f32.mrf.mxu0
  %v692 = vadd.f32 %v58, %v691
  %v693 = vpop.f32.mrf.mxu0
  %v694 = vadd.f32 %v58, %v693
  %695 = vdwg.mxu0
  %696 = vmatprep.subr.mxu0 0.0
  %697 = vmatpush1.msra.mxu0 0.0
  %698 = vmatprep.subr.mxu0 0.0
  %699 = vmatpush1.msra.mxu0 0.0
  %700 = vmatprep.subr.mxu0 0.0
  %701 = vmatpush1.msra.mxu0 0.0
  %702 = vmatprep.subr.mxu0 0.0
  %703 = vmatpush1.msra.mxu0 0.0
  %704 = vmatprep.subr.mxu0 0.0
  %705 = vmatpush1.msra.mxu0 0.0
  %706 = vmatprep.subr.mxu0 0.0
  %707 = vmatpush1.msra.mxu0 0.0
  %708 = vmatprep.subr.mxu0 0.0
  %709 = vmatpush1.msra.mxu0 0.0
  %710 = vmatprep.subr.mxu0 0.0
  %711 = vmatpush1.msra.mxu0 0.0
  %712 = vmatprep.subr.mxu0 0.0
  %713 = vmatpush1.msra.mxu0 0.0
  %714 = vmatprep.subr.mxu0 0.0
  %715 = vmatpush1.msra.mxu0 0.0
  %716 = vmatprep.subr.mxu0 0.0
  %717 = vmatpush1.msra.mxu0 0.0
  %718 = vmatprep.subr.mxu0 0.0
  %719 = vmatpush1.msra.mxu0 0.0
  %720 = vmatprep.subr.mxu0 0.0
  %721 = vmatpush1.msra.mxu0 0.0
  %722 = vmatprep.subr.mxu0 0.0
  %723 = vmatpush1.msra.mxu0 0.0
  %724 = vmatprep.subr.mxu0 0.0
  %725 = vmatpush1.msra.mxu0 0.0
  %726 = vmatprep.subr.mxu0 %v117
  %727 = vmatpush1.msra.mxu0 %v114
  %728 = vmatprep.subr.mxu0 0.0
  %729 = vmatpush2.msra.mxu0 0.0
  %730 = vmatprep.subr.mxu0 0.0
  %731 = vmatpush2.msra.mxu0 0.0
  %732 = vmatprep.subr.mxu0 0.0
  %733 = vmatpush2.msra.mxu0 0.0
  %734 = vmatprep.subr.mxu0 0.0
  %735 = vmatpush2.msra.mxu0 0.0
  %736 = vmatprep.subr.mxu0 0.0
  %737 = vmatpush2.msra.mxu0 0.0
  %738 = vmatprep.subr.mxu0 0.0
  %739 = vmatpush2.msra.mxu0 0.0
  %740 = vmatprep.subr.mxu0 0.0
  %741 = vmatpush2.msra.mxu0 0.0
  %742 = vmatprep.subr.mxu0 0.0
  %743 = vmatpush2.msra.mxu0 0.0
  %744 = vmatprep.subr.mxu0 0.0
  %745 = vmatpush2.msra.mxu0 0.0
  %746 = vmatprep.subr.mxu0 0.0
  %747 = vmatpush2.msra.mxu0 0.0
  %748 = vmatprep.subr.mxu0 0.0
  %749 = vmatpush2.msra.mxu0 0.0
  %750 = vmatprep.subr.mxu0 0.0
  %751 = vmatpush2.msra.mxu0 0.0
  %752 = vmatprep.subr.mxu0 0.0
  %753 = vmatpush2.msra.mxu0 0.0
  %754 = vmatprep.subr.mxu0 0.0
  %755 = vmatpush2.msra.mxu0 0.0
  %756 = vmatprep.subr.mxu0 0.0
  %757 = vmatpush2.msra.mxu0 0.0
  %758 = vmatprep.subr.mxu0 0.0
  %759 = vmatpush2.msra.mxu0 0.0
  %760 = vmatprep.mubr.f32.mxu0 0.0
  %761 = vmatmul.mubr.f32.gmra.mxu0 %v62
  %v762 = vpop.f32.mrf.mxu0
  %v763 = vadd.f32 %v58, %v762
  %v764 = vpop.f32.mrf.mxu0
  %v765 = vadd.f32 %v58, %v764
  %766 = vdwg.mxu0
  %767 = vmatprep.subr.mxu0 0.0
  %768 = vmatpush1.msra.mxu0 0.0
  %769 = vmatprep.subr.mxu0 0.0
  %770 = vmatpush1.msra.mxu0 0.0
  %771 = vmatprep.subr.mxu0 0.0
  %772 = vmatpush1.msra.mxu0 0.0
  %773 = vmatprep.subr.mxu0 0.0
  %774 = vmatpush1.msra.mxu0 0.0
  %775 = vmatprep.subr.mxu0 0.0
  %776 = vmatpush1.msra.mxu0 0.0
  %777 = vmatprep.subr.mxu0 0.0
  %778 = vmatpush1.msra.mxu0 0.0
  %779 = vmatprep.subr.mxu0 0.0
  %780 = vmatpush1.msra.mxu0 0.0
  %781 = vmatprep.subr.mxu0 0.0
  %782 = vmatpush1.msra.mxu0 0.0
  %783 = vmatprep.subr.mxu0 0.0
  %784 = vmatpush1.msra.mxu0 0.0
  %785 = vmatprep.subr.mxu0 0.0
  %786 = vmatpush1.msra.mxu0 0.0
  %787 = vmatprep.subr.mxu0 0.0
  %788 = vmatpush1.msra.mxu0 0.0
  %789 = vmatprep.subr.mxu0 0.0
  %790 = vmatpush1.msra.mxu0 0.0
  %791 = vmatprep.subr.mxu0 0.0
  %792 = vmatpush1.msra.mxu0 0.0
  %793 = vmatprep.subr.mxu0 0.0
  %794 = vmatpush1.msra.mxu0 0.0
  %795 = vmatprep.subr.mxu0 0.0
  %796 = vmatpush1.msra.mxu0 0.0
  %797 = vmatprep.subr.mxu0 %v123
  %798 = vmatpush1.msra.mxu0 %v120
  %799 = vmatprep.subr.mxu0 0.0
  %800 = vmatpush2.msra.mxu0 0.0
  %801 = vmatprep.subr.mxu0 0.0
  %802 = vmatpush2.msra.mxu0 0.0
  %803 = vmatprep.subr.mxu0 0.0
  %804 = vmatpush2.msra.mxu0 0.0
  %805 = vmatprep.subr.mxu0 0.0
  %806 = vmatpush2.msra.mxu0 0.0
  %807 = vmatprep.subr.mxu0 0.0
  %808 = vmatpush2.msra.mxu0 0.0
  %809 = vmatprep.subr.mxu0 0.0
  %810 = vmatpush2.msra.mxu0 0.0
  %811 = vmatprep.subr.mxu0 0.0
  %812 = vmatpush2.msra.mxu0 0.0
  %813 = vmatprep.subr.mxu0 0.0
  %814 = vmatpush2.msra.mxu0 0.0
  %815 = vmatprep.subr.mxu0 0.0
  %816 = vmatpush2.msra.mxu0 0.0
  %817 = vmatprep.subr.mxu0 0.0
  %818 = vmatpush2.msra.mxu0 0.0
  %819 = vmatprep.subr.mxu0 0.0
  %820 = vmatpush2.msra.mxu0 0.0
  %821 = vmatprep.subr.mxu0 0.0
  %822 = vmatpush2.msra.mxu0 0.0
  %823 = vmatprep.subr.mxu0 0.0
  %824 = vmatpush2.msra.mxu0 0.0
  %825 = vmatprep.subr.mxu0 0.0
  %826 = vmatpush2.msra.mxu0 0.0
  %827 = vmatprep.subr.mxu0 0.0
  %828 = vmatpush2.msra.mxu0 0.0
  %829 = vmatprep.subr.mxu0 0.0
  %830 = vmatpush2.msra.mxu0 0.0
  %831 = vmatprep.mubr.f32.mxu0 0.0
  %832 = vmatmul.mubr.f32.gmra.mxu0 %v62
  %v833 = vpop.f32.mrf.mxu0
  %v834 = vadd.f32 %v58, %v833
  %v835 = vpop.f32.mrf.mxu0
  %v836 = vadd.f32 %v58, %v835
  %837 = vdwg.mxu0
  %838 = vmatprep.subr.mxu0 0.0
  %839 = vmatpush1.msra.mxu0 0.0
  %840 = vmatprep.subr.mxu0 0.0
  %841 = vmatpush1.msra.mxu0 0.0
  %842 = vmatprep.subr.mxu0 0.0
  %843 = vmatpush1.msra.mxu0 0.0
  %844 = vmatprep.subr.mxu0 0.0
  %845 = vmatpush1.msra.mxu0 0.0
  %846 = vmatprep.subr.mxu0 0.0
  %847 = vmatpush1.msra.mxu0 0.0
  %848 = vmatprep.subr.mxu0 0.0
  %849 = vmatpush1.msra.mxu0 0.0
  %850 = vmatprep.subr.mxu0 0.0
  %851 = vmatpush1.msra.mxu0 0.0
  %852 = vmatprep.subr.mxu0 0.0
  %853 = vmatpush1.msra.mxu0 0.0
  %854 = vmatprep.subr.mxu0 0.0
  %855 = vmatpush1.msra.mxu0 0.0
  %856 = vmatprep.subr.mxu0 0.0
  %857 = vmatpush1.msra.mxu0 0.0
  %858 = vmatprep.subr.mxu0 0.0
  %859 = vmatpush1.msra.mxu0 0.0
  %860 = vmatprep.subr.mxu0 0.0
  %861 = vmatpush1.msra.mxu0 0.0
  %862 = vmatprep.subr.mxu0 0.0
  %863 = vmatpush1.msra.mxu0 0.0
  %864 = vmatprep.subr.mxu0 0.0
  %865 = vmatpush1.msra.mxu0 0.0
  %866 = vmatprep.subr.mxu0 0.0
  %867 = vmatpush1.msra.mxu0 0.0
  %868 = vmatprep.subr.mxu0 0.0
  %869 = vmatpush1.msra.mxu0 %v126
  %870 = vmatprep.subr.mxu0 0.0
  %871 = vmatpush2.msra.mxu0 0.0
  %872 = vmatprep.subr.mxu0 0.0
  %873 = vmatpush2.msra.mxu0 0.0
  %874 = vmatprep.subr.mxu0 0.0
  %875 = vmatpush2.msra.mxu0 0.0
  %876 = vmatprep.subr.mxu0 0.0
  %877 = vmatpush2.msra.mxu0 0.0
  %878 = vmatprep.subr.mxu0 0.0
  %879 = vmatpush2.msra.mxu0 0.0
  %880 = vmatprep.subr.mxu0 0.0
  %881 = vmatpush2.msra.mxu0 0.0
  %882 = vmatprep.subr.mxu0 0.0
  %883 = vmatpush2.msra.mxu0 0.0
  %884 = vmatprep.subr.mxu0 0.0
  %885 = vmatpush2.msra.mxu0 0.0
  %886 = vmatprep.subr.mxu0 0.0
  %887 = vmatpush2.msra.mxu0 0.0
  %888 = vmatprep.subr.mxu0 0.0
  %889 = vmatpush2.msra.mxu0 0.0
  %890 = vmatprep.subr.mxu0 0.0
  %891 = vmatpush2.msra.mxu0 0.0
  %892 = vmatprep.subr.mxu0 0.0
  %893 = vmatpush2.msra.mxu0 0.0
  %894 = vmatprep.subr.mxu0 0.0
  %895 = vmatpush2.msra.mxu0 0.0
  %896 = vmatprep.subr.mxu0 0.0
  %897 = vmatpush2.msra.mxu0 0.0
  %898 = vmatprep.subr.mxu0 0.0
  %899 = vmatpush2.msra.mxu0 0.0
  %900 = vmatprep.subr.mxu0 0.0
  %901 = vmatpush2.msra.mxu0 0.0
  %902 = vmatprep.mubr.f32.mxu0 0.0
  %903 = vmatmul.mubr.f32.gmra.mxu0 %v62
  %v904 = vpop.f32.mrf.mxu0
  %v905 = vadd.f32 %v58, %v904
  %v906 = vpop.f32.mrf.mxu0
  %907 = vdwg.mxu0
  %v908 = vmax.f32 %v195, 0.0
  %v909 = vmax.f32 %v197, 0.0
  %v910 = vmax.f32 %v266, 0.0
  %v911 = vmax.f32 %v268, 0.0
  %v912 = vmax.f32 %v337, 0.0
  %v913 = vmax.f32 %v339, 0.0
  %v914 = vmax.f32 %v408, 0.0
  %v915 = vmax.f32 %v410, 0.0
  %v916 = vmax.f32 %v479, 0.0
  %v917 = vmax.f32 %v481, 0.0
  %v918 = vmax.f32 %v550, 0.0
  %v919 = vmax.f32 %v552, 0.0
  %v920 = vmax.f32 %v621, 0.0
  %v921 = vmax.f32 %v623, 0.0
  %v922 = vmax.f32 %v692, 0.0
  %v923 = vmax.f32 %v694, 0.0
  %v924 = vmax.f32 %v763, 0.0
  %v925 = vmax.f32 %v765, 0.0
  %v926 = vmax.f32 %v834, 0.0
  %v927 = vmax.f32 %v836, 0.0
  %v928 = vmax.f32 %v905, 0.0
  %v929 = vld [vmem:[%s3] sm:$0xff]
  %s930 = scalar_lea.vmem %s3, 8
  %v931 = vld [vmem:[%s930] sm:$0xff]
  %936 = vrot.lane.b32.xlu0 %v910, 6
  %v937 = vpop.permute.xlu0 %936
  %938 = vrot.lane.b32.xlu0 %v911, 6
  %v939 = vpop.permute.xlu0 %938
  %940 = vrot.lane.b32.xlu0 %v912, 6
  %v941 = vpop.permute.xlu0 %940
  %942 = vrot.lane.b32.xlu0 %v913, 6
  %v943 = vpop.permute.xlu0 %942
  %vm944 = vcmask 48128
  %v945 = vsel %vm944, %v937, %v939
  %v946 = vsel %vm944, %v939, %v941
  %v947 = vsel %vm944, %v941, %v943
  %vm948 = vcmask 31744
  %v950 = vsel %vm948, %v931, 0
  %vm952 = vcmask 1043456
  %v953 = vsel %vm952, %v945, 0
  %v955 = vsel %vm952, %v946, 0
  %v957 = vsel %vm952, %v947, 0
  %959 = vmatprep.subr.mxu0 0.0
  %960 = vmatpush1.msra.mxu0 0.0
  %961 = vmatprep.subr.mxu0 0.0
  %962 = vmatpush1.msra.mxu0 0.0
  %963 = vmatprep.subr.mxu0 0.0
  %964 = vmatpush1.msra.mxu0 0.0
  %965 = vmatprep.subr.mxu0 0.0
  %966 = vmatpush1.msra.mxu0 0.0
  %967 = vmatprep.subr.mxu0 0.0
  %968 = vmatpush1.msra.mxu0 0.0
  %969 = vmatprep.subr.mxu0 0.0
  %970 = vmatpush1.msra.mxu0 0.0
  %971 = vmatprep.subr.mxu0 0.0
  %972 = vmatpush1.msra.mxu0 0.0
  %973 = vmatprep.subr.mxu0 0.0
  %974 = vmatpush1.msra.mxu0 0.0
  %975 = vmatprep.subr.mxu0 0.0
  %976 = vmatpush1.msra.mxu0 0.0
  %977 = vmatprep.subr.mxu0 0.0
  %978 = vmatpush1.msra.mxu0 0.0
  %979 = vmatprep.subr.mxu0 0.0
  %980 = vmatpush1.msra.mxu0 0.0
  %981 = vmatprep.subr.mxu0 0.0
  %982 = vmatpush1.msra.mxu0 0.0
  %983 = vmatprep.subr.mxu0 0.0
  %984 = vmatpush1.msra.mxu0 0.0
  %985 = vmatprep.subr.mxu0 0.0
  %986 = vmatpush1.msra.mxu0 0.0
  %987 = vmatprep.subr.mxu0 0.0
  %988 = vmatpush1.msra.mxu0 0.0
  %989 = vmatprep.subr.mxu0 %v955
  %990 = vmatpush1.msra.mxu0 %v953
  %991 = vmatprep.subr.mxu0 0.0
  %992 = vmatpush2.msra.mxu0 0.0
  %993 = vmatprep.subr.mxu0 0.0
  %994 = vmatpush2.msra.mxu0 0.0
  %995 = vmatprep.subr.mxu0 0.0
  %996 = vmatpush2.msra.mxu0 0.0
  %997 = vmatprep.subr.mxu0 0.0
  %998 = vmatpush2.msra.mxu0 0.0
  %999 = vmatprep.subr.mxu0 0.0
  %1000 = vmatpush2.msra.mxu0 0.0
  %1001 = vmatprep.subr.mxu0 0.0
  %1002 = vmatpush2.msra.mxu0 0.0
  %1003 = vmatprep.subr.mxu0 0.0
  %1004 = vmatpush2.msra.mxu0 0.0
  %1005 = vmatprep.subr.mxu0 0.0
  %1006 = vmatpush2.msra.mxu0 0.0
  %1007 = vmatprep.subr.mxu0 0.0
  %1008 = vmatpush2.msra.mxu0 0.0
  %1009 = vmatprep.subr.mxu0 0.0
  %1010 = vmatpush2.msra.mxu0 0.0
  %1011 = vmatprep.subr.mxu0 0.0
  %1012 = vmatpush2.msra.mxu0 0.0
  %1013 = vmatprep.subr.mxu0 0.0
  %1014 = vmatpush2.msra.mxu0 0.0
  %1015 = vmatprep.subr.mxu0 0.0
  %1016 = vmatpush2.msra.mxu0 0.0
  %1017 = vmatprep.subr.mxu0 0.0
  %1018 = vmatpush2.msra.mxu0 0.0
  %1019 = vmatprep.subr.mxu0 0.0
  %1020 = vmatpush2.msra.mxu0 0.0
  %1021 = vmatprep.subr.mxu0 0.0
  %1022 = vmatpush2.msra.mxu0 0.0
  %1023 = vmatprep.mubr.f32.mxu0 0.0
  %1024 = vmatmul.mubr.f32.gmra.mxu0 %v950
  %v1025 = vpop.f32.mrf.mxu0
  %v1026 = vadd.f32 0.0, %v1025
  %v1027 = vpop.f32.mrf.mxu0
  %v1028 = vadd.f32 0.0, %v1027
  %1029 = vdwg.mxu0
  %1030 = vmatprep.subr.mxu0 0.0
  %1031 = vmatpush1.msra.mxu0 0.0
  %1032 = vmatprep.subr.mxu0 0.0
  %1033 = vmatpush1.msra.mxu0 0.0
  %1034 = vmatprep.subr.mxu0 0.0
  %1035 = vmatpush1.msra.mxu0 0.0
  %1036 = vmatprep.subr.mxu0 0.0
  %1037 = vmatpush1.msra.mxu0 0.0
  %1038 = vmatprep.subr.mxu0 0.0
  %1039 = vmatpush1.msra.mxu0 0.0
  %1040 = vmatprep.subr.mxu0 0.0
  %1041 = vmatpush1.msra.mxu0 0.0
  %1042 = vmatprep.subr.mxu0 0.0
  %1043 = vmatpush1.msra.mxu0 0.0
  %1044 = vmatprep.subr.mxu0 0.0
  %1045 = vmatpush1.msra.mxu0 0.0
  %1046 = vmatprep.subr.mxu0 0.0
  %1047 = vmatpush1.msra.mxu0 0.0
  %1048 = vmatprep.subr.mxu0 0.0
  %1049 = vmatpush1.msra.mxu0 0.0
  %1050 = vmatprep.subr.mxu0 0.0
  %1051 = vmatpush1.msra.mxu0 0.0
  %1052 = vmatprep.subr.mxu0 0.0
  %1053 = vmatpush1.msra.mxu0 0.0
  %1054 = vmatprep.subr.mxu0 0.0
  %1055 = vmatpush1.msra.mxu0 0.0
  %1056 = vmatprep.subr.mxu0 0.0
  %1057 = vmatpush1.msra.mxu0 0.0
  %1058 = vmatprep.subr.mxu0 0.0
  %1059 = vmatpush1.msra.mxu0 0.0
  %1060 = vmatprep.subr.mxu0 0.0
  %1061 = vmatpush1.msra.mxu0 %v957
  %1062 = vmatprep.subr.mxu0 0.0
  %1063 = vmatpush2.msra.mxu0 0.0
  %1064 = vmatprep.subr.mxu0 0.0
  %1065 = vmatpush2.msra.mxu0 0.0
  %1066 = vmatprep.subr.mxu0 0.0
  %1067 = vmatpush2.msra.mxu0 0.0
  %1068 = vmatprep.subr.mxu0 0.0
  %1069 = vmatpush2.msra.mxu0 0.0
  %1070 = vmatprep.subr.mxu0 0.0
  %1071 = vmatpush2.msra.mxu0 0.0
  %1072 = vmatprep.subr.mxu0 0.0
  %1073 = vmatpush2.msra.mxu0 0.0
  %1074 = vmatprep.subr.mxu0 0.0
  %1075 = vmatpush2.msra.mxu0 0.0
  %1076 = vmatprep.subr.mxu0 0.0
  %1077 = vmatpush2.msra.mxu0 0.0
  %1078 = vmatprep.subr.mxu0 0.0
  %1079 = vmatpush2.msra.mxu0 0.0
  %1080 = vmatprep.subr.mxu0 0.0
  %1081 = vmatpush2.msra.mxu0 0.0
  %1082 = vmatprep.subr.mxu0 0.0
  %1083 = vmatpush2.msra.mxu0 0.0
  %1084 = vmatprep.subr.mxu0 0.0
  %1085 = vmatpush2.msra.mxu0 0.0
  %1086 = vmatprep.subr.mxu0 0.0
  %1087 = vmatpush2.msra.mxu0 0.0
  %1088 = vmatprep.subr.mxu0 0.0
  %1089 = vmatpush2.msra.mxu0 0.0
  %1090 = vmatprep.subr.mxu0 0.0
  %1091 = vmatpush2.msra.mxu0 0.0
  %1092 = vmatprep.subr.mxu0 0.0
  %1093 = vmatpush2.msra.mxu0 0.0
  %1094 = vmatprep.mubr.f32.mxu0 0.0
  %1095 = vmatmul.mubr.f32.gmra.mxu0 %v950
  %v1096 = vpop.f32.mrf.mxu0
  %v1097 = vadd.f32 0.0, %v1096
  %v1098 = vpop.f32.mrf.mxu0
  %1099 = vdwg.mxu0
  %v1101 = vsel %vm948, %v929, 0
  %v1104 = vsel %vm952, %v908, 0
  %v1107 = vsel %vm952, %v909, 0
  %v1109 = vsel %vm952, %v910, 0
  %1111 = vmatprep.subr.mxu0 0.0
  %1112 = vmatpush1.msra.mxu0 0.0
  %1113 = vmatprep.subr.mxu0 0.0
  %1114 = vmatpush1.msra.mxu0 0.0
  %1115 = vmatprep.subr.mxu0 0.0
  %1116 = vmatpush1.msra.mxu0 0.0
  %1117 = vmatprep.subr.mxu0 0.0
  %1118 = vmatpush1.msra.mxu0 0.0
  %1119 = vmatprep.subr.mxu0 0.0
  %1120 = vmatpush1.msra.mxu0 0.0
  %1121 = vmatprep.subr.mxu0 0.0
  %1122 = vmatpush1.msra.mxu0 0.0
  %1123 = vmatprep.subr.mxu0 0.0
  %1124 = vmatpush1.msra.mxu0 0.0
  %1125 = vmatprep.subr.mxu0 0.0
  %1126 = vmatpush1.msra.mxu0 0.0
  %1127 = vmatprep.subr.mxu0 0.0
  %1128 = vmatpush1.msra.mxu0 0.0
  %1129 = vmatprep.subr.mxu0 0.0
  %1130 = vmatpush1.msra.mxu0 0.0
  %1131 = vmatprep.subr.mxu0 0.0
  %1132 = vmatpush1.msra.mxu0 0.0
  %1133 = vmatprep.subr.mxu0 0.0
  %1134 = vmatpush1.msra.mxu0 0.0
  %1135 = vmatprep.subr.mxu0 0.0
  %1136 = vmatpush1.msra.mxu0 0.0
  %1137 = vmatprep.subr.mxu0 0.0
  %1138 = vmatpush1.msra.mxu0 0.0
  %1139 = vmatprep.subr.mxu0 0.0
  %1140 = vmatpush1.msra.mxu0 0.0
  %1141 = vmatprep.subr.mxu0 %v1107
  %1142 = vmatpush1.msra.mxu0 %v1104
  %1143 = vmatprep.subr.mxu0 0.0
  %1144 = vmatpush2.msra.mxu0 0.0
  %1145 = vmatprep.subr.mxu0 0.0
  %1146 = vmatpush2.msra.mxu0 0.0
  %1147 = vmatprep.subr.mxu0 0.0
  %1148 = vmatpush2.msra.mxu0 0.0
  %1149 = vmatprep.subr.mxu0 0.0
  %1150 = vmatpush2.msra.mxu0 0.0
  %1151 = vmatprep.subr.mxu0 0.0
  %1152 = vmatpush2.msra.mxu0 0.0
  %1153 = vmatprep.subr.mxu0 0.0
  %1154 = vmatpush2.msra.mxu0 0.0
  %1155 = vmatprep.subr.mxu0 0.0
  %1156 = vmatpush2.msra.mxu0 0.0
  %1157 = vmatprep.subr.mxu0 0.0
  %1158 = vmatpush2.msra.mxu0 0.0
  %1159 = vmatprep.subr.mxu0 0.0
  %1160 = vmatpush2.msra.mxu0 0.0
  %1161 = vmatprep.subr.mxu0 0.0
  %1162 = vmatpush2.msra.mxu0 0.0
  %1163 = vmatprep.subr.mxu0 0.0
  %1164 = vmatpush2.msra.mxu0 0.0
  %1165 = vmatprep.subr.mxu0 0.0
  %1166 = vmatpush2.msra.mxu0 0.0
  %1167 = vmatprep.subr.mxu0 0.0
  %1168 = vmatpush2.msra.mxu0 0.0
  %1169 = vmatprep.subr.mxu0 0.0
  %1170 = vmatpush2.msra.mxu0 0.0
  %1171 = vmatprep.subr.mxu0 0.0
  %1172 = vmatpush2.msra.mxu0 0.0
  %1173 = vmatprep.subr.mxu0 0.0
  %1174 = vmatpush2.msra.mxu0 0.0
  %1175 = vmatprep.mubr.f32.mxu0 0.0
  %1176 = vmatmul.mubr.f32.gmra.mxu0 %v1101
  %v1177 = vpop.f32.mrf.mxu0
  %v1178 = vadd.f32 %v1026, %v1177
  %v1179 = vpop.f32.mrf.mxu0
  %v1180 = vadd.f32 %v1028, %v1179
  %1181 = vdwg.mxu0
  %1182 = vmatprep.subr.mxu0 0.0
  %1183 = vmatpush1.msra.mxu0 0.0
  %1184 = vmatprep.subr.mxu0 0.0
  %1185 = vmatpush1.msra.mxu0 0.0
  %1186 = vmatprep.subr.mxu0 0.0
  %1187 = vmatpush1.msra.mxu0 0.0
  %1188 = vmatprep.subr.mxu0 0.0
  %1189 = vmatpush1.msra.mxu0 0.0
  %1190 = vmatprep.subr.mxu0 0.0
  %1191 = vmatpush1.msra.mxu0 0.0
  %1192 = vmatprep.subr.mxu0 0.0
  %1193 = vmatpush1.msra.mxu0 0.0
  %1194 = vmatprep.subr.mxu0 0.0
  %1195 = vmatpush1.msra.mxu0 0.0
  %1196 = vmatprep.subr.mxu0 0.0
  %1197 = vmatpush1.msra.mxu0 0.0
  %1198 = vmatprep.subr.mxu0 0.0
  %1199 = vmatpush1.msra.mxu0 0.0
  %1200 = vmatprep.subr.mxu0 0.0
  %1201 = vmatpush1.msra.mxu0 0.0
  %1202 = vmatprep.subr.mxu0 0.0
  %1203 = vmatpush1.msra.mxu0 0.0
  %1204 = vmatprep.subr.mxu0 0.0
  %1205 = vmatpush1.msra.mxu0 0.0
  %1206 = vmatprep.subr.mxu0 0.0
  %1207 = vmatpush1.msra.mxu0 0.0
  %1208 = vmatprep.subr.mxu0 0.0
  %1209 = vmatpush1.msra.mxu0 0.0
  %1210 = vmatprep.subr.mxu0 0.0
  %1211 = vmatpush1.msra.mxu0 0.0
  %1212 = vmatprep.subr.mxu0 0.0
  %1213 = vmatpush1.msra.mxu0 %v1109
  %1214 = vmatprep.subr.mxu0 0.0
  %1215 = vmatpush2.msra.mxu0 0.0
  %1216 = vmatprep.subr.mxu0 0.0
  %1217 = vmatpush2.msra.mxu0 0.0
  %1218 = vmatprep.subr.mxu0 0.0
  %1219 = vmatpush2.msra.mxu0 0.0
  %1220 = vmatprep.subr.mxu0 0.0
  %1221 = vmatpush2.msra.mxu0 0.0
  %1222 = vmatprep.subr.mxu0 0.0
  %1223 = vmatpush2.msra.mxu0 0.0
  %1224 = vmatprep.subr.mxu0 0.0
  %1225 = vmatpush2.msra.mxu0 0.0
  %1226 = vmatprep.subr.mxu0 0.0
  %1227 = vmatpush2.msra.mxu0 0.0
  %1228 = vmatprep.subr.mxu0 0.0
  %1229 = vmatpush2.msra.mxu0 0.0
  %1230 = vmatprep.subr.mxu0 0.0
  %1231 = vmatpush2.msra.mxu0 0.0
  %1232 = vmatprep.subr.mxu0 0.0
  %1233 = vmatpush2.msra.mxu0 0.0
  %1234 = vmatprep.subr.mxu0 0.0
  %1235 = vmatpush2.msra.mxu0 0.0
  %1236 = vmatprep.subr.mxu0 0.0
  %1237 = vmatpush2.msra.mxu0 0.0
  %1238 = vmatprep.subr.mxu0 0.0
  %1239 = vmatpush2.msra.mxu0 0.0
  %1240 = vmatprep.subr.mxu0 0.0
  %1241 = vmatpush2.msra.mxu0 0.0
  %1242 = vmatprep.subr.mxu0 0.0
  %1243 = vmatpush2.msra.mxu0 0.0
  %1244 = vmatprep.subr.mxu0 0.0
  %1245 = vmatpush2.msra.mxu0 0.0
  %1246 = vmatprep.mubr.f32.mxu0 0.0
  %1247 = vmatmul.mubr.f32.gmra.mxu0 %v1101
  %v1248 = vpop.f32.mrf.mxu0
  %v1249 = vadd.f32 %v1097, %v1248
  %v1250 = vpop.f32.mrf.mxu0
  %1251 = vdwg.mxu0
  %s1252 = scalar_lea.vmem %s3, 16
  %v1253 = vld [vmem:[%s1252] sm:$0xff]
  %1257 = vrot.lane.b32.xlu0 %v913, 12
  %v1258 = vpop.permute.xlu0 %1257
  %1259 = vrot.lane.b32.xlu0 %v914, 12
  %v1260 = vpop.permute.xlu0 %1259
  %1261 = vrot.lane.b32.xlu0 %v915, 12
  %v1262 = vpop.permute.xlu0 %1261
  %1263 = vrot.lane.b32.xlu0 %v916, 12
  %v1264 = vpop.permute.xlu0 %1263
  %vm1265 = vcmask 97280
  %v1266 = vsel %vm1265, %v1258, %v1260
  %v1267 = vsel %vm1265, %v1260, %v1262
  %v1268 = vsel %vm1265, %v1262, %v1264
  %v1270 = vsel %vm948, %v1253, 0
  %v1272 = vsel %vm952, %v1266, 0
  %v1274 = vsel %vm952, %v1267, 0
  %v1276 = vsel %vm952, %v1268, 0
  %1278 = vmatprep.subr.mxu0 0.0
  %1279 = vmatpush1.msra.mxu0 0.0
  %1280 = vmatprep.subr.mxu0 0.0
  %1281 = vmatpush1.msra.mxu0 0.0
  %1282 = vmatprep.subr.mxu0 0.0
  %1283 = vmatpush1.msra.mxu0 0.0
  %1284 = vmatprep.subr.mxu0 0.0
  %1285 = vmatpush1.msra.mxu0 0.0
  %1286 = vmatprep.subr.mxu0 0.0
  %1287 = vmatpush1.msra.mxu0 0.0
  %1288 = vmatprep.subr.mxu0 0.0
  %1289 = vmatpush1.msra.mxu0 0.0
  %1290 = vmatprep.subr.mxu0 0.0
  %1291 = vmatpush1.msra.mxu0 0.0
  %1292 = vmatprep.subr.mxu0 0.0
  %1293 = vmatpush1.msra.mxu0 0.0
  %1294 = vmatprep.subr.mxu0 0.0
  %1295 = vmatpush1.msra.mxu0 0.0
  %1296 = vmatprep.subr.mxu0 0.0
  %1297 = vmatpush1.msra.mxu0 0.0
  %1298 = vmatprep.subr.mxu0 0.0
  %1299 = vmatpush1.msra.mxu0 0.0
  %1300 = vmatprep.subr.mxu0 0.0
  %1301 = vmatpush1.msra.mxu0 0.0
  %1302 = vmatprep.subr.mxu0 0.0
  %1303 = vmatpush1.msra.mxu0 0.0
  %1304 = vmatprep.subr.mxu0 0.0
  %1305 = vmatpush1.msra.mxu0 0.0
  %1306 = vmatprep.subr.mxu0 0.0
  %1307 = vmatpush1.msra.mxu0 0.0
  %1308 = vmatprep.subr.mxu0 %v1274
  %1309 = vmatpush1.msra.mxu0 %v1272
  %1310 = vmatprep.subr.mxu0 0.0
  %1311 = vmatpush2.msra.mxu0 0.0
  %1312 = vmatprep.subr.mxu0 0.0
  %1313 = vmatpush2.msra.mxu0 0.0
  %1314 = vmatprep.subr.mxu0 0.0
  %1315 = vmatpush2.msra.mxu0 0.0
  %1316 = vmatprep.subr.mxu0 0.0
  %1317 = vmatpush2.msra.mxu0 0.0
  %1318 = vmatprep.subr.mxu0 0.0
  %1319 = vmatpush2.msra.mxu0 0.0
  %1320 = vmatprep.subr.mxu0 0.0
  %1321 = vmatpush2.msra.mxu0 0.0
  %1322 = vmatprep.subr.mxu0 0.0
  %1323 = vmatpush2.msra.mxu0 0.0
  %1324 = vmatprep.subr.mxu0 0.0
  %1325 = vmatpush2.msra.mxu0 0.0
  %1326 = vmatprep.subr.mxu0 0.0
  %1327 = vmatpush2.msra.mxu0 0.0
  %1328 = vmatprep.subr.mxu0 0.0
  %1329 = vmatpush2.msra.mxu0 0.0
  %1330 = vmatprep.subr.mxu0 0.0
  %1331 = vmatpush2.msra.mxu0 0.0
  %1332 = vmatprep.subr.mxu0 0.0
  %1333 = vmatpush2.msra.mxu0 0.0
  %1334 = vmatprep.subr.mxu0 0.0
  %1335 = vmatpush2.msra.mxu0 0.0
  %1336 = vmatprep.subr.mxu0 0.0
  %1337 = vmatpush2.msra.mxu0 0.0
  %1338 = vmatprep.subr.mxu0 0.0
  %1339 = vmatpush2.msra.mxu0 0.0
  %1340 = vmatprep.subr.mxu0 0.0
  %1341 = vmatpush2.msra.mxu0 0.0
  %1342 = vmatprep.mubr.f32.mxu0 0.0
  %1343 = vmatmul.mubr.f32.gmra.mxu0 %v1270
  %v1344 = vpop.f32.mrf.mxu0
  %v1345 = vadd.f32 0.0, %v1344
  %v1346 = vpop.f32.mrf.mxu0
  %v1347 = vadd.f32 0.0, %v1346
  %1348 = vdwg.mxu0
  %1349 = vmatprep.subr.mxu0 0.0
  %1350 = vmatpush1.msra.mxu0 0.0
  %1351 = vmatprep.subr.mxu0 0.0
  %1352 = vmatpush1.msra.mxu0 0.0
  %1353 = vmatprep.subr.mxu0 0.0
  %1354 = vmatpush1.msra.mxu0 0.0
  %1355 = vmatprep.subr.mxu0 0.0
  %1356 = vmatpush1.msra.mxu0 0.0
  %1357 = vmatprep.subr.mxu0 0.0
  %1358 = vmatpush1.msra.mxu0 0.0
  %1359 = vmatprep.subr.mxu0 0.0
  %1360 = vmatpush1.msra.mxu0 0.0
  %1361 = vmatprep.subr.mxu0 0.0
  %1362 = vmatpush1.msra.mxu0 0.0
  %1363 = vmatprep.subr.mxu0 0.0
  %1364 = vmatpush1.msra.mxu0 0.0
  %1365 = vmatprep.subr.mxu0 0.0
  %1366 = vmatpush1.msra.mxu0 0.0
  %1367 = vmatprep.subr.mxu0 0.0
  %1368 = vmatpush1.msra.mxu0 0.0
  %1369 = vmatprep.subr.mxu0 0.0
  %1370 = vmatpush1.msra.mxu0 0.0
  %1371 = vmatprep.subr.mxu0 0.0
  %1372 = vmatpush1.msra.mxu0 0.0
  %1373 = vmatprep.subr.mxu0 0.0
  %1374 = vmatpush1.msra.mxu0 0.0
  %1375 = vmatprep.subr.mxu0 0.0
  %1376 = vmatpush1.msra.mxu0 0.0
  %1377 = vmatprep.subr.mxu0 0.0
  %1378 = vmatpush1.msra.mxu0 0.0
  %1379 = vmatprep.subr.mxu0 0.0
  %1380 = vmatpush1.msra.mxu0 %v1276
  %1381 = vmatprep.subr.mxu0 0.0
  %1382 = vmatpush2.msra.mxu0 0.0
  %1383 = vmatprep.subr.mxu0 0.0
  %1384 = vmatpush2.msra.mxu0 0.0
  %1385 = vmatprep.subr.mxu0 0.0
  %1386 = vmatpush2.msra.mxu0 0.0
  %1387 = vmatprep.subr.mxu0 0.0
  %1388 = vmatpush2.msra.mxu0 0.0
  %1389 = vmatprep.subr.mxu0 0.0
  %1390 = vmatpush2.msra.mxu0 0.0
  %1391 = vmatprep.subr.mxu0 0.0
  %1392 = vmatpush2.msra.mxu0 0.0
  %1393 = vmatprep.subr.mxu0 0.0
  %1394 = vmatpush2.msra.mxu0 0.0
  %1395 = vmatprep.subr.mxu0 0.0
  %1396 = vmatpush2.msra.mxu0 0.0
  %1397 = vmatprep.subr.mxu0 0.0
  %1398 = vmatpush2.msra.mxu0 0.0
  %1399 = vmatprep.subr.mxu0 0.0
  %1400 = vmatpush2.msra.mxu0 0.0
  %1401 = vmatprep.subr.mxu0 0.0
  %1402 = vmatpush2.msra.mxu0 0.0
  %1403 = vmatprep.subr.mxu0 0.0
  %1404 = vmatpush2.msra.mxu0 0.0
  %1405 = vmatprep.subr.mxu0 0.0
  %1406 = vmatpush2.msra.mxu0 0.0
  %1407 = vmatprep.subr.mxu0 0.0
  %1408 = vmatpush2.msra.mxu0 0.0
  %1409 = vmatprep.subr.mxu0 0.0
  %1410 = vmatpush2.msra.mxu0 0.0
  %1411 = vmatprep.subr.mxu0 0.0
  %1412 = vmatpush2.msra.mxu0 0.0
  %1413 = vmatprep.mubr.f32.mxu0 0.0
  %1414 = vmatmul.mubr.f32.gmra.mxu0 %v1270
  %v1415 = vpop.f32.mrf.mxu0
  %v1416 = vadd.f32 0.0, %v1415
  %v1417 = vpop.f32.mrf.mxu0
  %1418 = vdwg.mxu0
  %v1419 = vadd.f32 %v1178, %v1345
  %v1420 = vadd.f32 %v1180, %v1347
  %v1421 = vadd.f32 %v1249, %v1416
  %s1422 = scalar_lea.vmem %s3, 24
  %v1423 = vld [vmem:[%s1422] sm:$0xff]
  %1427 = vrot.lane.b32.xlu0 %v916, 18
  %v1428 = vpop.permute.xlu0 %1427
  %1429 = vrot.lane.b32.xlu0 %v917, 18
  %v1430 = vpop.permute.xlu0 %1429
  %1431 = vrot.lane.b32.xlu0 %v918, 18
  %v1432 = vpop.permute.xlu0 %1431
  %1433 = vrot.lane.b32.xlu0 %v919, 18
  %v1434 = vpop.permute.xlu0 %1433
  %vm1435 = vcmask 146432
  %v1436 = vsel %vm1435, %v1428, %v1430
  %v1437 = vsel %vm1435, %v1430, %v1432
  %v1438 = vsel %vm1435, %v1432, %v1434
  %v1440 = vsel %vm948, %v1423, 0
  %v1442 = vsel %vm952, %v1436, 0
  %v1444 = vsel %vm952, %v1437, 0
  %v1446 = vsel %vm952, %v1438, 0
  %1448 = vmatprep.subr.mxu0 0.0
  %1449 = vmatpush1.msra.mxu0 0.0
  %1450 = vmatprep.subr.mxu0 0.0
  %1451 = vmatpush1.msra.mxu0 0.0
  %1452 = vmatprep.subr.mxu0 0.0
  %1453 = vmatpush1.msra.mxu0 0.0
  %1454 = vmatprep.subr.mxu0 0.0
  %1455 = vmatpush1.msra.mxu0 0.0
  %1456 = vmatprep.subr.mxu0 0.0
  %1457 = vmatpush1.msra.mxu0 0.0
  %1458 = vmatprep.subr.mxu0 0.0
  %1459 = vmatpush1.msra.mxu0 0.0
  %1460 = vmatprep.subr.mxu0 0.0
  %1461 = vmatpush1.msra.mxu0 0.0
  %1462 = vmatprep.subr.mxu0 0.0
  %1463 = vmatpush1.msra.mxu0 0.0
  %1464 = vmatprep.subr.mxu0 0.0
  %1465 = vmatpush1.msra.mxu0 0.0
  %1466 = vmatprep.subr.mxu0 0.0
  %1467 = vmatpush1.msra.mxu0 0.0
  %1468 = vmatprep.subr.mxu0 0.0
  %1469 = vmatpush1.msra.mxu0 0.0
  %1470 = vmatprep.subr.mxu0 0.0
  %1471 = vmatpush1.msra.mxu0 0.0
  %1472 = vmatprep.subr.mxu0 0.0
  %1473 = vmatpush1.msra.mxu0 0.0
  %1474 = vmatprep.subr.mxu0 0.0
  %1475 = vmatpush1.msra.mxu0 0.0
  %1476 = vmatprep.subr.mxu0 0.0
  %1477 = vmatpush1.msra.mxu0 0.0
  %1478 = vmatprep.subr.mxu0 %v1444
  %1479 = vmatpush1.msra.mxu0 %v1442
  %1480 = vmatprep.subr.mxu0 0.0
  %1481 = vmatpush2.msra.mxu0 0.0
  %1482 = vmatprep.subr.mxu0 0.0
  %1483 = vmatpush2.msra.mxu0 0.0
  %1484 = vmatprep.subr.mxu0 0.0
  %1485 = vmatpush2.msra.mxu0 0.0
  %1486 = vmatprep.subr.mxu0 0.0
  %1487 = vmatpush2.msra.mxu0 0.0
  %1488 = vmatprep.subr.mxu0 0.0
  %1489 = vmatpush2.msra.mxu0 0.0
  %1490 = vmatprep.subr.mxu0 0.0
  %1491 = vmatpush2.msra.mxu0 0.0
  %1492 = vmatprep.subr.mxu0 0.0
  %1493 = vmatpush2.msra.mxu0 0.0
  %1494 = vmatprep.subr.mxu0 0.0
  %1495 = vmatpush2.msra.mxu0 0.0
  %1496 = vmatprep.subr.mxu0 0.0
  %1497 = vmatpush2.msra.mxu0 0.0
  %1498 = vmatprep.subr.mxu0 0.0
  %1499 = vmatpush2.msra.mxu0 0.0
  %1500 = vmatprep.subr.mxu0 0.0
  %1501 = vmatpush2.msra.mxu0 0.0
  %1502 = vmatprep.subr.mxu0 0.0
  %1503 = vmatpush2.msra.mxu0 0.0
  %1504 = vmatprep.subr.mxu0 0.0
  %1505 = vmatpush2.msra.mxu0 0.0
  %1506 = vmatprep.subr.mxu0 0.0
  %1507 = vmatpush2.msra.mxu0 0.0
  %1508 = vmatprep.subr.mxu0 0.0
  %1509 = vmatpush2.msra.mxu0 0.0
  %1510 = vmatprep.subr.mxu0 0.0
  %1511 = vmatpush2.msra.mxu0 0.0
  %1512 = vmatprep.mubr.f32.mxu0 0.0
  %1513 = vmatmul.mubr.f32.gmra.mxu0 %v1440
  %v1514 = vpop.f32.mrf.mxu0
  %v1515 = vadd.f32 0.0, %v1514
  %v1516 = vpop.f32.mrf.mxu0
  %v1517 = vadd.f32 0.0, %v1516
  %1518 = vdwg.mxu0
  %1519 = vmatprep.subr.mxu0 0.0
  %1520 = vmatpush1.msra.mxu0 0.0
  %1521 = vmatprep.subr.mxu0 0.0
  %1522 = vmatpush1.msra.mxu0 0.0
  %1523 = vmatprep.subr.mxu0 0.0
  %1524 = vmatpush1.msra.mxu0 0.0
  %1525 = vmatprep.subr.mxu0 0.0
  %1526 = vmatpush1.msra.mxu0 0.0
  %1527 = vmatprep.subr.mxu0 0.0
  %1528 = vmatpush1.msra.mxu0 0.0
  %1529 = vmatprep.subr.mxu0 0.0
  %1530 = vmatpush1.msra.mxu0 0.0
  %1531 = vmatprep.subr.mxu0 0.0
  %1532 = vmatpush1.msra.mxu0 0.0
  %1533 = vmatprep.subr.mxu0 0.0
  %1534 = vmatpush1.msra.mxu0 0.0
  %1535 = vmatprep.subr.mxu0 0.0
  %1536 = vmatpush1.msra.mxu0 0.0
  %1537 = vmatprep.subr.mxu0 0.0
  %1538 = vmatpush1.msra.mxu0 0.0
  %1539 = vmatprep.subr.mxu0 0.0
  %1540 = vmatpush1.msra.mxu0 0.0
  %1541 = vmatprep.subr.mxu0 0.0
  %1542 = vmatpush1.msra.mxu0 0.0
  %1543 = vmatprep.subr.mxu0 0.0
  %1544 = vmatpush1.msra.mxu0 0.0
  %1545 = vmatprep.subr.mxu0 0.0
  %1546 = vmatpush1.msra.mxu0 0.0
  %1547 = vmatprep.subr.mxu0 0.0
  %1548 = vmatpush1.msra.mxu0 0.0
  %1549 = vmatprep.subr.mxu0 0.0
  %1550 = vmatpush1.msra.mxu0 %v1446
  %1551 = vmatprep.subr.mxu0 0.0
  %1552 = vmatpush2.msra.mxu0 0.0
  %1553 = vmatprep.subr.mxu0 0.0
  %1554 = vmatpush2.msra.mxu0 0.0
  %1555 = vmatprep.subr.mxu0 0.0
  %1556 = vmatpush2.msra.mxu0 0.0
  %1557 = vmatprep.subr.mxu0 0.0
  %1558 = vmatpush2.msra.mxu0 0.0
  %1559 = vmatprep.subr.mxu0 0.0
  %1560 = vmatpush2.msra.mxu0 0.0
  %1561 = vmatprep.subr.mxu0 0.0
  %1562 = vmatpush2.msra.mxu0 0.0
  %1563 = vmatprep.subr.mxu0 0.0
  %1564 = vmatpush2.msra.mxu0 0.0
  %1565 = vmatprep.subr.mxu0 0.0
  %1566 = vmatpush2.msra.mxu0 0.0
  %1567 = vmatprep.subr.mxu0 0.0
  %1568 = vmatpush2.msra.mxu0 0.0
  %1569 = vmatprep.subr.mxu0 0.0
  %1570 = vmatpush2.msra.mxu0 0.0
  %1571 = vmatprep.subr.mxu0 0.0
  %1572 = vmatpush2.msra.mxu0 0.0
  %1573 = vmatprep.subr.mxu0 0.0
  %1574 = vmatpush2.msra.mxu0 0.0
  %1575 = vmatprep.subr.mxu0 0.0
  %1576 = vmatpush2.msra.mxu0 0.0
  %1577 = vmatprep.subr.mxu0 0.0
  %1578 = vmatpush2.msra.mxu0 0.0
  %1579 = vmatprep.subr.mxu0 0.0
  %1580 = vmatpush2.msra.mxu0 0.0
  %1581 = vmatprep.subr.mxu0 0.0
  %1582 = vmatpush2.msra.mxu0 0.0
  %1583 = vmatprep.mubr.f32.mxu0 0.0
  %1584 = vmatmul.mubr.f32.gmra.mxu0 %v1440
  %v1585 = vpop.f32.mrf.mxu0
  %v1586 = vadd.f32 0.0, %v1585
  %v1587 = vpop.f32.mrf.mxu0
  %1588 = vdwg.mxu0
  %v1589 = vadd.f32 %v1419, %v1515
  %v1590 = vadd.f32 %v1420, %v1517
  %v1591 = vadd.f32 %v1421, %v1586
  %s1592 = scalar_lea.vmem %s3, 32
  %v1593 = vld [vmem:[%s1592] sm:$0xff]
  %1597 = vrot.lane.b32.xlu0 %v919, 24
  %v1598 = vpop.permute.xlu0 %1597
  %1599 = vrot.lane.b32.xlu0 %v920, 24
  %v1600 = vpop.permute.xlu0 %1599
  %1601 = vrot.lane.b32.xlu0 %v921, 24
  %v1602 = vpop.permute.xlu0 %1601
  %1603 = vrot.lane.b32.xlu0 %v922, 24
  %v1604 = vpop.permute.xlu0 %1603
  %vm1605 = vcmask 195584
  %v1606 = vsel %vm1605, %v1598, %v1600
  %v1607 = vsel %vm1605, %v1600, %v1602
  %v1608 = vsel %vm1605, %v1602, %v1604
  %v1610 = vsel %vm948, %v1593, 0
  %v1612 = vsel %vm952, %v1606, 0
  %v1614 = vsel %vm952, %v1607, 0
  %v1616 = vsel %vm952, %v1608, 0
  %1618 = vmatprep.subr.mxu0 0.0
  %1619 = vmatpush1.msra.mxu0 0.0
  %1620 = vmatprep.subr.mxu0 0.0
  %1621 = vmatpush1.msra.mxu0 0.0
  %1622 = vmatprep.subr.mxu0 0.0
  %1623 = vmatpush1.msra.mxu0 0.0
  %1624 = vmatprep.subr.mxu0 0.0
  %1625 = vmatpush1.msra.mxu0 0.0
  %1626 = vmatprep.subr.mxu0 0.0
  %1627 = vmatpush1.msra.mxu0 0.0
  %1628 = vmatprep.subr.mxu0 0.0
  %1629 = vmatpush1.msra.mxu0 0.0
  %1630 = vmatprep.subr.mxu0 0.0
  %1631 = vmatpush1.msra.mxu0 0.0
  %1632 = vmatprep.subr.mxu0 0.0
  %1633 = vmatpush1.msra.mxu0 0.0
  %1634 = vmatprep.subr.mxu0 0.0
  %1635 = vmatpush1.msra.mxu0 0.0
  %1636 = vmatprep.subr.mxu0 0.0
  %1637 = vmatpush1.msra.mxu0 0.0
  %1638 = vmatprep.subr.mxu0 0.0
  %1639 = vmatpush1.msra.mxu0 0.0
  %1640 = vmatprep.subr.mxu0 0.0
  %1641 = vmatpush1.msra.mxu0 0.0
  %1642 = vmatprep.subr.mxu0 0.0
  %1643 = vmatpush1.msra.mxu0 0.0
  %1644 = vmatprep.subr.mxu0 0.0
  %1645 = vmatpush1.msra.mxu0 0.0
  %1646 = vmatprep.subr.mxu0 0.0
  %1647 = vmatpush1.msra.mxu0 0.0
  %1648 = vmatprep.subr.mxu0 %v1614
  %1649 = vmatpush1.msra.mxu0 %v1612
  %1650 = vmatprep.subr.mxu0 0.0
  %1651 = vmatpush2.msra.mxu0 0.0
  %1652 = vmatprep.subr.mxu0 0.0
  %1653 = vmatpush2.msra.mxu0 0.0
  %1654 = vmatprep.subr.mxu0 0.0
  %1655 = vmatpush2.msra.mxu0 0.0
  %1656 = vmatprep.subr.mxu0 0.0
  %1657 = vmatpush2.msra.mxu0 0.0
  %1658 = vmatprep.subr.mxu0 0.0
  %1659 = vmatpush2.msra.mxu0 0.0
  %1660 = vmatprep.subr.mxu0 0.0
  %1661 = vmatpush2.msra.mxu0 0.0
  %1662 = vmatprep.subr.mxu0 0.0
  %1663 = vmatpush2.msra.mxu0 0.0
  %1664 = vmatprep.subr.mxu0 0.0
  %1665 = vmatpush2.msra.mxu0 0.0
  %1666 = vmatprep.subr.mxu0 0.0
  %1667 = vmatpush2.msra.mxu0 0.0
  %1668 = vmatprep.subr.mxu0 0.0
  %1669 = vmatpush2.msra.mxu0 0.0
  %1670 = vmatprep.subr.mxu0 0.0
  %1671 = vmatpush2.msra.mxu0 0.0
  %1672 = vmatprep.subr.mxu0 0.0
  %1673 = vmatpush2.msra.mxu0 0.0
  %1674 = vmatprep.subr.mxu0 0.0
  %1675 = vmatpush2.msra.mxu0 0.0
  %1676 = vmatprep.subr.mxu0 0.0
  %1677 = vmatpush2.msra.mxu0 0.0
  %1678 = vmatprep.subr.mxu0 0.0
  %1679 = vmatpush2.msra.mxu0 0.0
  %1680 = vmatprep.subr.mxu0 0.0
  %1681 = vmatpush2.msra.mxu0 0.0
  %1682 = vmatprep.mubr.f32.mxu0 0.0
  %1683 = vmatmul.mubr.f32.gmra.mxu0 %v1610
  %v1684 = vpop.f32.mrf.mxu0
  %v1685 = vadd.f32 0.0, %v1684
  %v1686 = vpop.f32.mrf.mxu0
  %v1687 = vadd.f32 0.0, %v1686
  %1688 = vdwg.mxu0
  %1689 = vmatprep.subr.mxu0 0.0
  %1690 = vmatpush1.msra.mxu0 0.0
  %1691 = vmatprep.subr.mxu0 0.0
  %1692 = vmatpush1.msra.mxu0 0.0
  %1693 = vmatprep.subr.mxu0 0.0
  %1694 = vmatpush1.msra.mxu0 0.0
  %1695 = vmatprep.subr.mxu0 0.0
  %1696 = vmatpush1.msra.mxu0 0.0
  %1697 = vmatprep.subr.mxu0 0.0
  %1698 = vmatpush1.msra.mxu0 0.0
  %1699 = vmatprep.subr.mxu0 0.0
  %1700 = vmatpush1.msra.mxu0 0.0
  %1701 = vmatprep.subr.mxu0 0.0
  %1702 = vmatpush1.msra.mxu0 0.0
  %1703 = vmatprep.subr.mxu0 0.0
  %1704 = vmatpush1.msra.mxu0 0.0
  %1705 = vmatprep.subr.mxu0 0.0
  %1706 = vmatpush1.msra.mxu0 0.0
  %1707 = vmatprep.subr.mxu0 0.0
  %1708 = vmatpush1.msra.mxu0 0.0
  %1709 = vmatprep.subr.mxu0 0.0
  %1710 = vmatpush1.msra.mxu0 0.0
  %1711 = vmatprep.subr.mxu0 0.0
  %1712 = vmatpush1.msra.mxu0 0.0
  %1713 = vmatprep.subr.mxu0 0.0
  %1714 = vmatpush1.msra.mxu0 0.0
  %1715 = vmatprep.subr.mxu0 0.0
  %1716 = vmatpush1.msra.mxu0 0.0
  %1717 = vmatprep.subr.mxu0 0.0
  %1718 = vmatpush1.msra.mxu0 0.0
  %1719 = vmatprep.subr.mxu0 0.0
  %1720 = vmatpush1.msra.mxu0 %v1616
  %1721 = vmatprep.subr.mxu0 0.0
  %1722 = vmatpush2.msra.mxu0 0.0
  %1723 = vmatprep.subr.mxu0 0.0
  %1724 = vmatpush2.msra.mxu0 0.0
  %1725 = vmatprep.subr.mxu0 0.0
  %1726 = vmatpush2.msra.mxu0 0.0
  %1727 = vmatprep.subr.mxu0 0.0
  %1728 = vmatpush2.msra.mxu0 0.0
  %1729 = vmatprep.subr.mxu0 0.0
  %1730 = vmatpush2.msra.mxu0 0.0
  %1731 = vmatprep.subr.mxu0 0.0
  %1732 = vmatpush2.msra.mxu0 0.0
  %1733 = vmatprep.subr.mxu0 0.0
  %1734 = vmatpush2.msra.mxu0 0.0
  %1735 = vmatprep.subr.mxu0 0.0
  %1736 = vmatpush2.msra.mxu0 0.0
  %1737 = vmatprep.subr.mxu0 0.0
  %1738 = vmatpush2.msra.mxu0 0.0
  %1739 = vmatprep.subr.mxu0 0.0
  %1740 = vmatpush2.msra.mxu0 0.0
  %1741 = vmatprep.subr.mxu0 0.0
  %1742 = vmatpush2.msra.mxu0 0.0
  %1743 = vmatprep.subr.mxu0 0.0
  %1744 = vmatpush2.msra.mxu0 0.0
  %1745 = vmatprep.subr.mxu0 0.0
  %1746 = vmatpush2.msra.mxu0 0.0
  %1747 = vmatprep.subr.mxu0 0.0
  %1748 = vmatpush2.msra.mxu0 0.0
  %1749 = vmatprep.subr.mxu0 0.0
  %1750 = vmatpush2.msra.mxu0 0.0
  %1751 = vmatprep.subr.mxu0 0.0
  %1752 = vmatpush2.msra.mxu0 0.0
  %1753 = vmatprep.mubr.f32.mxu0 0.0
  %1754 = vmatmul.mubr.f32.gmra.mxu0 %v1610
  %v1755 = vpop.f32.mrf.mxu0
  %v1756 = vadd.f32 0.0, %v1755
  %v1757 = vpop.f32.mrf.mxu0
  %1758 = vdwg.mxu0
  %v1759 = vadd.f32 %v1589, %v1685
  %v1760 = vadd.f32 %v1590, %v1687
  %v1761 = vadd.f32 %v1591, %v1756
  %s1762 = scalar_lea.vmem %s3, 40
  %v1763 = vld [vmem:[%s1762] sm:$0xff]
  %1767 = vrot.lane.b32.xlu0 %v922, 30
  %v1768 = vpop.permute.xlu0 %1767
  %1769 = vrot.lane.b32.xlu0 %v923, 30
  %v1770 = vpop.permute.xlu0 %1769
  %1771 = vrot.lane.b32.xlu0 %v924, 30
  %v1772 = vpop.permute.xlu0 %1771
  %1773 = vrot.lane.b32.xlu0 %v925, 30
  %v1774 = vpop.permute.xlu0 %1773
  %vm1775 = vcmask 244736
  %v1776 = vsel %vm1775, %v1768, %v1770
  %v1777 = vsel %vm1775, %v1770, %v1772
  %v1778 = vsel %vm1775, %v1772, %v1774
  %v1780 = vsel %vm948, %v1763, 0
  %v1782 = vsel %vm952, %v1776, 0
  %v1784 = vsel %vm952, %v1777, 0
  %v1786 = vsel %vm952, %v1778, 0
  %1788 = vmatprep.subr.mxu0 0.0
  %1789 = vmatpush1.msra.mxu0 0.0
  %1790 = vmatprep.subr.mxu0 0.0
  %1791 = vmatpush1.msra.mxu0 0.0
  %1792 = vmatprep.subr.mxu0 0.0
  %1793 = vmatpush1.msra.mxu0 0.0
  %1794 = vmatprep.subr.mxu0 0.0
  %1795 = vmatpush1.msra.mxu0 0.0
  %1796 = vmatprep.subr.mxu0 0.0
  %1797 = vmatpush1.msra.mxu0 0.0
  %1798 = vmatprep.subr.mxu0 0.0
  %1799 = vmatpush1.msra.mxu0 0.0
  %1800 = vmatprep.subr.mxu0 0.0
  %1801 = vmatpush1.msra.mxu0 0.0
  %1802 = vmatprep.subr.mxu0 0.0
  %1803 = vmatpush1.msra.mxu0 0.0
  %1804 = vmatprep.subr.mxu0 0.0
  %1805 = vmatpush1.msra.mxu0 0.0
  %1806 = vmatprep.subr.mxu0 0.0
  %1807 = vmatpush1.msra.mxu0 0.0
  %1808 = vmatprep.subr.mxu0 0.0
  %1809 = vmatpush1.msra.mxu0 0.0
  %1810 = vmatprep.subr.mxu0 0.0
  %1811 = vmatpush1.msra.mxu0 0.0
  %1812 = vmatprep.subr.mxu0 0.0
  %1813 = vmatpush1.msra.mxu0 0.0
  %1814 = vmatprep.subr.mxu0 0.0
  %1815 = vmatpush1.msra.mxu0 0.0
  %1816 = vmatprep.subr.mxu0 0.0
  %1817 = vmatpush1.msra.mxu0 0.0
  %1818 = vmatprep.subr.mxu0 %v1784
  %1819 = vmatpush1.msra.mxu0 %v1782
  %1820 = vmatprep.subr.mxu0 0.0
  %1821 = vmatpush2.msra.mxu0 0.0
  %1822 = vmatprep.subr.mxu0 0.0
  %1823 = vmatpush2.msra.mxu0 0.0
  %1824 = vmatprep.subr.mxu0 0.0
  %1825 = vmatpush2.msra.mxu0 0.0
  %1826 = vmatprep.subr.mxu0 0.0
  %1827 = vmatpush2.msra.mxu0 0.0
  %1828 = vmatprep.subr.mxu0 0.0
  %1829 = vmatpush2.msra.mxu0 0.0
  %1830 = vmatprep.subr.mxu0 0.0
  %1831 = vmatpush2.msra.mxu0 0.0
  %1832 = vmatprep.subr.mxu0 0.0
  %1833 = vmatpush2.msra.mxu0 0.0
  %1834 = vmatprep.subr.mxu0 0.0
  %1835 = vmatpush2.msra.mxu0 0.0
  %1836 = vmatprep.subr.mxu0 0.0
  %1837 = vmatpush2.msra.mxu0 0.0
  %1838 = vmatprep.subr.mxu0 0.0
  %1839 = vmatpush2.msra.mxu0 0.0
  %1840 = vmatprep.subr.mxu0 0.0
  %1841 = vmatpush2.msra.mxu0 0.0
  %1842 = vmatprep.subr.mxu0 0.0
  %1843 = vmatpush2.msra.mxu0 0.0
  %1844 = vmatprep.subr.mxu0 0.0
  %1845 = vmatpush2.msra.mxu0 0.0
  %1846 = vmatprep.subr.mxu0 0.0
  %1847 = vmatpush2.msra.mxu0 0.0
  %1848 = vmatprep.subr.mxu0 0.0
  %1849 = vmatpush2.msra.mxu0 0.0
  %1850 = vmatprep.subr.mxu0 0.0
  %1851 = vmatpush2.msra.mxu0 0.0
  %1852 = vmatprep.mubr.f32.mxu0 0.0
  %1853 = vmatmul.mubr.f32.gmra.mxu0 %v1780
  %v1854 = vpop.f32.mrf.mxu0
  %v1855 = vadd.f32 0.0, %v1854
  %v1856 = vpop.f32.mrf.mxu0
  %v1857 = vadd.f32 0.0, %v1856
  %1858 = vdwg.mxu0
  %1859 = vmatprep.subr.mxu0 0.0
  %1860 = vmatpush1.msra.mxu0 0.0
  %1861 = vmatprep.subr.mxu0 0.0
  %1862 = vmatpush1.msra.mxu0 0.0
  %1863 = vmatprep.subr.mxu0 0.0
  %1864 = vmatpush1.msra.mxu0 0.0
  %1865 = vmatprep.subr.mxu0 0.0
  %1866 = vmatpush1.msra.mxu0 0.0
  %1867 = vmatprep.subr.mxu0 0.0
  %1868 = vmatpush1.msra.mxu0 0.0
  %1869 = vmatprep.subr.mxu0 0.0
  %1870 = vmatpush1.msra.mxu0 0.0
  %1871 = vmatprep.subr.mxu0 0.0
  %1872 = vmatpush1.msra.mxu0 0.0
  %1873 = vmatprep.subr.mxu0 0.0
  %1874 = vmatpush1.msra.mxu0 0.0
  %1875 = vmatprep.subr.mxu0 0.0
  %1876 = vmatpush1.msra.mxu0 0.0
  %1877 = vmatprep.subr.mxu0 0.0
  %1878 = vmatpush1.msra.mxu0 0.0
  %1879 = vmatprep.subr.mxu0 0.0
  %1880 = vmatpush1.msra.mxu0 0.0
  %1881 = vmatprep.subr.mxu0 0.0
  %1882 = vmatpush1.msra.mxu0 0.0
  %1883 = vmatprep.subr.mxu0 0.0
  %1884 = vmatpush1.msra.mxu0 0.0
  %1885 = vmatprep.subr.mxu0 0.0
  %1886 = vmatpush1.msra.mxu0 0.0
  %1887 = vmatprep.subr.mxu0 0.0
  %1888 = vmatpush1.msra.mxu0 0.0
  %1889 = vmatprep.subr.mxu0 0.0
  %1890 = vmatpush1.msra.mxu0 %v1786
  %1891 = vmatprep.subr.mxu0 0.0
  %1892 = vmatpush2.msra.mxu0 0.0
  %1893 = vmatprep.subr.mxu0 0.0
  %1894 = vmatpush2.msra.mxu0 0.0
  %1895 = vmatprep.subr.mxu0 0.0
  %1896 = vmatpush2.msra.mxu0 0.0
  %1897 = vmatprep.subr.mxu0 0.0
  %1898 = vmatpush2.msra.mxu0 0.0
  %1899 = vmatprep.subr.mxu0 0.0
  %1900 = vmatpush2.msra.mxu0 0.0
  %1901 = vmatprep.subr.mxu0 0.0
  %1902 = vmatpush2.msra.mxu0 0.0
  %1903 = vmatprep.subr.mxu0 0.0
  %1904 = vmatpush2.msra.mxu0 0.0
  %1905 = vmatprep.subr.mxu0 0.0
  %1906 = vmatpush2.msra.mxu0 0.0
  %1907 = vmatprep.subr.mxu0 0.0
  %1908 = vmatpush2.msra.mxu0 0.0
  %1909 = vmatprep.subr.mxu0 0.0
  %1910 = vmatpush2.msra.mxu0 0.0
  %1911 = vmatprep.subr.mxu0 0.0
  %1912 = vmatpush2.msra.mxu0 0.0
  %1913 = vmatprep.subr.mxu0 0.0
  %1914 = vmatpush2.msra.mxu0 0.0
  %1915 = vmatprep.subr.mxu0 0.0
  %1916 = vmatpush2.msra.mxu0 0.0
  %1917 = vmatprep.subr.mxu0 0.0
  %1918 = vmatpush2.msra.mxu0 0.0
  %1919 = vmatprep.subr.mxu0 0.0
  %1920 = vmatpush2.msra.mxu0 0.0
  %1921 = vmatprep.subr.mxu0 0.0
  %1922 = vmatpush2.msra.mxu0 0.0
  %1923 = vmatprep.mubr.f32.mxu0 0.0
  %1924 = vmatmul.mubr.f32.gmra.mxu0 %v1780
  %v1925 = vpop.f32.mrf.mxu0
  %v1926 = vadd.f32 0.0, %v1925
  %v1927 = vpop.f32.mrf.mxu0
  %1928 = vdwg.mxu0
  %v1929 = vadd.f32 %v1759, %v1855
  %v1930 = vadd.f32 %v1760, %v1857
  %v1931 = vadd.f32 %v1761, %v1926
  %s1932 = scalar_lea.vmem %s3, 48
  %v1933 = vld [vmem:[%s1932] sm:$0xff]
  %1937 = vrot.lane.b32.xlu0 %v925, 36
  %v1938 = vpop.permute.xlu0 %1937
  %1939 = vrot.lane.b32.xlu0 %v926, 36
  %v1940 = vpop.permute.xlu0 %1939
  %1941 = vrot.lane.b32.xlu0 %v927, 36
  %v1942 = vpop.permute.xlu0 %1941
  %1943 = vrot.lane.b32.xlu0 %v928, 36
  %v1944 = vpop.permute.xlu0 %1943
  %vm1945 = vcmask 293888
  %v1946 = vsel %vm1945, %v1938, %v1940
  %v1947 = vsel %vm1945, %v1940, %v1942
  %v1948 = vsel %vm1945, %v1942, %v1944
  %v1950 = vsel %vm948, %v1933, 0
  %v1952 = vsel %vm952, %v1946, 0
  %v1954 = vsel %vm952, %v1947, 0
  %v1956 = vsel %vm952, %v1948, 0
  %1958 = vmatprep.subr.mxu0 0.0
  %1959 = vmatpush1.msra.mxu0 0.0
  %1960 = vmatprep.subr.mxu0 0.0
  %1961 = vmatpush1.msra.mxu0 0.0
  %1962 = vmatprep.subr.mxu0 0.0
  %1963 = vmatpush1.msra.mxu0 0.0
  %1964 = vmatprep.subr.mxu0 0.0
  %1965 = vmatpush1.msra.mxu0 0.0
  %1966 = vmatprep.subr.mxu0 0.0
  %1967 = vmatpush1.msra.mxu0 0.0
  %1968 = vmatprep.subr.mxu0 0.0
  %1969 = vmatpush1.msra.mxu0 0.0
  %1970 = vmatprep.subr.mxu0 0.0
  %1971 = vmatpush1.msra.mxu0 0.0
  %1972 = vmatprep.subr.mxu0 0.0
  %1973 = vmatpush1.msra.mxu0 0.0
  %1974 = vmatprep.subr.mxu0 0.0
  %1975 = vmatpush1.msra.mxu0 0.0
  %1976 = vmatprep.subr.mxu0 0.0
  %1977 = vmatpush1.msra.mxu0 0.0
  %1978 = vmatprep.subr.mxu0 0.0
  %1979 = vmatpush1.msra.mxu0 0.0
  %1980 = vmatprep.subr.mxu0 0.0
  %1981 = vmatpush1.msra.mxu0 0.0
  %1982 = vmatprep.subr.mxu0 0.0
  %1983 = vmatpush1.msra.mxu0 0.0
  %1984 = vmatprep.subr.mxu0 0.0
  %1985 = vmatpush1.msra.mxu0 0.0
  %1986 = vmatprep.subr.mxu0 0.0
  %1987 = vmatpush1.msra.mxu0 0.0
  %1988 = vmatprep.subr.mxu0 %v1954
  %1989 = vmatpush1.msra.mxu0 %v1952
  %1990 = vmatprep.subr.mxu0 0.0
  %1991 = vmatpush2.msra.mxu0 0.0
  %1992 = vmatprep.subr.mxu0 0.0
  %1993 = vmatpush2.msra.mxu0 0.0
  %1994 = vmatprep.subr.mxu0 0.0
  %1995 = vmatpush2.msra.mxu0 0.0
  %1996 = vmatprep.subr.mxu0 0.0
  %1997 = vmatpush2.msra.mxu0 0.0
  %1998 = vmatprep.subr.mxu0 0.0
  %1999 = vmatpush2.msra.mxu0 0.0
  %2000 = vmatprep.subr.mxu0 0.0
  %2001 = vmatpush2.msra.mxu0 0.0
  %2002 = vmatprep.subr.mxu0 0.0
  %2003 = vmatpush2.msra.mxu0 0.0
  %2004 = vmatprep.subr.mxu0 0.0
  %2005 = vmatpush2.msra.mxu0 0.0
  %2006 = vmatprep.subr.mxu0 0.0
  %2007 = vmatpush2.msra.mxu0 0.0
  %2008 = vmatprep.subr.mxu0 0.0
  %2009 = vmatpush2.msra.mxu0 0.0
  %2010 = vmatprep.subr.mxu0 0.0
  %2011 = vmatpush2.msra.mxu0 0.0
  %2012 = vmatprep.subr.mxu0 0.0
  %2013 = vmatpush2.msra.mxu0 0.0
  %2014 = vmatprep.subr.mxu0 0.0
  %2015 = vmatpush2.msra.mxu0 0.0
  %2016 = vmatprep.subr.mxu0 0.0
  %2017 = vmatpush2.msra.mxu0 0.0
  %2018 = vmatprep.subr.mxu0 0.0
  %2019 = vmatpush2.msra.mxu0 0.0
  %2020 = vmatprep.subr.mxu0 0.0
  %2021 = vmatpush2.msra.mxu0 0.0
  %2022 = vmatprep.mubr.f32.mxu0 0.0
  %2023 = vmatmul.mubr.f32.gmra.mxu0 %v1950
  %v2024 = vpop.f32.mrf.mxu0
  %v2025 = vadd.f32 0.0, %v2024
  %v2026 = vpop.f32.mrf.mxu0
  %v2027 = vadd.f32 0.0, %v2026
  %2028 = vdwg.mxu0
  %2029 = vmatprep.subr.mxu0 0.0
  %2030 = vmatpush1.msra.mxu0 0.0
  %2031 = vmatprep.subr.mxu0 0.0
  %2032 = vmatpush1.msra.mxu0 0.0
  %2033 = vmatprep.subr.mxu0 0.0
  %2034 = vmatpush1.msra.mxu0 0.0
  %2035 = vmatprep.subr.mxu0 0.0
  %2036 = vmatpush1.msra.mxu0 0.0
  %2037 = vmatprep.subr.mxu0 0.0
  %2038 = vmatpush1.msra.mxu0 0.0
  %2039 = vmatprep.subr.mxu0 0.0
  %2040 = vmatpush1.msra.mxu0 0.0
  %2041 = vmatprep.subr.mxu0 0.0
  %2042 = vmatpush1.msra.mxu0 0.0
  %2043 = vmatprep.subr.mxu0 0.0
  %2044 = vmatpush1.msra.mxu0 0.0
  %2045 = vmatprep.subr.mxu0 0.0
  %2046 = vmatpush1.msra.mxu0 0.0
  %2047 = vmatprep.subr.mxu0 0.0
  %2048 = vmatpush1.msra.mxu0 0.0
  %2049 = vmatprep.subr.mxu0 0.0
  %2050 = vmatpush1.msra.mxu0 0.0
  %2051 = vmatprep.subr.mxu0 0.0
  %2052 = vmatpush1.msra.mxu0 0.0
  %2053 = vmatprep.subr.mxu0 0.0
  %2054 = vmatpush1.msra.mxu0 0.0
  %2055 = vmatprep.subr.mxu0 0.0
  %2056 = vmatpush1.msra.mxu0 0.0
  %2057 = vmatprep.subr.mxu0 0.0
  %2058 = vmatpush1.msra.mxu0 0.0
  %2059 = vmatprep.subr.mxu0 0.0
  %2060 = vmatpush1.msra.mxu0 %v1956
  %2061 = vmatprep.subr.mxu0 0.0
  %2062 = vmatpush2.msra.mxu0 0.0
  %2063 = vmatprep.subr.mxu0 0.0
  %2064 = vmatpush2.msra.mxu0 0.0
  %2065 = vmatprep.subr.mxu0 0.0
  %2066 = vmatpush2.msra.mxu0 0.0
  %2067 = vmatprep.subr.mxu0 0.0
  %2068 = vmatpush2.msra.mxu0 0.0
  %2069 = vmatprep.subr.mxu0 0.0
  %2070 = vmatpush2.msra.mxu0 0.0
  %2071 = vmatprep.subr.mxu0 0.0
  %2072 = vmatpush2.msra.mxu0 0.0
  %2073 = vmatprep.subr.mxu0 0.0
  %2074 = vmatpush2.msra.mxu0 0.0
  %2075 = vmatprep.subr.mxu0 0.0
  %2076 = vmatpush2.msra.mxu0 0.0
  %2077 = vmatprep.subr.mxu0 0.0
  %2078 = vmatpush2.msra.mxu0 0.0
  %2079 = vmatprep.subr.mxu0 0.0
  %2080 = vmatpush2.msra.mxu0 0.0
  %2081 = vmatprep.subr.mxu0 0.0
  %2082 = vmatpush2.msra.mxu0 0.0
  %2083 = vmatprep.subr.mxu0 0.0
  %2084 = vmatpush2.msra.mxu0 0.0
  %2085 = vmatprep.subr.mxu0 0.0
  %2086 = vmatpush2.msra.mxu0 0.0
  %2087 = vmatprep.subr.mxu0 0.0
  %2088 = vmatpush2.msra.mxu0 0.0
  %2089 = vmatprep.subr.mxu0 0.0
  %2090 = vmatpush2.msra.mxu0 0.0
  %2091 = vmatprep.subr.mxu0 0.0
  %2092 = vmatpush2.msra.mxu0 0.0
  %2093 = vmatprep.mubr.f32.mxu0 0.0
  %2094 = vmatmul.mubr.f32.gmra.mxu0 %v1950
  %v2095 = vpop.f32.mrf.mxu0
  %v2096 = vadd.f32 0.0, %v2095
  %v2097 = vpop.f32.mrf.mxu0
  %2098 = vdwg.mxu0
  %v2099 = vadd.f32 %v1929, %v2025
  %v2100 = vadd.f32 %v1930, %v2027
  %v2101 = vadd.f32 %v1931, %v2096
  %v2102 = vld [vmem:[%s4] sm:$0xff]
  %2104 = vset.pattern.permute.xlu0 0
  %2105 = vperm.xlu0 %2104, %v2102
  %v2106 = vpop.permute.xlu0 %2105
  %v2108 = vadd.f32 %v2099, %v2106
  %v2109 = vadd.f32 %v2100, %v2106
  %v2110 = vadd.f32 %v2101, %v2106
  %v2111 = vmax.f32 %v2108, 0.0
  %v2112 = vmax.f32 %v2109, 0.0
  %v2113 = vmax.f32 %v2110, 0.0
  %v2114 = vld [vmem:[%s5] sm:$0xff]
  %v2115 = vld [vmem:[%s5 + $0x8] sm:$0xff]
  %s2116 = scalar_lea.vmem %s5, 16
  %v2117 = vld [vmem:[%s2116] sm:$0xff]
  %v2118 = vld [vmem:[%s2116 + $0x8] sm:$0xff]
  %2120 = vrot.lane.b32.xlu0 %v2111, 74
  %v2121 = vpop.permute.xlu0 %2120
  %vm2123 = vcmask 64512
  %v2125 = vsel %vm2123, %v2117, 0
  %v2128 = vsel %vm2123, %v2118, 0
  %2130 = vmatprep.subr.mxu0 0.0
  %2131 = vmatpush1.msra.mxu0 0.0
  %2132 = vmatprep.subr.mxu0 0.0
  %2133 = vmatpush1.msra.mxu0 0.0
  %2134 = vmatprep.subr.mxu0 0.0
  %2135 = vmatpush1.msra.mxu0 0.0
  %2136 = vmatprep.subr.mxu0 0.0
  %2137 = vmatpush1.msra.mxu0 0.0
  %2138 = vmatprep.subr.mxu0 0.0
  %2139 = vmatpush1.msra.mxu0 0.0
  %2140 = vmatprep.subr.mxu0 0.0
  %2141 = vmatpush1.msra.mxu0 0.0
  %2142 = vmatprep.subr.mxu0 0.0
  %2143 = vmatpush1.msra.mxu0 0.0
  %2144 = vmatprep.subr.mxu0 0.0
  %2145 = vmatpush1.msra.mxu0 0.0
  %2146 = vmatprep.subr.mxu0 0.0
  %2147 = vmatpush1.msra.mxu0 0.0
  %2148 = vmatprep.subr.mxu0 0.0
  %2149 = vmatpush1.msra.mxu0 0.0
  %2150 = vmatprep.subr.mxu0 0.0
  %2151 = vmatpush1.msra.mxu0 0.0
  %2152 = vmatprep.subr.mxu0 0.0
  %2153 = vmatpush1.msra.mxu0 0.0
  %2154 = vmatprep.subr.mxu0 0.0
  %2155 = vmatpush1.msra.mxu0 0.0
  %2156 = vmatprep.subr.mxu0 0.0
  %2157 = vmatpush1.msra.mxu0 0.0
  %2158 = vmatprep.subr.mxu0 0.0
  %2159 = vmatpush1.msra.mxu0 0.0
  %2160 = vmatprep.subr.mxu0 0.0
  %2161 = vmatpush1.msra.mxu0 %v2121
  %2162 = vmatprep.subr.mxu0 0.0
  %2163 = vmatpush2.msra.mxu0 0.0
  %2164 = vmatprep.subr.mxu0 0.0
  %2165 = vmatpush2.msra.mxu0 0.0
  %2166 = vmatprep.subr.mxu0 0.0
  %2167 = vmatpush2.msra.mxu0 0.0
  %2168 = vmatprep.subr.mxu0 0.0
  %2169 = vmatpush2.msra.mxu0 0.0
  %2170 = vmatprep.subr.mxu0 0.0
  %2171 = vmatpush2.msra.mxu0 0.0
  %2172 = vmatprep.subr.mxu0 0.0
  %2173 = vmatpush2.msra.mxu0 0.0
  %2174 = vmatprep.subr.mxu0 0.0
  %2175 = vmatpush2.msra.mxu0 0.0
  %2176 = vmatprep.subr.mxu0 0.0
  %2177 = vmatpush2.msra.mxu0 0.0
  %2178 = vmatprep.subr.mxu0 0.0
  %2179 = vmatpush2.msra.mxu0 0.0
  %2180 = vmatprep.subr.mxu0 0.0
  %2181 = vmatpush2.msra.mxu0 0.0
  %2182 = vmatprep.subr.mxu0 0.0
  %2183 = vmatpush2.msra.mxu0 0.0
  %2184 = vmatprep.subr.mxu0 0.0
  %2185 = vmatpush2.msra.mxu0 0.0
  %2186 = vmatprep.subr.mxu0 0.0
  %2187 = vmatpush2.msra.mxu0 0.0
  %2188 = vmatprep.subr.mxu0 0.0
  %2189 = vmatpush2.msra.mxu0 0.0
  %2190 = vmatprep.subr.mxu0 0.0
  %2191 = vmatpush2.msra.mxu0 0.0
  %2192 = vmatprep.subr.mxu0 0.0
  %2193 = vmatpush2.msra.mxu0 0.0
  %2194 = vmatprep.mubr.f32.mxu0 0.0
  %2195 = vmatmul.mubr.f32.gmra.mxu0 %v2125
  %v2196 = vpop.f32.mrf.mxu0
  %v2197 = vadd.f32 0.0, %v2196
  %v2198 = vpop.f32.mrf.mxu0
  %2199 = vmatprep.mubr.f32.mxu0 0.0
  %2200 = vmatmul.mubr.f32.gmra.mxu0 %v2128
  %v2201 = vpop.f32.mrf.mxu0
  %v2202 = vadd.f32 0.0, %v2201
  %v2203 = vpop.f32.mrf.mxu0
  %2204 = vdwg.mxu0
  %v2206 = vsel %vm2123, %v2114, 0
  %v2209 = vsel %vm2123, %v2115, 0
  %2211 = vmatprep.subr.mxu0 0.0
  %2212 = vmatpush1.msra.mxu0 0.0
  %2213 = vmatprep.subr.mxu0 0.0
  %2214 = vmatpush1.msra.mxu0 0.0
  %2215 = vmatprep.subr.mxu0 0.0
  %2216 = vmatpush1.msra.mxu0 0.0
  %2217 = vmatprep.subr.mxu0 0.0
  %2218 = vmatpush1.msra.mxu0 0.0
  %2219 = vmatprep.subr.mxu0 0.0
  %2220 = vmatpush1.msra.mxu0 0.0
  %2221 = vmatprep.subr.mxu0 0.0
  %2222 = vmatpush1.msra.mxu0 0.0
  %2223 = vmatprep.subr.mxu0 0.0
  %2224 = vmatpush1.msra.mxu0 0.0
  %2225 = vmatprep.subr.mxu0 0.0
  %2226 = vmatpush1.msra.mxu0 0.0
  %2227 = vmatprep.subr.mxu0 0.0
  %2228 = vmatpush1.msra.mxu0 0.0
  %2229 = vmatprep.subr.mxu0 0.0
  %2230 = vmatpush1.msra.mxu0 0.0
  %2231 = vmatprep.subr.mxu0 0.0
  %2232 = vmatpush1.msra.mxu0 0.0
  %2233 = vmatprep.subr.mxu0 0.0
  %2234 = vmatpush1.msra.mxu0 0.0
  %2235 = vmatprep.subr.mxu0 0.0
  %2236 = vmatpush1.msra.mxu0 0.0
  %2237 = vmatprep.subr.mxu0 0.0
  %2238 = vmatpush1.msra.mxu0 0.0
  %2239 = vmatprep.subr.mxu0 0.0
  %2240 = vmatpush1.msra.mxu0 0.0
  %2241 = vmatprep.subr.mxu0 0.0
  %2242 = vmatpush1.msra.mxu0 %v2111
  %2243 = vmatprep.subr.mxu0 0.0
  %2244 = vmatpush2.msra.mxu0 0.0
  %2245 = vmatprep.subr.mxu0 0.0
  %2246 = vmatpush2.msra.mxu0 0.0
  %2247 = vmatprep.subr.mxu0 0.0
  %2248 = vmatpush2.msra.mxu0 0.0
  %2249 = vmatprep.subr.mxu0 0.0
  %2250 = vmatpush2.msra.mxu0 0.0
  %2251 = vmatprep.subr.mxu0 0.0
  %2252 = vmatpush2.msra.mxu0 0.0
  %2253 = vmatprep.subr.mxu0 0.0
  %2254 = vmatpush2.msra.mxu0 0.0
  %2255 = vmatprep.subr.mxu0 0.0
  %2256 = vmatpush2.msra.mxu0 0.0
  %2257 = vmatprep.subr.mxu0 0.0
  %2258 = vmatpush2.msra.mxu0 0.0
  %2259 = vmatprep.subr.mxu0 0.0
  %2260 = vmatpush2.msra.mxu0 0.0
  %2261 = vmatprep.subr.mxu0 0.0
  %2262 = vmatpush2.msra.mxu0 0.0
  %2263 = vmatprep.subr.mxu0 0.0
  %2264 = vmatpush2.msra.mxu0 0.0
  %2265 = vmatprep.subr.mxu0 0.0
  %2266 = vmatpush2.msra.mxu0 0.0
  %2267 = vmatprep.subr.mxu0 0.0
  %2268 = vmatpush2.msra.mxu0 0.0
  %2269 = vmatprep.subr.mxu0 0.0
  %2270 = vmatpush2.msra.mxu0 0.0
  %2271 = vmatprep.subr.mxu0 0.0
  %2272 = vmatpush2.msra.mxu0 0.0
  %2273 = vmatprep.subr.mxu0 0.0
  %2274 = vmatpush2.msra.mxu0 0.0
  %2275 = vmatprep.mubr.f32.mxu0 0.0
  %2276 = vmatmul.mubr.f32.gmra.mxu0 %v2206
  %v2277 = vpop.f32.mrf.mxu0
  %v2278 = vadd.f32 %v2197, %v2277
  %v2279 = vpop.f32.mrf.mxu0
  %2280 = vmatprep.mubr.f32.mxu0 0.0
  %2281 = vmatmul.mubr.f32.gmra.mxu0 %v2209
  %v2282 = vpop.f32.mrf.mxu0
  %v2283 = vadd.f32 %v2202, %v2282
  %v2284 = vpop.f32.mrf.mxu0
  %2285 = vdwg.mxu0
  %s2286 = scalar_lea.vmem %s5, 32
  %v2287 = vld [vmem:[%s2286] sm:$0xff]
  %v2288 = vld [vmem:[%s2286 + $0x8] sm:$0xff]
  %2290 = vrot.lane.b32.xlu0 %v2111, 20
  %v2291 = vpop.permute.xlu0 %2290
  %2292 = vrot.lane.b32.xlu0 %v2112, 20
  %v2293 = vpop.permute.xlu0 %2292
  %vm2294 = vcmask 162816
  %v2295 = vsel %vm2294, %v2291, %v2293
  %v2298 = vsel %vm2123, %v2287, 0
  %v2301 = vsel %vm2123, %v2288, 0
  %2303 = vmatprep.subr.mxu0 0.0
  %2304 = vmatpush1.msra.mxu0 0.0
  %2305 = vmatprep.subr.mxu0 0.0
  %2306 = vmatpush1.msra.mxu0 0.0
  %2307 = vmatprep.subr.mxu0 0.0
  %2308 = vmatpush1.msra.mxu0 0.0
  %2309 = vmatprep.subr.mxu0 0.0
  %2310 = vmatpush1.msra.mxu0 0.0
  %2311 = vmatprep.subr.mxu0 0.0
  %2312 = vmatpush1.msra.mxu0 0.0
  %2313 = vmatprep.subr.mxu0 0.0
  %2314 = vmatpush1.msra.mxu0 0.0
  %2315 = vmatprep.subr.mxu0 0.0
  %2316 = vmatpush1.msra.mxu0 0.0
  %2317 = vmatprep.subr.mxu0 0.0
  %2318 = vmatpush1.msra.mxu0 0.0
  %2319 = vmatprep.subr.mxu0 0.0
  %2320 = vmatpush1.msra.mxu0 0.0
  %2321 = vmatprep.subr.mxu0 0.0
  %2322 = vmatpush1.msra.mxu0 0.0
  %2323 = vmatprep.subr.mxu0 0.0
  %2324 = vmatpush1.msra.mxu0 0.0
  %2325 = vmatprep.subr.mxu0 0.0
  %2326 = vmatpush1.msra.mxu0 0.0
  %2327 = vmatprep.subr.mxu0 0.0
  %2328 = vmatpush1.msra.mxu0 0.0
  %2329 = vmatprep.subr.mxu0 0.0
  %2330 = vmatpush1.msra.mxu0 0.0
  %2331 = vmatprep.subr.mxu0 0.0
  %2332 = vmatpush1.msra.mxu0 0.0
  %2333 = vmatprep.subr.mxu0 0.0
  %2334 = vmatpush1.msra.mxu0 %v2295
  %2335 = vmatprep.subr.mxu0 0.0
  %2336 = vmatpush2.msra.mxu0 0.0
  %2337 = vmatprep.subr.mxu0 0.0
  %2338 = vmatpush2.msra.mxu0 0.0
  %2339 = vmatprep.subr.mxu0 0.0
  %2340 = vmatpush2.msra.mxu0 0.0
  %2341 = vmatprep.subr.mxu0 0.0
  %2342 = vmatpush2.msra.mxu0 0.0
  %2343 = vmatprep.subr.mxu0 0.0
  %2344 = vmatpush2.msra.mxu0 0.0
  %2345 = vmatprep.subr.mxu0 0.0
  %2346 = vmatpush2.msra.mxu0 0.0
  %2347 = vmatprep.subr.mxu0 0.0
  %2348 = vmatpush2.msra.mxu0 0.0
  %2349 = vmatprep.subr.mxu0 0.0
  %2350 = vmatpush2.msra.mxu0 0.0
  %2351 = vmatprep.subr.mxu0 0.0
  %2352 = vmatpush2.msra.mxu0 0.0
  %2353 = vmatprep.subr.mxu0 0.0
  %2354 = vmatpush2.msra.mxu0 0.0
  %2355 = vmatprep.subr.mxu0 0.0
  %2356 = vmatpush2.msra.mxu0 0.0
  %2357 = vmatprep.subr.mxu0 0.0
  %2358 = vmatpush2.msra.mxu0 0.0
  %2359 = vmatprep.subr.mxu0 0.0
  %2360 = vmatpush2.msra.mxu0 0.0
  %2361 = vmatprep.subr.mxu0 0.0
  %2362 = vmatpush2.msra.mxu0 0.0
  %2363 = vmatprep.subr.mxu0 0.0
  %2364 = vmatpush2.msra.mxu0 0.0
  %2365 = vmatprep.subr.mxu0 0.0
  %2366 = vmatpush2.msra.mxu0 0.0
  %2367 = vmatprep.mubr.f32.mxu0 0.0
  %2368 = vmatmul.mubr.f32.gmra.mxu0 %v2298
  %v2369 = vpop.f32.mrf.mxu0
  %v2370 = vadd.f32 0.0, %v2369
  %v2371 = vpop.f32.mrf.mxu0
  %2372 = vmatprep.mubr.f32.mxu0 0.0
  %2373 = vmatmul.mubr.f32.gmra.mxu0 %v2301
  %v2374 = vpop.f32.mrf.mxu0
  %v2375 = vadd.f32 0.0, %v2374
  %v2376 = vpop.f32.mrf.mxu0
  %2377 = vdwg.mxu0
  %v2378 = vadd.f32 %v2278, %v2370
  %v2379 = vadd.f32 %v2283, %v2375
  %s2380 = scalar_lea.vmem %s5, 48
  %v2381 = vld [vmem:[%s2380] sm:$0xff]
  %v2382 = vld [vmem:[%s2380 + $0x8] sm:$0xff]
  %2383 = vrot.lane.b32.xlu0 %v2112, 94
  %v2384 = vpop.permute.xlu0 %2383
  %v2387 = vsel %vm2123, %v2381, 0
  %v2390 = vsel %vm2123, %v2382, 0
  %2392 = vmatprep.subr.mxu0 0.0
  %2393 = vmatpush1.msra.mxu0 0.0
  %2394 = vmatprep.subr.mxu0 0.0
  %2395 = vmatpush1.msra.mxu0 0.0
  %2396 = vmatprep.subr.mxu0 0.0
  %2397 = vmatpush1.msra.mxu0 0.0
  %2398 = vmatprep.subr.mxu0 0.0
  %2399 = vmatpush1.msra.mxu0 0.0
  %2400 = vmatprep.subr.mxu0 0.0
  %2401 = vmatpush1.msra.mxu0 0.0
  %2402 = vmatprep.subr.mxu0 0.0
  %2403 = vmatpush1.msra.mxu0 0.0
  %2404 = vmatprep.subr.mxu0 0.0
  %2405 = vmatpush1.msra.mxu0 0.0
  %2406 = vmatprep.subr.mxu0 0.0
  %2407 = vmatpush1.msra.mxu0 0.0
  %2408 = vmatprep.subr.mxu0 0.0
  %2409 = vmatpush1.msra.mxu0 0.0
  %2410 = vmatprep.subr.mxu0 0.0
  %2411 = vmatpush1.msra.mxu0 0.0
  %2412 = vmatprep.subr.mxu0 0.0
  %2413 = vmatpush1.msra.mxu0 0.0
  %2414 = vmatprep.subr.mxu0 0.0
  %2415 = vmatpush1.msra.mxu0 0.0
  %2416 = vmatprep.subr.mxu0 0.0
  %2417 = vmatpush1.msra.mxu0 0.0
  %2418 = vmatprep.subr.mxu0 0.0
  %2419 = vmatpush1.msra.mxu0 0.0
  %2420 = vmatprep.subr.mxu0 0.0
  %2421 = vmatpush1.msra.mxu0 0.0
  %2422 = vmatprep.subr.mxu0 0.0
  %2423 = vmatpush1.msra.mxu0 %v2384
  %2424 = vmatprep.subr.mxu0 0.0
  %2425 = vmatpush2.msra.mxu0 0.0
  %2426 = vmatprep.subr.mxu0 0.0
  %2427 = vmatpush2.msra.mxu0 0.0
  %2428 = vmatprep.subr.mxu0 0.0
  %2429 = vmatpush2.msra.mxu0 0.0
  %2430 = vmatprep.subr.mxu0 0.0
  %2431 = vmatpush2.msra.mxu0 0.0
  %2432 = vmatprep.subr.mxu0 0.0
  %2433 = vmatpush2.msra.mxu0 0.0
  %2434 = vmatprep.subr.mxu0 0.0
  %2435 = vmatpush2.msra.mxu0 0.0
  %2436 = vmatprep.subr.mxu0 0.0
  %2437 = vmatpush2.msra.mxu0 0.0
  %2438 = vmatprep.subr.mxu0 0.0
  %2439 = vmatpush2.msra.mxu0 0.0
  %2440 = vmatprep.subr.mxu0 0.0
  %2441 = vmatpush2.msra.mxu0 0.0
  %2442 = vmatprep.subr.mxu0 0.0
  %2443 = vmatpush2.msra.mxu0 0.0
  %2444 = vmatprep.subr.mxu0 0.0
  %2445 = vmatpush2.msra.mxu0 0.0
  %2446 = vmatprep.subr.mxu0 0.0
  %2447 = vmatpush2.msra.mxu0 0.0
  %2448 = vmatprep.subr.mxu0 0.0
  %2449 = vmatpush2.msra.mxu0 0.0
  %2450 = vmatprep.subr.mxu0 0.0
  %2451 = vmatpush2.msra.mxu0 0.0
  %2452 = vmatprep.subr.mxu0 0.0
  %2453 = vmatpush2.msra.mxu0 0.0
  %2454 = vmatprep.subr.mxu0 0.0
  %2455 = vmatpush2.msra.mxu0 0.0
  %2456 = vmatprep.mubr.f32.mxu0 0.0
  %2457 = vmatmul.mubr.f32.gmra.mxu0 %v2387
  %v2458 = vpop.f32.mrf.mxu0
  %v2459 = vadd.f32 0.0, %v2458
  %v2460 = vpop.f32.mrf.mxu0
  %2461 = vmatprep.mubr.f32.mxu0 0.0
  %2462 = vmatmul.mubr.f32.gmra.mxu0 %v2390
  %v2463 = vpop.f32.mrf.mxu0
  %v2464 = vadd.f32 0.0, %v2463
  %v2465 = vpop.f32.mrf.mxu0
  %2466 = vdwg.mxu0
  %v2467 = vadd.f32 %v2378, %v2459
  %v2468 = vadd.f32 %v2379, %v2464
  %s2469 = scalar_lea.vmem %s5, 64
  %v2470 = vld [vmem:[%s2469] sm:$0xff]
  %v2471 = vld [vmem:[%s2469 + $0x8] sm:$0xff]
  %2473 = vrot.lane.b32.xlu0 %v2112, 40
  %v2474 = vpop.permute.xlu0 %2473
  %2475 = vrot.lane.b32.xlu0 %v2113, 40
  %v2476 = vpop.permute.xlu0 %2475
  %vm2477 = vcmask 326656
  %v2478 = vsel %vm2477, %v2474, %v2476
  %v2481 = vsel %vm2123, %v2470, 0
  %v2484 = vsel %vm2123, %v2471, 0
  %2486 = vmatprep.subr.mxu0 0.0
  %2487 = vmatpush1.msra.mxu0 0.0
  %2488 = vmatprep.subr.mxu0 0.0
  %2489 = vmatpush1.msra.mxu0 0.0
  %2490 = vmatprep.subr.mxu0 0.0
  %2491 = vmatpush1.msra.mxu0 0.0
  %2492 = vmatprep.subr.mxu0 0.0
  %2493 = vmatpush1.msra.mxu0 0.0
  %2494 = vmatprep.subr.mxu0 0.0
  %2495 = vmatpush1.msra.mxu0 0.0
  %2496 = vmatprep.subr.mxu0 0.0
  %2497 = vmatpush1.msra.mxu0 0.0
  %2498 = vmatprep.subr.mxu0 0.0
  %2499 = vmatpush1.msra.mxu0 0.0
  %2500 = vmatprep.subr.mxu0 0.0
  %2501 = vmatpush1.msra.mxu0 0.0
  %2502 = vmatprep.subr.mxu0 0.0
  %2503 = vmatpush1.msra.mxu0 0.0
  %2504 = vmatprep.subr.mxu0 0.0
  %2505 = vmatpush1.msra.mxu0 0.0
  %2506 = vmatprep.subr.mxu0 0.0
  %2507 = vmatpush1.msra.mxu0 0.0
  %2508 = vmatprep.subr.mxu0 0.0
  %2509 = vmatpush1.msra.mxu0 0.0
  %2510 = vmatprep.subr.mxu0 0.0
  %2511 = vmatpush1.msra.mxu0 0.0
  %2512 = vmatprep.subr.mxu0 0.0
  %2513 = vmatpush1.msra.mxu0 0.0
  %2514 = vmatprep.subr.mxu0 0.0
  %2515 = vmatpush1.msra.mxu0 0.0
  %2516 = vmatprep.subr.mxu0 0.0
  %2517 = vmatpush1.msra.mxu0 %v2478
  %2518 = vmatprep.subr.mxu0 0.0
  %2519 = vmatpush2.msra.mxu0 0.0
  %2520 = vmatprep.subr.mxu0 0.0
  %2521 = vmatpush2.msra.mxu0 0.0
  %2522 = vmatprep.subr.mxu0 0.0
  %2523 = vmatpush2.msra.mxu0 0.0
  %2524 = vmatprep.subr.mxu0 0.0
  %2525 = vmatpush2.msra.mxu0 0.0
  %2526 = vmatprep.subr.mxu0 0.0
  %2527 = vmatpush2.msra.mxu0 0.0
  %2528 = vmatprep.subr.mxu0 0.0
  %2529 = vmatpush2.msra.mxu0 0.0
  %2530 = vmatprep.subr.mxu0 0.0
  %2531 = vmatpush2.msra.mxu0 0.0
  %2532 = vmatprep.subr.mxu0 0.0
  %2533 = vmatpush2.msra.mxu0 0.0
  %2534 = vmatprep.subr.mxu0 0.0
  %2535 = vmatpush2.msra.mxu0 0.0
  %2536 = vmatprep.subr.mxu0 0.0
  %2537 = vmatpush2.msra.mxu0 0.0
  %2538 = vmatprep.subr.mxu0 0.0
  %2539 = vmatpush2.msra.mxu0 0.0
  %2540 = vmatprep.subr.mxu0 0.0
  %2541 = vmatpush2.msra.mxu0 0.0
  %2542 = vmatprep.subr.mxu0 0.0
  %2543 = vmatpush2.msra.mxu0 0.0
  %2544 = vmatprep.subr.mxu0 0.0
  %2545 = vmatpush2.msra.mxu0 0.0
  %2546 = vmatprep.subr.mxu0 0.0
  %2547 = vmatpush2.msra.mxu0 0.0
  %2548 = vmatprep.subr.mxu0 0.0
  %2549 = vmatpush2.msra.mxu0 0.0
  %2550 = vmatprep.mubr.f32.mxu0 0.0
  %2551 = vmatmul.mubr.f32.gmra.mxu0 %v2481
  %v2552 = vpop.f32.mrf.mxu0
  %v2553 = vadd.f32 0.0, %v2552
  %v2554 = vpop.f32.mrf.mxu0
  %2555 = vmatprep.mubr.f32.mxu0 0.0
  %2556 = vmatmul.mubr.f32.gmra.mxu0 %v2484
  %v2557 = vpop.f32.mrf.mxu0
  %v2558 = vadd.f32 0.0, %v2557
  %v2559 = vpop.f32.mrf.mxu0
  %2560 = vdwg.mxu0
  %v2561 = vadd.f32 %v2467, %v2553
  %v2562 = vadd.f32 %v2468, %v2558
  %s2563 = scalar_lea.vmem %s5, 80
  %v2564 = vld [vmem:[%s2563] sm:$0xff]
  %v2565 = vld [vmem:[%s2563 + $0x8] sm:$0xff]
  %2566 = vrot.lane.b32.xlu0 %v2113, 114
  %v2567 = vpop.permute.xlu0 %2566
  %v2570 = vsel %vm2123, %v2564, 0
  %v2573 = vsel %vm2123, %v2565, 0
  %2575 = vmatprep.subr.mxu0 0.0
  %2576 = vmatpush1.msra.mxu0 0.0
  %2577 = vmatprep.subr.mxu0 0.0
  %2578 = vmatpush1.msra.mxu0 0.0
  %2579 = vmatprep.subr.mxu0 0.0
  %2580 = vmatpush1.msra.mxu0 0.0
  %2581 = vmatprep.subr.mxu0 0.0
  %2582 = vmatpush1.msra.mxu0 0.0
  %2583 = vmatprep.subr.mxu0 0.0
  %2584 = vmatpush1.msra.mxu0 0.0
  %2585 = vmatprep.subr.mxu0 0.0
  %2586 = vmatpush1.msra.mxu0 0.0
  %2587 = vmatprep.subr.mxu0 0.0
  %2588 = vmatpush1.msra.mxu0 0.0
  %2589 = vmatprep.subr.mxu0 0.0
  %2590 = vmatpush1.msra.mxu0 0.0
  %2591 = vmatprep.subr.mxu0 0.0
  %2592 = vmatpush1.msra.mxu0 0.0
  %2593 = vmatprep.subr.mxu0 0.0
  %2594 = vmatpush1.msra.mxu0 0.0
  %2595 = vmatprep.subr.mxu0 0.0
  %2596 = vmatpush1.msra.mxu0 0.0
  %2597 = vmatprep.subr.mxu0 0.0
  %2598 = vmatpush1.msra.mxu0 0.0
  %2599 = vmatprep.subr.mxu0 0.0
  %2600 = vmatpush1.msra.mxu0 0.0
  %2601 = vmatprep.subr.mxu0 0.0
  %2602 = vmatpush1.msra.mxu0 0.0
  %2603 = vmatprep.subr.mxu0 0.0
  %2604 = vmatpush1.msra.mxu0 0.0
  %2605 = vmatprep.subr.mxu0 0.0
  %2606 = vmatpush1.msra.mxu0 %v2567
  %2607 = vmatprep.subr.mxu0 0.0
  %2608 = vmatpush2.msra.mxu0 0.0
  %2609 = vmatprep.subr.mxu0 0.0
  %2610 = vmatpush2.msra.mxu0 0.0
  %2611 = vmatprep.subr.mxu0 0.0
  %2612 = vmatpush2.msra.mxu0 0.0
  %2613 = vmatprep.subr.mxu0 0.0
  %2614 = vmatpush2.msra.mxu0 0.0
  %2615 = vmatprep.subr.mxu0 0.0
  %2616 = vmatpush2.msra.mxu0 0.0
  %2617 = vmatprep.subr.mxu0 0.0
  %2618 = vmatpush2.msra.mxu0 0.0
  %2619 = vmatprep.subr.mxu0 0.0
  %2620 = vmatpush2.msra.mxu0 0.0
  %2621 = vmatprep.subr.mxu0 0.0
  %2622 = vmatpush2.msra.mxu0 0.0
  %2623 = vmatprep.subr.mxu0 0.0
  %2624 = vmatpush2.msra.mxu0 0.0
  %2625 = vmatprep.subr.mxu0 0.0
  %2626 = vmatpush2.msra.mxu0 0.0
  %2627 = vmatprep.subr.mxu0 0.0
  %2628 = vmatpush2.msra.mxu0 0.0
  %2629 = vmatprep.subr.mxu0 0.0
  %2630 = vmatpush2.msra.mxu0 0.0
  %2631 = vmatprep.subr.mxu0 0.0
  %2632 = vmatpush2.msra.mxu0 0.0
  %2633 = vmatprep.subr.mxu0 0.0
  %2634 = vmatpush2.msra.mxu0 0.0
  %2635 = vmatprep.subr.mxu0 0.0
  %2636 = vmatpush2.msra.mxu0 0.0
  %2637 = vmatprep.subr.mxu0 0.0
  %2638 = vmatpush2.msra.mxu0 0.0
  %2639 = vmatprep.mubr.f32.mxu0 0.0
  %2640 = vmatmul.mubr.f32.gmra.mxu0 %v2570
  %v2641 = vpop.f32.mrf.mxu0
  %v2642 = vadd.f32 0.0, %v2641
  %v2643 = vpop.f32.mrf.mxu0
  %2644 = vmatprep.mubr.f32.mxu0 0.0
  %2645 = vmatmul.mubr.f32.gmra.mxu0 %v2573
  %v2646 = vpop.f32.mrf.mxu0
  %v2647 = vadd.f32 0.0, %v2646
  %v2648 = vpop.f32.mrf.mxu0
  %2649 = vdwg.mxu0
  %v2650 = vadd.f32 %v2561, %v2642
  %v2651 = vadd.f32 %v2562, %v2647
  %s2652 = scalar_lea.vmem %s5, 96
  %v2653 = vld [vmem:[%s2652] sm:$0xff]
  %v2654 = vld [vmem:[%s2652 + $0x8] sm:$0xff]
  %2655 = vrot.lane.b32.xlu0 %v2113, 60
  %v2656 = vpop.permute.xlu0 %2655
  %v2659 = vsel %vm2123, %v2653, 0
  %v2662 = vsel %vm2123, %v2654, 0
  %2664 = vmatprep.subr.mxu0 0.0
  %2665 = vmatpush1.msra.mxu0 0.0
  %2666 = vmatprep.subr.mxu0 0.0
  %2667 = vmatpush1.msra.mxu0 0.0
  %2668 = vmatprep.subr.mxu0 0.0
  %2669 = vmatpush1.msra.mxu0 0.0
  %2670 = vmatprep.subr.mxu0 0.0
  %2671 = vmatpush1.msra.mxu0 0.0
  %2672 = vmatprep.subr.mxu0 0.0
  %2673 = vmatpush1.msra.mxu0 0.0
  %2674 = vmatprep.subr.mxu0 0.0
  %2675 = vmatpush1.msra.mxu0 0.0
  %2676 = vmatprep.subr.mxu0 0.0
  %2677 = vmatpush1.msra.mxu0 0.0
  %2678 = vmatprep.subr.mxu0 0.0
  %2679 = vmatpush1.msra.mxu0 0.0
  %2680 = vmatprep.subr.mxu0 0.0
  %2681 = vmatpush1.msra.mxu0 0.0
  %2682 = vmatprep.subr.mxu0 0.0
  %2683 = vmatpush1.msra.mxu0 0.0
  %2684 = vmatprep.subr.mxu0 0.0
  %2685 = vmatpush1.msra.mxu0 0.0
  %2686 = vmatprep.subr.mxu0 0.0
  %2687 = vmatpush1.msra.mxu0 0.0
  %2688 = vmatprep.subr.mxu0 0.0
  %2689 = vmatpush1.msra.mxu0 0.0
  %2690 = vmatprep.subr.mxu0 0.0
  %2691 = vmatpush1.msra.mxu0 0.0
  %2692 = vmatprep.subr.mxu0 0.0
  %2693 = vmatpush1.msra.mxu0 0.0
  %2694 = vmatprep.subr.mxu0 0.0
  %2695 = vmatpush1.msra.mxu0 %v2656
  %2696 = vmatprep.subr.mxu0 0.0
  %2697 = vmatpush2.msra.mxu0 0.0
  %2698 = vmatprep.subr.mxu0 0.0
  %2699 = vmatpush2.msra.mxu0 0.0
  %2700 = vmatprep.subr.mxu0 0.0
  %2701 = vmatpush2.msra.mxu0 0.0
  %2702 = vmatprep.subr.mxu0 0.0
  %2703 = vmatpush2.msra.mxu0 0.0
  %2704 = vmatprep.subr.mxu0 0.0
  %2705 = vmatpush2.msra.mxu0 0.0
  %2706 = vmatprep.subr.mxu0 0.0
  %2707 = vmatpush2.msra.mxu0 0.0
  %2708 = vmatprep.subr.mxu0 0.0
  %2709 = vmatpush2.msra.mxu0 0.0
  %2710 = vmatprep.subr.mxu0 0.0
  %2711 = vmatpush2.msra.mxu0 0.0
  %2712 = vmatprep.subr.mxu0 0.0
  %2713 = vmatpush2.msra.mxu0 0.0
  %2714 = vmatprep.subr.mxu0 0.0
  %2715 = vmatpush2.msra.mxu0 0.0
  %2716 = vmatprep.subr.mxu0 0.0
  %2717 = vmatpush2.msra.mxu0 0.0
  %2718 = vmatprep.subr.mxu0 0.0
  %2719 = vmatpush2.msra.mxu0 0.0
  %2720 = vmatprep.subr.mxu0 0.0
  %2721 = vmatpush2.msra.mxu0 0.0
  %2722 = vmatprep.subr.mxu0 0.0
  %2723 = vmatpush2.msra.mxu0 0.0
  %2724 = vmatprep.subr.mxu0 0.0
  %2725 = vmatpush2.msra.mxu0 0.0
  %2726 = vmatprep.subr.mxu0 0.0
  %2727 = vmatpush2.msra.mxu0 0.0
  %2728 = vmatprep.mubr.f32.mxu0 0.0
  %2729 = vmatmul.mubr.f32.gmra.mxu0 %v2659
  %v2730 = vpop.f32.mrf.mxu0
  %v2731 = vadd.f32 0.0, %v2730
  %v2732 = vpop.f32.mrf.mxu0
  %2733 = vmatprep.mubr.f32.mxu0 0.0
  %2734 = vmatmul.mubr.f32.gmra.mxu0 %v2662
  %v2735 = vpop.f32.mrf.mxu0
  %v2736 = vadd.f32 0.0, %v2735
  %v2737 = vpop.f32.mrf.mxu0
  %2738 = vdwg.mxu0
  %v2739 = vadd.f32 %v2650, %v2731
  %v2740 = vadd.f32 %v2651, %v2736
  %v2741 = vld [vmem:[%s6] sm:$0xff]
  %v2742 = vld [vmem:[%s6 + $0x8] sm:$0xff]
  %2744 = vset.pattern.permute.xlu0 0
  %2745 = vperm.xlu0 %2744, %v2741
  %v2746 = vpop.permute.xlu0 %2745
  %2749 = vset.pattern.permute.xlu0 0
  %2750 = vperm.xlu0 %2749, %v2742
  %v2751 = vpop.permute.xlu0 %2750
  %v2753 = vadd.f32 %v2739, %v2746
  %v2754 = vadd.f32 %v2740, %v2751
  %v2755 = vmax.f32 %v2753, 0.0
  %v2756 = vmax.f32 %v2754, 0.0
  %v2757 = vld [vmem:[%s7] sm:$0xff]
  %s2758 = scalar_lea.vmem %s7, 8
  %v2759 = vld [vmem:[%s2758] sm:$0xff]
  %2762 = vrot.lane.b32.xlu0 %v2755, 126
  %v2763 = vpop.permute.xlu0 %2762
  %2764 = vrot.lane.b32.xlu0 %v2756, 126
  %v2765 = vpop.permute.xlu0 %2764
  %vm2768 = vcmask 130048
  %v2770 = vsel %vm2768, %v2759, 0
  %2772 = vmatprep.subr.mxu0 0.0
  %2773 = vmatpush1.msra.mxu0 0.0
  %2774 = vmatprep.subr.mxu0 0.0
  %2775 = vmatpush1.msra.mxu0 0.0
  %2776 = vmatprep.subr.mxu0 0.0
  %2777 = vmatpush1.msra.mxu0 0.0
  %2778 = vmatprep.subr.mxu0 0.0
  %2779 = vmatpush1.msra.mxu0 0.0
  %2780 = vmatprep.subr.mxu0 0.0
  %2781 = vmatpush1.msra.mxu0 0.0
  %2782 = vmatprep.subr.mxu0 0.0
  %2783 = vmatpush1.msra.mxu0 0.0
  %2784 = vmatprep.subr.mxu0 0.0
  %2785 = vmatpush1.msra.mxu0 0.0
  %2786 = vmatprep.subr.mxu0 0.0
  %2787 = vmatpush1.msra.mxu0 0.0
  %2788 = vmatprep.subr.mxu0 0.0
  %2789 = vmatpush1.msra.mxu0 0.0
  %2790 = vmatprep.subr.mxu0 0.0
  %2791 = vmatpush1.msra.mxu0 0.0
  %2792 = vmatprep.subr.mxu0 0.0
  %2793 = vmatpush1.msra.mxu0 0.0
  %2794 = vmatprep.subr.mxu0 0.0
  %2795 = vmatpush1.msra.mxu0 0.0
  %2796 = vmatprep.subr.mxu0 0.0
  %2797 = vmatpush1.msra.mxu0 0.0
  %2798 = vmatprep.subr.mxu0 0.0
  %2799 = vmatpush1.msra.mxu0 0.0
  %2800 = vmatprep.subr.mxu0 0.0
  %2801 = vmatpush1.msra.mxu0 %v2765
  %2802 = vmatprep.subr.mxu0 0.0
  %2803 = vmatpush1.msra.mxu0 %v2763
  %2804 = vmatprep.subr.mxu0 0.0
  %2805 = vmatpush2.msra.mxu0 0.0
  %2806 = vmatprep.subr.mxu0 0.0
  %2807 = vmatpush2.msra.mxu0 0.0
  %2808 = vmatprep.subr.mxu0 0.0
  %2809 = vmatpush2.msra.mxu0 0.0
  %2810 = vmatprep.subr.mxu0 0.0
  %2811 = vmatpush2.msra.mxu0 0.0
  %2812 = vmatprep.subr.mxu0 0.0
  %2813 = vmatpush2.msra.mxu0 0.0
  %2814 = vmatprep.subr.mxu0 0.0
  %2815 = vmatpush2.msra.mxu0 0.0
  %2816 = vmatprep.subr.mxu0 0.0
  %2817 = vmatpush2.msra.mxu0 0.0
  %2818 = vmatprep.subr.mxu0 0.0
  %2819 = vmatpush2.msra.mxu0 0.0
  %2820 = vmatprep.subr.mxu0 0.0
  %2821 = vmatpush2.msra.mxu0 0.0
  %2822 = vmatprep.subr.mxu0 0.0
  %2823 = vmatpush2.msra.mxu0 0.0
  %2824 = vmatprep.subr.mxu0 0.0
  %2825 = vmatpush2.msra.mxu0 0.0
  %2826 = vmatprep.subr.mxu0 0.0
  %2827 = vmatpush2.msra.mxu0 0.0
  %2828 = vmatprep.subr.mxu0 0.0
  %2829 = vmatpush2.msra.mxu0 0.0
  %2830 = vmatprep.subr.mxu0 0.0
  %2831 = vmatpush2.msra.mxu0 0.0
  %2832 = vmatprep.subr.mxu0 0.0
  %2833 = vmatpush2.msra.mxu0 0.0
  %2834 = vmatprep.subr.mxu0 0.0
  %2835 = vmatpush2.msra.mxu0 0.0
  %2836 = vmatprep.mubr.f32.mxu0 0.0
  %2837 = vmatmul.mubr.f32.gmra.mxu0 %v2770
  %v2838 = vpop.f32.mrf.mxu0
  %v2839 = vadd.f32 0.0, %v2838
  %v2840 = vpop.f32.mrf.mxu0
  %2841 = vdwg.mxu0
  %v2843 = vsel %vm2768, %v2757, 0
  %2845 = vmatprep.subr.mxu0 0.0
  %2846 = vmatpush1.msra.mxu0 0.0
  %2847 = vmatprep.subr.mxu0 0.0
  %2848 = vmatpush1.msra.mxu0 0.0
  %2849 = vmatprep.subr.mxu0 0.0
  %2850 = vmatpush1.msra.mxu0 0.0
  %2851 = vmatprep.subr.mxu0 0.0
  %2852 = vmatpush1.msra.mxu0 0.0
  %2853 = vmatprep.subr.mxu0 0.0
  %2854 = vmatpush1.msra.mxu0 0.0
  %2855 = vmatprep.subr.mxu0 0.0
  %2856 = vmatpush1.msra.mxu0 0.0
  %2857 = vmatprep.subr.mxu0 0.0
  %2858 = vmatpush1.msra.mxu0 0.0
  %2859 = vmatprep.subr.mxu0 0.0
  %2860 = vmatpush1.msra.mxu0 0.0
  %2861 = vmatprep.subr.mxu0 0.0
  %2862 = vmatpush1.msra.mxu0 0.0
  %2863 = vmatprep.subr.mxu0 0.0
  %2864 = vmatpush1.msra.mxu0 0.0
  %2865 = vmatprep.subr.mxu0 0.0
  %2866 = vmatpush1.msra.mxu0 0.0
  %2867 = vmatprep.subr.mxu0 0.0
  %2868 = vmatpush1.msra.mxu0 0.0
  %2869 = vmatprep.subr.mxu0 0.0
  %2870 = vmatpush1.msra.mxu0 0.0
  %2871 = vmatprep.subr.mxu0 0.0
  %2872 = vmatpush1.msra.mxu0 0.0
  %2873 = vmatprep.subr.mxu0 0.0
  %2874 = vmatpush1.msra.mxu0 %v2756
  %2875 = vmatprep.subr.mxu0 0.0
  %2876 = vmatpush1.msra.mxu0 %v2755
  %2877 = vmatprep.subr.mxu0 0.0
  %2878 = vmatpush2.msra.mxu0 0.0
  %2879 = vmatprep.subr.mxu0 0.0
  %2880 = vmatpush2.msra.mxu0 0.0
  %2881 = vmatprep.subr.mxu0 0.0
  %2882 = vmatpush2.msra.mxu0 0.0
  %2883 = vmatprep.subr.mxu0 0.0
  %2884 = vmatpush2.msra.mxu0 0.0
  %2885 = vmatprep.subr.mxu0 0.0
  %2886 = vmatpush2.msra.mxu0 0.0
  %2887 = vmatprep.subr.mxu0 0.0
  %2888 = vmatpush2.msra.mxu0 0.0
  %2889 = vmatprep.subr.mxu0 0.0
  %2890 = vmatpush2.msra.mxu0 0.0
  %2891 = vmatprep.subr.mxu0 0.0
  %2892 = vmatpush2.msra.mxu0 0.0
  %2893 = vmatprep.subr.mxu0 0.0
  %2894 = vmatpush2.msra.mxu0 0.0
  %2895 = vmatprep.subr.mxu0 0.0
  %2896 = vmatpush2.msra.mxu0 0.0
  %2897 = vmatprep.subr.mxu0 0.0
  %2898 = vmatpush2.msra.mxu0 0.0
  %2899 = vmatprep.subr.mxu0 0.0
  %2900 = vmatpush2.msra.mxu0 0.0
  %2901 = vmatprep.subr.mxu0 0.0
  %2902 = vmatpush2.msra.mxu0 0.0
  %2903 = vmatprep.subr.mxu0 0.0
  %2904 = vmatpush2.msra.mxu0 0.0
  %2905 = vmatprep.subr.mxu0 0.0
  %2906 = vmatpush2.msra.mxu0 0.0
  %2907 = vmatprep.subr.mxu0 0.0
  %2908 = vmatpush2.msra.mxu0 0.0
  %2909 = vmatprep.mubr.f32.mxu0 0.0
  %2910 = vmatmul.mubr.f32.gmra.mxu0 %v2843
  %v2911 = vpop.f32.mrf.mxu0
  %v2912 = vadd.f32 %v2839, %v2911
  %v2913 = vpop.f32.mrf.mxu0
  %2914 = vdwg.mxu0
  %s2915 = scalar_lea.vmem %s7, 16
  %v2916 = vld [vmem:[%s2915] sm:$0xff]
  %2917 = vrot.lane.b32.xlu0 %v2755, 124
  %v2918 = vpop.permute.xlu0 %2917
  %2919 = vrot.lane.b32.xlu0 %v2756, 124
  %v2920 = vpop.permute.xlu0 %2919
  %v2924 = vsel %vm2768, %v2916, 0
  %2926 = vmatprep.subr.mxu0 0.0
  %2927 = vmatpush1.msra.mxu0 0.0
  %2928 = vmatprep.subr.mxu0 0.0
  %2929 = vmatpush1.msra.mxu0 0.0
  %2930 = vmatprep.subr.mxu0 0.0
  %2931 = vmatpush1.msra.mxu0 0.0
  %2932 = vmatprep.subr.mxu0 0.0
  %2933 = vmatpush1.msra.mxu0 0.0
  %2934 = vmatprep.subr.mxu0 0.0
  %2935 = vmatpush1.msra.mxu0 0.0
  %2936 = vmatprep.subr.mxu0 0.0
  %2937 = vmatpush1.msra.mxu0 0.0
  %2938 = vmatprep.subr.mxu0 0.0
  %2939 = vmatpush1.msra.mxu0 0.0
  %2940 = vmatprep.subr.mxu0 0.0
  %2941 = vmatpush1.msra.mxu0 0.0
  %2942 = vmatprep.subr.mxu0 0.0
  %2943 = vmatpush1.msra.mxu0 0.0
  %2944 = vmatprep.subr.mxu0 0.0
  %2945 = vmatpush1.msra.mxu0 0.0
  %2946 = vmatprep.subr.mxu0 0.0
  %2947 = vmatpush1.msra.mxu0 0.0
  %2948 = vmatprep.subr.mxu0 0.0
  %2949 = vmatpush1.msra.mxu0 0.0
  %2950 = vmatprep.subr.mxu0 0.0
  %2951 = vmatpush1.msra.mxu0 0.0
  %2952 = vmatprep.subr.mxu0 0.0
  %2953 = vmatpush1.msra.mxu0 0.0
  %2954 = vmatprep.subr.mxu0 0.0
  %2955 = vmatpush1.msra.mxu0 %v2920
  %2956 = vmatprep.subr.mxu0 0.0
  %2957 = vmatpush1.msra.mxu0 %v2918
  %2958 = vmatprep.subr.mxu0 0.0
  %2959 = vmatpush2.msra.mxu0 0.0
  %2960 = vmatprep.subr.mxu0 0.0
  %2961 = vmatpush2.msra.mxu0 0.0
  %2962 = vmatprep.subr.mxu0 0.0
  %2963 = vmatpush2.msra.mxu0 0.0
  %2964 = vmatprep.subr.mxu0 0.0
  %2965 = vmatpush2.msra.mxu0 0.0
  %2966 = vmatprep.subr.mxu0 0.0
  %2967 = vmatpush2.msra.mxu0 0.0
  %2968 = vmatprep.subr.mxu0 0.0
  %2969 = vmatpush2.msra.mxu0 0.0
  %2970 = vmatprep.subr.mxu0 0.0
  %2971 = vmatpush2.msra.mxu0 0.0
  %2972 = vmatprep.subr.mxu0 0.0
  %2973 = vmatpush2.msra.mxu0 0.0
  %2974 = vmatprep.subr.mxu0 0.0
  %2975 = vmatpush2.msra.mxu0 0.0
  %2976 = vmatprep.subr.mxu0 0.0
  %2977 = vmatpush2.msra.mxu0 0.0
  %2978 = vmatprep.subr.mxu0 0.0
  %2979 = vmatpush2.msra.mxu0 0.0
  %2980 = vmatprep.subr.mxu0 0.0
  %2981 = vmatpush2.msra.mxu0 0.0
  %2982 = vmatprep.subr.mxu0 0.0
  %2983 = vmatpush2.msra.mxu0 0.0
  %2984 = vmatprep.subr.mxu0 0.0
  %2985 = vmatpush2.msra.mxu0 0.0
  %2986 = vmatprep.subr.mxu0 0.0
  %2987 = vmatpush2.msra.mxu0 0.0
  %2988 = vmatprep.subr.mxu0 0.0
  %2989 = vmatpush2.msra.mxu0 0.0
  %2990 = vmatprep.mubr.f32.mxu0 0.0
  %2991 = vmatmul.mubr.f32.gmra.mxu0 %v2924
  %v2992 = vpop.f32.mrf.mxu0
  %v2993 = vadd.f32 0.0, %v2992
  %v2994 = vpop.f32.mrf.mxu0
  %2995 = vdwg.mxu0
  %v2996 = vadd.f32 %v2912, %v2993
  %s2997 = scalar_lea.vmem %s7, 24
  %v2998 = vld [vmem:[%s2997] sm:$0xff]
  %2999 = vrot.lane.b32.xlu0 %v2755, 122
  %v3000 = vpop.permute.xlu0 %2999
  %3001 = vrot.lane.b32.xlu0 %v2756, 122
  %v3002 = vpop.permute.xlu0 %3001
  %v3006 = vsel %vm2768, %v2998, 0
  %3008 = vmatprep.subr.mxu0 0.0
  %3009 = vmatpush1.msra.mxu0 0.0
  %3010 = vmatprep.subr.mxu0 0.0
  %3011 = vmatpush1.msra.mxu0 0.0
  %3012 = vmatprep.subr.mxu0 0.0
  %3013 = vmatpush1.msra.mxu0 0.0
  %3014 = vmatprep.subr.mxu0 0.0
  %3015 = vmatpush1.msra.mxu0 0.0
  %3016 = vmatprep.subr.mxu0 0.0
  %3017 = vmatpush1.msra.mxu0 0.0
  %3018 = vmatprep.subr.mxu0 0.0
  %3019 = vmatpush1.msra.mxu0 0.0
  %3020 = vmatprep.subr.mxu0 0.0
  %3021 = vmatpush1.msra.mxu0 0.0
  %3022 = vmatprep.subr.mxu0 0.0
  %3023 = vmatpush1.msra.mxu0 0.0
  %3024 = vmatprep.subr.mxu0 0.0
  %3025 = vmatpush1.msra.mxu0 0.0
  %3026 = vmatprep.subr.mxu0 0.0
  %3027 = vmatpush1.msra.mxu0 0.0
  %3028 = vmatprep.subr.mxu0 0.0
  %3029 = vmatpush1.msra.mxu0 0.0
  %3030 = vmatprep.subr.mxu0 0.0
  %3031 = vmatpush1.msra.mxu0 0.0
  %3032 = vmatprep.subr.mxu0 0.0
  %3033 = vmatpush1.msra.mxu0 0.0
  %3034 = vmatprep.subr.mxu0 0.0
  %3035 = vmatpush1.msra.mxu0 0.0
  %3036 = vmatprep.subr.mxu0 0.0
  %3037 = vmatpush1.msra.mxu0 %v3002
  %3038 = vmatprep.subr.mxu0 0.0
  %3039 = vmatpush1.msra.mxu0 %v3000
  %3040 = vmatprep.subr.mxu0 0.0
  %3041 = vmatpush2.msra.mxu0 0.0
  %3042 = vmatprep.subr.mxu0 0.0
  %3043 = vmatpush2.msra.mxu0 0.0
  %3044 = vmatprep.subr.mxu0 0.0
  %3045 = vmatpush2.msra.mxu0 0.0
  %3046 = vmatprep.subr.mxu0 0.0
  %3047 = vmatpush2.msra.mxu0 0.0
  %3048 = vmatprep.subr.mxu0 0.0
  %3049 = vmatpush2.msra.mxu0 0.0
  %3050 = vmatprep.subr.mxu0 0.0
  %3051 = vmatpush2.msra.mxu0 0.0
  %3052 = vmatprep.subr.mxu0 0.0
  %3053 = vmatpush2.msra.mxu0 0.0
  %3054 = vmatprep.subr.mxu0 0.0
  %3055 = vmatpush2.msra.mxu0 0.0
  %3056 = vmatprep.subr.mxu0 0.0
  %3057 = vmatpush2.msra.mxu0 0.0
  %3058 = vmatprep.subr.mxu0 0.0
  %3059 = vmatpush2.msra.mxu0 0.0
  %3060 = vmatprep.subr.mxu0 0.0
  %3061 = vmatpush2.msra.mxu0 0.0
  %3062 = vmatprep.subr.mxu0 0.0
  %3063 = vmatpush2.msra.mxu0 0.0
  %3064 = vmatprep.subr.mxu0 0.0
  %3065 = vmatpush2.msra.mxu0 0.0
  %3066 = vmatprep.subr.mxu0 0.0
  %3067 = vmatpush2.msra.mxu0 0.0
  %3068 = vmatprep.subr.mxu0 0.0
  %3069 = vmatpush2.msra.mxu0 0.0
  %3070 = vmatprep.subr.mxu0 0.0
  %3071 = vmatpush2.msra.mxu0 0.0
  %3072 = vmatprep.mubr.f32.mxu0 0.0
  %3073 = vmatmul.mubr.f32.gmra.mxu0 %v3006
  %v3074 = vpop.f32.mrf.mxu0
  %v3075 = vadd.f32 0.0, %v3074
  %v3076 = vpop.f32.mrf.mxu0
  %3077 = vdwg.mxu0
  %v3078 = vadd.f32 %v2996, %v3075
  %s3079 = scalar_lea.vmem %s7, 32
  %v3080 = vld [vmem:[%s3079] sm:$0xff]
  %3081 = vrot.lane.b32.xlu0 %v2755, 120
  %v3082 = vpop.permute.xlu0 %3081
  %3083 = vrot.lane.b32.xlu0 %v2756, 120
  %v3084 = vpop.permute.xlu0 %3083
  %v3088 = vsel %vm2768, %v3080, 0
  %3090 = vmatprep.subr.mxu0 0.0
  %3091 = vmatpush1.msra.mxu0 0.0
  %3092 = vmatprep.subr.mxu0 0.0
  %3093 = vmatpush1.msra.mxu0 0.0
  %3094 = vmatprep.subr.mxu0 0.0
  %3095 = vmatpush1.msra.mxu0 0.0
  %3096 = vmatprep.subr.mxu0 0.0
  %3097 = vmatpush1.msra.mxu0 0.0
  %3098 = vmatprep.subr.mxu0 0.0
  %3099 = vmatpush1.msra.mxu0 0.0
  %3100 = vmatprep.subr.mxu0 0.0
  %3101 = vmatpush1.msra.mxu0 0.0
  %3102 = vmatprep.subr.mxu0 0.0
  %3103 = vmatpush1.msra.mxu0 0.0
  %3104 = vmatprep.subr.mxu0 0.0
  %3105 = vmatpush1.msra.mxu0 0.0
  %3106 = vmatprep.subr.mxu0 0.0
  %3107 = vmatpush1.msra.mxu0 0.0
  %3108 = vmatprep.subr.mxu0 0.0
  %3109 = vmatpush1.msra.mxu0 0.0
  %3110 = vmatprep.subr.mxu0 0.0
  %3111 = vmatpush1.msra.mxu0 0.0
  %3112 = vmatprep.subr.mxu0 0.0
  %3113 = vmatpush1.msra.mxu0 0.0
  %3114 = vmatprep.subr.mxu0 0.0
  %3115 = vmatpush1.msra.mxu0 0.0
  %3116 = vmatprep.subr.mxu0 0.0
  %3117 = vmatpush1.msra.mxu0 0.0
  %3118 = vmatprep.subr.mxu0 0.0
  %3119 = vmatpush1.msra.mxu0 %v3084
  %3120 = vmatprep.subr.mxu0 0.0
  %3121 = vmatpush1.msra.mxu0 %v3082
  %3122 = vmatprep.subr.mxu0 0.0
  %3123 = vmatpush2.msra.mxu0 0.0
  %3124 = vmatprep.subr.mxu0 0.0
  %3125 = vmatpush2.msra.mxu0 0.0
  %3126 = vmatprep.subr.mxu0 0.0
  %3127 = vmatpush2.msra.mxu0 0.0
  %3128 = vmatprep.subr.mxu0 0.0
  %3129 = vmatpush2.msra.mxu0 0.0
  %3130 = vmatprep.subr.mxu0 0.0
  %3131 = vmatpush2.msra.mxu0 0.0
  %3132 = vmatprep.subr.mxu0 0.0
  %3133 = vmatpush2.msra.mxu0 0.0
  %3134 = vmatprep.subr.mxu0 0.0
  %3135 = vmatpush2.msra.mxu0 0.0
  %3136 = vmatprep.subr.mxu0 0.0
  %3137 = vmatpush2.msra.mxu0 0.0
  %3138 = vmatprep.subr.mxu0 0.0
  %3139 = vmatpush2.msra.mxu0 0.0
  %3140 = vmatprep.subr.mxu0 0.0
  %3141 = vmatpush2.msra.mxu0 0.0
  %3142 = vmatprep.subr.mxu0 0.0
  %3143 = vmatpush2.msra.mxu0 0.0
  %3144 = vmatprep.subr.mxu0 0.0
  %3145 = vmatpush2.msra.mxu0 0.0
  %3146 = vmatprep.subr.mxu0 0.0
  %3147 = vmatpush2.msra.mxu0 0.0
  %3148 = vmatprep.subr.mxu0 0.0
  %3149 = vmatpush2.msra.mxu0 0.0
  %3150 = vmatprep.subr.mxu0 0.0
  %3151 = vmatpush2.msra.mxu0 0.0
  %3152 = vmatprep.subr.mxu0 0.0
  %3153 = vmatpush2.msra.mxu0 0.0
  %3154 = vmatprep.mubr.f32.mxu0 0.0
  %3155 = vmatmul.mubr.f32.gmra.mxu0 %v3088
  %v3156 = vpop.f32.mrf.mxu0
  %v3157 = vadd.f32 0.0, %v3156
  %v3158 = vpop.f32.mrf.mxu0
  %3159 = vdwg.mxu0
  %v3160 = vadd.f32 %v3078, %v3157
  %s3161 = scalar_lea.vmem %s7, 40
  %v3162 = vld [vmem:[%s3161] sm:$0xff]
  %3163 = vrot.lane.b32.xlu0 %v2755, 118
  %v3164 = vpop.permute.xlu0 %3163
  %3165 = vrot.lane.b32.xlu0 %v2756, 118
  %v3166 = vpop.permute.xlu0 %3165
  %v3170 = vsel %vm2768, %v3162, 0
  %3172 = vmatprep.subr.mxu0 0.0
  %3173 = vmatpush1.msra.mxu0 0.0
  %3174 = vmatprep.subr.mxu0 0.0
  %3175 = vmatpush1.msra.mxu0 0.0
  %3176 = vmatprep.subr.mxu0 0.0
  %3177 = vmatpush1.msra.mxu0 0.0
  %3178 = vmatprep.subr.mxu0 0.0
  %3179 = vmatpush1.msra.mxu0 0.0
  %3180 = vmatprep.subr.mxu0 0.0
  %3181 = vmatpush1.msra.mxu0 0.0
  %3182 = vmatprep.subr.mxu0 0.0
  %3183 = vmatpush1.msra.mxu0 0.0
  %3184 = vmatprep.subr.mxu0 0.0
  %3185 = vmatpush1.msra.mxu0 0.0
  %3186 = vmatprep.subr.mxu0 0.0
  %3187 = vmatpush1.msra.mxu0 0.0
  %3188 = vmatprep.subr.mxu0 0.0
  %3189 = vmatpush1.msra.mxu0 0.0
  %3190 = vmatprep.subr.mxu0 0.0
  %3191 = vmatpush1.msra.mxu0 0.0
  %3192 = vmatprep.subr.mxu0 0.0
  %3193 = vmatpush1.msra.mxu0 0.0
  %3194 = vmatprep.subr.mxu0 0.0
  %3195 = vmatpush1.msra.mxu0 0.0
  %3196 = vmatprep.subr.mxu0 0.0
  %3197 = vmatpush1.msra.mxu0 0.0
  %3198 = vmatprep.subr.mxu0 0.0
  %3199 = vmatpush1.msra.mxu0 0.0
  %3200 = vmatprep.subr.mxu0 0.0
  %3201 = vmatpush1.msra.mxu0 %v3166
  %3202 = vmatprep.subr.mxu0 0.0
  %3203 = vmatpush1.msra.mxu0 %v3164
  %3204 = vmatprep.subr.mxu0 0.0
  %3205 = vmatpush2.msra.mxu0 0.0
  %3206 = vmatprep.subr.mxu0 0.0
  %3207 = vmatpush2.msra.mxu0 0.0
  %3208 = vmatprep.subr.mxu0 0.0
  %3209 = vmatpush2.msra.mxu0 0.0
  %3210 = vmatprep.subr.mxu0 0.0
  %3211 = vmatpush2.msra.mxu0 0.0
  %3212 = vmatprep.subr.mxu0 0.0
  %3213 = vmatpush2.msra.mxu0 0.0
  %3214 = vmatprep.subr.mxu0 0.0
  %3215 = vmatpush2.msra.mxu0 0.0
  %3216 = vmatprep.subr.mxu0 0.0
  %3217 = vmatpush2.msra.mxu0 0.0
  %3218 = vmatprep.subr.mxu0 0.0
  %3219 = vmatpush2.msra.mxu0 0.0
  %3220 = vmatprep.subr.mxu0 0.0
  %3221 = vmatpush2.msra.mxu0 0.0
  %3222 = vmatprep.subr.mxu0 0.0
  %3223 = vmatpush2.msra.mxu0 0.0
  %3224 = vmatprep.subr.mxu0 0.0
  %3225 = vmatpush2.msra.mxu0 0.0
  %3226 = vmatprep.subr.mxu0 0.0
  %3227 = vmatpush2.msra.mxu0 0.0
  %3228 = vmatprep.subr.mxu0 0.0
  %3229 = vmatpush2.msra.mxu0 0.0
  %3230 = vmatprep.subr.mxu0 0.0
  %3231 = vmatpush2.msra.mxu0 0.0
  %3232 = vmatprep.subr.mxu0 0.0
  %3233 = vmatpush2.msra.mxu0 0.0
  %3234 = vmatprep.subr.mxu0 0.0
  %3235 = vmatpush2.msra.mxu0 0.0
  %3236 = vmatprep.mubr.f32.mxu0 0.0
  %3237 = vmatmul.mubr.f32.gmra.mxu0 %v3170
  %v3238 = vpop.f32.mrf.mxu0
  %v3239 = vadd.f32 0.0, %v3238
  %v3240 = vpop.f32.mrf.mxu0
  %3241 = vdwg.mxu0
  %v3242 = vadd.f32 %v3160, %v3239
  %s3243 = scalar_lea.vmem %s7, 48
  %v3244 = vld [vmem:[%s3243] sm:$0xff]
  %3245 = vrot.lane.b32.xlu0 %v2755, 116
  %v3246 = vpop.permute.xlu0 %3245
  %3247 = vrot.lane.b32.xlu0 %v2756, 116
  %v3248 = vpop.permute.xlu0 %3247
  %v3252 = vsel %vm2768, %v3244, 0
  %3254 = vmatprep.subr.mxu0 0.0
  %3255 = vmatpush1.msra.mxu0 0.0
  %3256 = vmatprep.subr.mxu0 0.0
  %3257 = vmatpush1.msra.mxu0 0.0
  %3258 = vmatprep.subr.mxu0 0.0
  %3259 = vmatpush1.msra.mxu0 0.0
  %3260 = vmatprep.subr.mxu0 0.0
  %3261 = vmatpush1.msra.mxu0 0.0
  %3262 = vmatprep.subr.mxu0 0.0
  %3263 = vmatpush1.msra.mxu0 0.0
  %3264 = vmatprep.subr.mxu0 0.0
  %3265 = vmatpush1.msra.mxu0 0.0
  %3266 = vmatprep.subr.mxu0 0.0
  %3267 = vmatpush1.msra.mxu0 0.0
  %3268 = vmatprep.subr.mxu0 0.0
  %3269 = vmatpush1.msra.mxu0 0.0
  %3270 = vmatprep.subr.mxu0 0.0
  %3271 = vmatpush1.msra.mxu0 0.0
  %3272 = vmatprep.subr.mxu0 0.0
  %3273 = vmatpush1.msra.mxu0 0.0
  %3274 = vmatprep.subr.mxu0 0.0
  %3275 = vmatpush1.msra.mxu0 0.0
  %3276 = vmatprep.subr.mxu0 0.0
  %3277 = vmatpush1.msra.mxu0 0.0
  %3278 = vmatprep.subr.mxu0 0.0
  %3279 = vmatpush1.msra.mxu0 0.0
  %3280 = vmatprep.subr.mxu0 0.0
  %3281 = vmatpush1.msra.mxu0 0.0
  %3282 = vmatprep.subr.mxu0 0.0
  %3283 = vmatpush1.msra.mxu0 %v3248
  %3284 = vmatprep.subr.mxu0 0.0
  %3285 = vmatpush1.msra.mxu0 %v3246
  %3286 = vmatprep.subr.mxu0 0.0
  %3287 = vmatpush2.msra.mxu0 0.0
  %3288 = vmatprep.subr.mxu0 0.0
  %3289 = vmatpush2.msra.mxu0 0.0
  %3290 = vmatprep.subr.mxu0 0.0
  %3291 = vmatpush2.msra.mxu0 0.0
  %3292 = vmatprep.subr.mxu0 0.0
  %3293 = vmatpush2.msra.mxu0 0.0
  %3294 = vmatprep.subr.mxu0 0.0
  %3295 = vmatpush2.msra.mxu0 0.0
  %3296 = vmatprep.subr.mxu0 0.0
  %3297 = vmatpush2.msra.mxu0 0.0
  %3298 = vmatprep.subr.mxu0 0.0
  %3299 = vmatpush2.msra.mxu0 0.0
  %3300 = vmatprep.subr.mxu0 0.0
  %3301 = vmatpush2.msra.mxu0 0.0
  %3302 = vmatprep.subr.mxu0 0.0
  %3303 = vmatpush2.msra.mxu0 0.0
  %3304 = vmatprep.subr.mxu0 0.0
  %3305 = vmatpush2.msra.mxu0 0.0
  %3306 = vmatprep.subr.mxu0 0.0
  %3307 = vmatpush2.msra.mxu0 0.0
  %3308 = vmatprep.subr.mxu0 0.0
  %3309 = vmatpush2.msra.mxu0 0.0
  %3310 = vmatprep.subr.mxu0 0.0
  %3311 = vmatpush2.msra.mxu0 0.0
  %3312 = vmatprep.subr.mxu0 0.0
  %3313 = vmatpush2.msra.mxu0 0.0
  %3314 = vmatprep.subr.mxu0 0.0
  %3315 = vmatpush2.msra.mxu0 0.0
  %3316 = vmatprep.subr.mxu0 0.0
  %3317 = vmatpush2.msra.mxu0 0.0
  %3318 = vmatprep.mubr.f32.mxu0 0.0
  %3319 = vmatmul.mubr.f32.gmra.mxu0 %v3252
  %v3320 = vpop.f32.mrf.mxu0
  %v3321 = vadd.f32 0.0, %v3320
  %v3322 = vpop.f32.mrf.mxu0
  %3323 = vdwg.mxu0
  %v3324 = vadd.f32 %v3242, %v3321
  %s3325 = scalar_lea.vmem %s7, 56
  %v3326 = vld [vmem:[%s3325] sm:$0xff]
  %3327 = vrot.lane.b32.xlu0 %v2755, 114
  %v3328 = vpop.permute.xlu0 %3327
  %3329 = vrot.lane.b32.xlu0 %v2756, 114
  %v3330 = vpop.permute.xlu0 %3329
  %v3334 = vsel %vm2768, %v3326, 0
  %3336 = vmatprep.subr.mxu0 0.0
  %3337 = vmatpush1.msra.mxu0 0.0
  %3338 = vmatprep.subr.mxu0 0.0
  %3339 = vmatpush1.msra.mxu0 0.0
  %3340 = vmatprep.subr.mxu0 0.0
  %3341 = vmatpush1.msra.mxu0 0.0
  %3342 = vmatprep.subr.mxu0 0.0
  %3343 = vmatpush1.msra.mxu0 0.0
  %3344 = vmatprep.subr.mxu0 0.0
  %3345 = vmatpush1.msra.mxu0 0.0
  %3346 = vmatprep.subr.mxu0 0.0
  %3347 = vmatpush1.msra.mxu0 0.0
  %3348 = vmatprep.subr.mxu0 0.0
  %3349 = vmatpush1.msra.mxu0 0.0
  %3350 = vmatprep.subr.mxu0 0.0
  %3351 = vmatpush1.msra.mxu0 0.0
  %3352 = vmatprep.subr.mxu0 0.0
  %3353 = vmatpush1.msra.mxu0 0.0
  %3354 = vmatprep.subr.mxu0 0.0
  %3355 = vmatpush1.msra.mxu0 0.0
  %3356 = vmatprep.subr.mxu0 0.0
  %3357 = vmatpush1.msra.mxu0 0.0
  %3358 = vmatprep.subr.mxu0 0.0
  %3359 = vmatpush1.msra.mxu0 0.0
  %3360 = vmatprep.subr.mxu0 0.0
  %3361 = vmatpush1.msra.mxu0 0.0
  %3362 = vmatprep.subr.mxu0 0.0
  %3363 = vmatpush1.msra.mxu0 0.0
  %3364 = vmatprep.subr.mxu0 0.0
  %3365 = vmatpush1.msra.mxu0 %v3330
  %3366 = vmatprep.subr.mxu0 0.0
  %3367 = vmatpush1.msra.mxu0 %v3328
  %3368 = vmatprep.subr.mxu0 0.0
  %3369 = vmatpush2.msra.mxu0 0.0
  %3370 = vmatprep.subr.mxu0 0.0
  %3371 = vmatpush2.msra.mxu0 0.0
  %3372 = vmatprep.subr.mxu0 0.0
  %3373 = vmatpush2.msra.mxu0 0.0
  %3374 = vmatprep.subr.mxu0 0.0
  %3375 = vmatpush2.msra.mxu0 0.0
  %3376 = vmatprep.subr.mxu0 0.0
  %3377 = vmatpush2.msra.mxu0 0.0
  %3378 = vmatprep.subr.mxu0 0.0
  %3379 = vmatpush2.msra.mxu0 0.0
  %3380 = vmatprep.subr.mxu0 0.0
  %3381 = vmatpush2.msra.mxu0 0.0
  %3382 = vmatprep.subr.mxu0 0.0
  %3383 = vmatpush2.msra.mxu0 0.0
  %3384 = vmatprep.subr.mxu0 0.0
  %3385 = vmatpush2.msra.mxu0 0.0
  %3386 = vmatprep.subr.mxu0 0.0
  %3387 = vmatpush2.msra.mxu0 0.0
  %3388 = vmatprep.subr.mxu0 0.0
  %3389 = vmatpush2.msra.mxu0 0.0
  %3390 = vmatprep.subr.mxu0 0.0
  %3391 = vmatpush2.msra.mxu0 0.0
  %3392 = vmatprep.subr.mxu0 0.0
  %3393 = vmatpush2.msra.mxu0 0.0
  %3394 = vmatprep.subr.mxu0 0.0
  %3395 = vmatpush2.msra.mxu0 0.0
  %3396 = vmatprep.subr.mxu0 0.0
  %3397 = vmatpush2.msra.mxu0 0.0
  %3398 = vmatprep.subr.mxu0 0.0
  %3399 = vmatpush2.msra.mxu0 0.0
  %3400 = vmatprep.mubr.f32.mxu0 0.0
  %3401 = vmatmul.mubr.f32.gmra.mxu0 %v3334
  %v3402 = vpop.f32.mrf.mxu0
  %v3403 = vadd.f32 0.0, %v3402
  %v3404 = vpop.f32.mrf.mxu0
  %3405 = vdwg.mxu0
  %v3406 = vadd.f32 %v3324, %v3403
  %s3407 = scalar_lea.vmem %s7, 64
  %v3408 = vld [vmem:[%s3407] sm:$0xff]
  %3409 = vrot.lane.b32.xlu0 %v2755, 112
  %v3410 = vpop.permute.xlu0 %3409
  %3411 = vrot.lane.b32.xlu0 %v2756, 112
  %v3412 = vpop.permute.xlu0 %3411
  %v3416 = vsel %vm2768, %v3408, 0
  %3418 = vmatprep.subr.mxu0 0.0
  %3419 = vmatpush1.msra.mxu0 0.0
  %3420 = vmatprep.subr.mxu0 0.0
  %3421 = vmatpush1.msra.mxu0 0.0
  %3422 = vmatprep.subr.mxu0 0.0
  %3423 = vmatpush1.msra.mxu0 0.0
  %3424 = vmatprep.subr.mxu0 0.0
  %3425 = vmatpush1.msra.mxu0 0.0
  %3426 = vmatprep.subr.mxu0 0.0
  %3427 = vmatpush1.msra.mxu0 0.0
  %3428 = vmatprep.subr.mxu0 0.0
  %3429 = vmatpush1.msra.mxu0 0.0
  %3430 = vmatprep.subr.mxu0 0.0
  %3431 = vmatpush1.msra.mxu0 0.0
  %3432 = vmatprep.subr.mxu0 0.0
  %3433 = vmatpush1.msra.mxu0 0.0
  %3434 = vmatprep.subr.mxu0 0.0
  %3435 = vmatpush1.msra.mxu0 0.0
  %3436 = vmatprep.subr.mxu0 0.0
  %3437 = vmatpush1.msra.mxu0 0.0
  %3438 = vmatprep.subr.mxu0 0.0
  %3439 = vmatpush1.msra.mxu0 0.0
  %3440 = vmatprep.subr.mxu0 0.0
  %3441 = vmatpush1.msra.mxu0 0.0
  %3442 = vmatprep.subr.mxu0 0.0
  %3443 = vmatpush1.msra.mxu0 0.0
  %3444 = vmatprep.subr.mxu0 0.0
  %3445 = vmatpush1.msra.mxu0 0.0
  %3446 = vmatprep.subr.mxu0 0.0
  %3447 = vmatpush1.msra.mxu0 %v3412
  %3448 = vmatprep.subr.mxu0 0.0
  %3449 = vmatpush1.msra.mxu0 %v3410
  %3450 = vmatprep.subr.mxu0 0.0
  %3451 = vmatpush2.msra.mxu0 0.0
  %3452 = vmatprep.subr.mxu0 0.0
  %3453 = vmatpush2.msra.mxu0 0.0
  %3454 = vmatprep.subr.mxu0 0.0
  %3455 = vmatpush2.msra.mxu0 0.0
  %3456 = vmatprep.subr.mxu0 0.0
  %3457 = vmatpush2.msra.mxu0 0.0
  %3458 = vmatprep.subr.mxu0 0.0
  %3459 = vmatpush2.msra.mxu0 0.0
  %3460 = vmatprep.subr.mxu0 0.0
  %3461 = vmatpush2.msra.mxu0 0.0
  %3462 = vmatprep.subr.mxu0 0.0
  %3463 = vmatpush2.msra.mxu0 0.0
  %3464 = vmatprep.subr.mxu0 0.0
  %3465 = vmatpush2.msra.mxu0 0.0
  %3466 = vmatprep.subr.mxu0 0.0
  %3467 = vmatpush2.msra.mxu0 0.0
  %3468 = vmatprep.subr.mxu0 0.0
  %3469 = vmatpush2.msra.mxu0 0.0
  %3470 = vmatprep.subr.mxu0 0.0
  %3471 = vmatpush2.msra.mxu0 0.0
  %3472 = vmatprep.subr.mxu0 0.0
  %3473 = vmatpush2.msra.mxu0 0.0
  %3474 = vmatprep.subr.mxu0 0.0
  %3475 = vmatpush2.msra.mxu0 0.0
  %3476 = vmatprep.subr.mxu0 0.0
  %3477 = vmatpush2.msra.mxu0 0.0
  %3478 = vmatprep.subr.mxu0 0.0
  %3479 = vmatpush2.msra.mxu0 0.0
  %3480 = vmatprep.subr.mxu0 0.0
  %3481 = vmatpush2.msra.mxu0 0.0
  %3482 = vmatprep.mubr.f32.mxu0 0.0
  %3483 = vmatmul.mubr.f32.gmra.mxu0 %v3416
  %v3484 = vpop.f32.mrf.mxu0
  %v3485 = vadd.f32 0.0, %v3484
  %v3486 = vpop.f32.mrf.mxu0
  %3487 = vdwg.mxu0
  %v3488 = vadd.f32 %v3406, %v3485
  %s3489 = scalar_lea.vmem %s7, 72
  %v3490 = vld [vmem:[%s3489] sm:$0xff]
  %3491 = vrot.lane.b32.xlu0 %v2755, 110
  %v3492 = vpop.permute.xlu0 %3491
  %3493 = vrot.lane.b32.xlu0 %v2756, 110
  %v3494 = vpop.permute.xlu0 %3493
  %v3498 = vsel %vm2768, %v3490, 0
  %3500 = vmatprep.subr.mxu0 0.0
  %3501 = vmatpush1.msra.mxu0 0.0
  %3502 = vmatprep.subr.mxu0 0.0
  %3503 = vmatpush1.msra.mxu0 0.0
  %3504 = vmatprep.subr.mxu0 0.0
  %3505 = vmatpush1.msra.mxu0 0.0
  %3506 = vmatprep.subr.mxu0 0.0
  %3507 = vmatpush1.msra.mxu0 0.0
  %3508 = vmatprep.subr.mxu0 0.0
  %3509 = vmatpush1.msra.mxu0 0.0
  %3510 = vmatprep.subr.mxu0 0.0
  %3511 = vmatpush1.msra.mxu0 0.0
  %3512 = vmatprep.subr.mxu0 0.0
  %3513 = vmatpush1.msra.mxu0 0.0
  %3514 = vmatprep.subr.mxu0 0.0
  %3515 = vmatpush1.msra.mxu0 0.0
  %3516 = vmatprep.subr.mxu0 0.0
  %3517 = vmatpush1.msra.mxu0 0.0
  %3518 = vmatprep.subr.mxu0 0.0
  %3519 = vmatpush1.msra.mxu0 0.0
  %3520 = vmatprep.subr.mxu0 0.0
  %3521 = vmatpush1.msra.mxu0 0.0
  %3522 = vmatprep.subr.mxu0 0.0
  %3523 = vmatpush1.msra.mxu0 0.0
  %3524 = vmatprep.subr.mxu0 0.0
  %3525 = vmatpush1.msra.mxu0 0.0
  %3526 = vmatprep.subr.mxu0 0.0
  %3527 = vmatpush1.msra.mxu0 0.0
  %3528 = vmatprep.subr.mxu0 0.0
  %3529 = vmatpush1.msra.mxu0 %v3494
  %3530 = vmatprep.subr.mxu0 0.0
  %3531 = vmatpush1.msra.mxu0 %v3492
  %3532 = vmatprep.subr.mxu0 0.0
  %3533 = vmatpush2.msra.mxu0 0.0
  %3534 = vmatprep.subr.mxu0 0.0
  %3535 = vmatpush2.msra.mxu0 0.0
  %3536 = vmatprep.subr.mxu0 0.0
  %3537 = vmatpush2.msra.mxu0 0.0
  %3538 = vmatprep.subr.mxu0 0.0
  %3539 = vmatpush2.msra.mxu0 0.0
  %3540 = vmatprep.subr.mxu0 0.0
  %3541 = vmatpush2.msra.mxu0 0.0
  %3542 = vmatprep.subr.mxu0 0.0
  %3543 = vmatpush2.msra.mxu0 0.0
  %3544 = vmatprep.subr.mxu0 0.0
  %3545 = vmatpush2.msra.mxu0 0.0
  %3546 = vmatprep.subr.mxu0 0.0
  %3547 = vmatpush2.msra.mxu0 0.0
  %3548 = vmatprep.subr.mxu0 0.0
  %3549 = vmatpush2.msra.mxu0 0.0
  %3550 = vmatprep.subr.mxu0 0.0
  %3551 = vmatpush2.msra.mxu0 0.0
  %3552 = vmatprep.subr.mxu0 0.0
  %3553 = vmatpush2.msra.mxu0 0.0
  %3554 = vmatprep.subr.mxu0 0.0
  %3555 = vmatpush2.msra.mxu0 0.0
  %3556 = vmatprep.subr.mxu0 0.0
  %3557 = vmatpush2.msra.mxu0 0.0
  %3558 = vmatprep.subr.mxu0 0.0
  %3559 = vmatpush2.msra.mxu0 0.0
  %3560 = vmatprep.subr.mxu0 0.0
  %3561 = vmatpush2.msra.mxu0 0.0
  %3562 = vmatprep.subr.mxu0 0.0
  %3563 = vmatpush2.msra.mxu0 0.0
  %3564 = vmatprep.mubr.f32.mxu0 0.0
  %3565 = vmatmul.mubr.f32.gmra.mxu0 %v3498
  %v3566 = vpop.f32.mrf.mxu0
  %v3567 = vadd.f32 0.0, %v3566
  %v3568 = vpop.f32.mrf.mxu0
  %3569 = vdwg.mxu0
  %v3570 = vadd.f32 %v3488, %v3567
  %s3571 = scalar_lea.vmem %s7, 80
  %v3572 = vld [vmem:[%s3571] sm:$0xff]
  %3573 = vrot.lane.b32.xlu0 %v2755, 108
  %v3574 = vpop.permute.xlu0 %3573
  %3575 = vrot.lane.b32.xlu0 %v2756, 108
  %v3576 = vpop.permute.xlu0 %3575
  %v3580 = vsel %vm2768, %v3572, 0
  %3582 = vmatprep.subr.mxu0 0.0
  %3583 = vmatpush1.msra.mxu0 0.0
  %3584 = vmatprep.subr.mxu0 0.0
  %3585 = vmatpush1.msra.mxu0 0.0
  %3586 = vmatprep.subr.mxu0 0.0
  %3587 = vmatpush1.msra.mxu0 0.0
  %3588 = vmatprep.subr.mxu0 0.0
  %3589 = vmatpush1.msra.mxu0 0.0
  %3590 = vmatprep.subr.mxu0 0.0
  %3591 = vmatpush1.msra.mxu0 0.0
  %3592 = vmatprep.subr.mxu0 0.0
  %3593 = vmatpush1.msra.mxu0 0.0
  %3594 = vmatprep.subr.mxu0 0.0
  %3595 = vmatpush1.msra.mxu0 0.0
  %3596 = vmatprep.subr.mxu0 0.0
  %3597 = vmatpush1.msra.mxu0 0.0
  %3598 = vmatprep.subr.mxu0 0.0
  %3599 = vmatpush1.msra.mxu0 0.0
  %3600 = vmatprep.subr.mxu0 0.0
  %3601 = vmatpush1.msra.mxu0 0.0
  %3602 = vmatprep.subr.mxu0 0.0
  %3603 = vmatpush1.msra.mxu0 0.0
  %3604 = vmatprep.subr.mxu0 0.0
  %3605 = vmatpush1.msra.mxu0 0.0
  %3606 = vmatprep.subr.mxu0 0.0
  %3607 = vmatpush1.msra.mxu0 0.0
  %3608 = vmatprep.subr.mxu0 0.0
  %3609 = vmatpush1.msra.mxu0 0.0
  %3610 = vmatprep.subr.mxu0 0.0
  %3611 = vmatpush1.msra.mxu0 %v3576
  %3612 = vmatprep.subr.mxu0 0.0
  %3613 = vmatpush1.msra.mxu0 %v3574
  %3614 = vmatprep.subr.mxu0 0.0
  %3615 = vmatpush2.msra.mxu0 0.0
  %3616 = vmatprep.subr.mxu0 0.0
  %3617 = vmatpush2.msra.mxu0 0.0
  %3618 = vmatprep.subr.mxu0 0.0
  %3619 = vmatpush2.msra.mxu0 0.0
  %3620 = vmatprep.subr.mxu0 0.0
  %3621 = vmatpush2.msra.mxu0 0.0
  %3622 = vmatprep.subr.mxu0 0.0
  %3623 = vmatpush2.msra.mxu0 0.0
  %3624 = vmatprep.subr.mxu0 0.0
  %3625 = vmatpush2.msra.mxu0 0.0
  %3626 = vmatprep.subr.mxu0 0.0
  %3627 = vmatpush2.msra.mxu0 0.0
  %3628 = vmatprep.subr.mxu0 0.0
  %3629 = vmatpush2.msra.mxu0 0.0
  %3630 = vmatprep.subr.mxu0 0.0
  %3631 = vmatpush2.msra.mxu0 0.0
  %3632 = vmatprep.subr.mxu0 0.0
  %3633 = vmatpush2.msra.mxu0 0.0
  %3634 = vmatprep.subr.mxu0 0.0
  %3635 = vmatpush2.msra.mxu0 0.0
  %3636 = vmatprep.subr.mxu0 0.0
  %3637 = vmatpush2.msra.mxu0 0.0
  %3638 = vmatprep.subr.mxu0 0.0
  %3639 = vmatpush2.msra.mxu0 0.0
  %3640 = vmatprep.subr.mxu0 0.0
  %3641 = vmatpush2.msra.mxu0 0.0
  %3642 = vmatprep.subr.mxu0 0.0
  %3643 = vmatpush2.msra.mxu0 0.0
  %3644 = vmatprep.subr.mxu0 0.0
  %3645 = vmatpush2.msra.mxu0 0.0
  %3646 = vmatprep.mubr.f32.mxu0 0.0
  %3647 = vmatmul.mubr.f32.gmra.mxu0 %v3580
  %v3648 = vpop.f32.mrf.mxu0
  %v3649 = vadd.f32 0.0, %v3648
  %v3650 = vpop.f32.mrf.mxu0
  %3651 = vdwg.mxu0
  %v3652 = vadd.f32 %v3570, %v3649
  %s3653 = scalar_lea.vmem %s7, 88
  %v3654 = vld [vmem:[%s3653] sm:$0xff]
  %3655 = vrot.lane.b32.xlu0 %v2755, 106
  %v3656 = vpop.permute.xlu0 %3655
  %3657 = vrot.lane.b32.xlu0 %v2756, 106
  %v3658 = vpop.permute.xlu0 %3657
  %v3662 = vsel %vm2768, %v3654, 0
  %3664 = vmatprep.subr.mxu0 0.0
  %3665 = vmatpush1.msra.mxu0 0.0
  %3666 = vmatprep.subr.mxu0 0.0
  %3667 = vmatpush1.msra.mxu0 0.0
  %3668 = vmatprep.subr.mxu0 0.0
  %3669 = vmatpush1.msra.mxu0 0.0
  %3670 = vmatprep.subr.mxu0 0.0
  %3671 = vmatpush1.msra.mxu0 0.0
  %3672 = vmatprep.subr.mxu0 0.0
  %3673 = vmatpush1.msra.mxu0 0.0
  %3674 = vmatprep.subr.mxu0 0.0
  %3675 = vmatpush1.msra.mxu0 0.0
  %3676 = vmatprep.subr.mxu0 0.0
  %3677 = vmatpush1.msra.mxu0 0.0
  %3678 = vmatprep.subr.mxu0 0.0
  %3679 = vmatpush1.msra.mxu0 0.0
  %3680 = vmatprep.subr.mxu0 0.0
  %3681 = vmatpush1.msra.mxu0 0.0
  %3682 = vmatprep.subr.mxu0 0.0
  %3683 = vmatpush1.msra.mxu0 0.0
  %3684 = vmatprep.subr.mxu0 0.0
  %3685 = vmatpush1.msra.mxu0 0.0
  %3686 = vmatprep.subr.mxu0 0.0
  %3687 = vmatpush1.msra.mxu0 0.0
  %3688 = vmatprep.subr.mxu0 0.0
  %3689 = vmatpush1.msra.mxu0 0.0
  %3690 = vmatprep.subr.mxu0 0.0
  %3691 = vmatpush1.msra.mxu0 0.0
  %3692 = vmatprep.subr.mxu0 0.0
  %3693 = vmatpush1.msra.mxu0 %v3658
  %3694 = vmatprep.subr.mxu0 0.0
  %3695 = vmatpush1.msra.mxu0 %v3656
  %3696 = vmatprep.subr.mxu0 0.0
  %3697 = vmatpush2.msra.mxu0 0.0
  %3698 = vmatprep.subr.mxu0 0.0
  %3699 = vmatpush2.msra.mxu0 0.0
  %3700 = vmatprep.subr.mxu0 0.0
  %3701 = vmatpush2.msra.mxu0 0.0
  %3702 = vmatprep.subr.mxu0 0.0
  %3703 = vmatpush2.msra.mxu0 0.0
  %3704 = vmatprep.subr.mxu0 0.0
  %3705 = vmatpush2.msra.mxu0 0.0
  %3706 = vmatprep.subr.mxu0 0.0
  %3707 = vmatpush2.msra.mxu0 0.0
  %3708 = vmatprep.subr.mxu0 0.0
  %3709 = vmatpush2.msra.mxu0 0.0
  %3710 = vmatprep.subr.mxu0 0.0
  %3711 = vmatpush2.msra.mxu0 0.0
  %3712 = vmatprep.subr.mxu0 0.0
  %3713 = vmatpush2.msra.mxu0 0.0
  %3714 = vmatprep.subr.mxu0 0.0
  %3715 = vmatpush2.msra.mxu0 0.0
  %3716 = vmatprep.subr.mxu0 0.0
  %3717 = vmatpush2.msra.mxu0 0.0
  %3718 = vmatprep.subr.mxu0 0.0
  %3719 = vmatpush2.msra.mxu0 0.0
  %3720 = vmatprep.subr.mxu0 0.0
  %3721 = vmatpush2.msra.mxu0 0.0
  %3722 = vmatprep.subr.mxu0 0.0
  %3723 = vmatpush2.msra.mxu0 0.0
  %3724 = vmatprep.subr.mxu0 0.0
  %3725 = vmatpush2.msra.mxu0 0.0
  %3726 = vmatprep.subr.mxu0 0.0
  %3727 = vmatpush2.msra.mxu0 0.0
  %3728 = vmatprep.mubr.f32.mxu0 0.0
  %3729 = vmatmul.mubr.f32.gmra.mxu0 %v3662
  %v3730 = vpop.f32.mrf.mxu0
  %v3731 = vadd.f32 0.0, %v3730
  %v3732 = vpop.f32.mrf.mxu0
  %3733 = vdwg.mxu0
  %v3734 = vadd.f32 %v3652, %v3731
  %s3735 = scalar_lea.vmem %s7, 96
  %v3736 = vld [vmem:[%s3735] sm:$0xff]
  %3737 = vrot.lane.b32.xlu0 %v2755, 104
  %v3738 = vpop.permute.xlu0 %3737
  %3739 = vrot.lane.b32.xlu0 %v2756, 104
  %v3740 = vpop.permute.xlu0 %3739
  %v3744 = vsel %vm2768, %v3736, 0
  %3746 = vmatprep.subr.mxu0 0.0
  %3747 = vmatpush1.msra.mxu0 0.0
  %3748 = vmatprep.subr.mxu0 0.0
  %3749 = vmatpush1.msra.mxu0 0.0
  %3750 = vmatprep.subr.mxu0 0.0
  %3751 = vmatpush1.msra.mxu0 0.0
  %3752 = vmatprep.subr.mxu0 0.0
  %3753 = vmatpush1.msra.mxu0 0.0
  %3754 = vmatprep.subr.mxu0 0.0
  %3755 = vmatpush1.msra.mxu0 0.0
  %3756 = vmatprep.subr.mxu0 0.0
  %3757 = vmatpush1.msra.mxu0 0.0
  %3758 = vmatprep.subr.mxu0 0.0
  %3759 = vmatpush1.msra.mxu0 0.0
  %3760 = vmatprep.subr.mxu0 0.0
  %3761 = vmatpush1.msra.mxu0 0.0
  %3762 = vmatprep.subr.mxu0 0.0
  %3763 = vmatpush1.msra.mxu0 0.0
  %3764 = vmatprep.subr.mxu0 0.0
  %3765 = vmatpush1.msra.mxu0 0.0
  %3766 = vmatprep.subr.mxu0 0.0
  %3767 = vmatpush1.msra.mxu0 0.0
  %3768 = vmatprep.subr.mxu0 0.0
  %3769 = vmatpush1.msra.mxu0 0.0
  %3770 = vmatprep.subr.mxu0 0.0
  %3771 = vmatpush1.msra.mxu0 0.0
  %3772 = vmatprep.subr.mxu0 0.0
  %3773 = vmatpush1.msra.mxu0 0.0
  %3774 = vmatprep.subr.mxu0 0.0
  %3775 = vmatpush1.msra.mxu0 %v3740
  %3776 = vmatprep.subr.mxu0 0.0
  %3777 = vmatpush1.msra.mxu0 %v3738
  %3778 = vmatprep.subr.mxu0 0.0
  %3779 = vmatpush2.msra.mxu0 0.0
  %3780 = vmatprep.subr.mxu0 0.0
  %3781 = vmatpush2.msra.mxu0 0.0
  %3782 = vmatprep.subr.mxu0 0.0
  %3783 = vmatpush2.msra.mxu0 0.0
  %3784 = vmatprep.subr.mxu0 0.0
  %3785 = vmatpush2.msra.mxu0 0.0
  %3786 = vmatprep.subr.mxu0 0.0
  %3787 = vmatpush2.msra.mxu0 0.0
  %3788 = vmatprep.subr.mxu0 0.0
  %3789 = vmatpush2.msra.mxu0 0.0
  %3790 = vmatprep.subr.mxu0 0.0
  %3791 = vmatpush2.msra.mxu0 0.0
  %3792 = vmatprep.subr.mxu0 0.0
  %3793 = vmatpush2.msra.mxu0 0.0
  %3794 = vmatprep.subr.mxu0 0.0
  %3795 = vmatpush2.msra.mxu0 0.0
  %3796 = vmatprep.subr.mxu0 0.0
  %3797 = vmatpush2.msra.mxu0 0.0
  %3798 = vmatprep.subr.mxu0 0.0
  %3799 = vmatpush2.msra.mxu0 0.0
  %3800 = vmatprep.subr.mxu0 0.0
  %3801 = vmatpush2.msra.mxu0 0.0
  %3802 = vmatprep.subr.mxu0 0.0
  %3803 = vmatpush2.msra.mxu0 0.0
  %3804 = vmatprep.subr.mxu0 0.0
  %3805 = vmatpush2.msra.mxu0 0.0
  %3806 = vmatprep.subr.mxu0 0.0
  %3807 = vmatpush2.msra.mxu0 0.0
  %3808 = vmatprep.subr.mxu0 0.0
  %3809 = vmatpush2.msra.mxu0 0.0
  %3810 = vmatprep.mubr.f32.mxu0 0.0
  %3811 = vmatmul.mubr.f32.gmra.mxu0 %v3744
  %v3812 = vpop.f32.mrf.mxu0
  %v3813 = vadd.f32 0.0, %v3812
  %v3814 = vpop.f32.mrf.mxu0
  %3815 = vdwg.mxu0
  %v3816 = vadd.f32 %v3734, %v3813
  %s3817 = scalar_lea.vmem %s7, 104
  %v3818 = vld [vmem:[%s3817] sm:$0xff]
  %3819 = vrot.lane.b32.xlu0 %v2755, 102
  %v3820 = vpop.permute.xlu0 %3819
  %3821 = vrot.lane.b32.xlu0 %v2756, 102
  %v3822 = vpop.permute.xlu0 %3821
  %v3826 = vsel %vm2768, %v3818, 0
  %3828 = vmatprep.subr.mxu0 0.0
  %3829 = vmatpush1.msra.mxu0 0.0
  %3830 = vmatprep.subr.mxu0 0.0
  %3831 = vmatpush1.msra.mxu0 0.0
  %3832 = vmatprep.subr.mxu0 0.0
  %3833 = vmatpush1.msra.mxu0 0.0
  %3834 = vmatprep.subr.mxu0 0.0
  %3835 = vmatpush1.msra.mxu0 0.0
  %3836 = vmatprep.subr.mxu0 0.0
  %3837 = vmatpush1.msra.mxu0 0.0
  %3838 = vmatprep.subr.mxu0 0.0
  %3839 = vmatpush1.msra.mxu0 0.0
  %3840 = vmatprep.subr.mxu0 0.0
  %3841 = vmatpush1.msra.mxu0 0.0
  %3842 = vmatprep.subr.mxu0 0.0
  %3843 = vmatpush1.msra.mxu0 0.0
  %3844 = vmatprep.subr.mxu0 0.0
  %3845 = vmatpush1.msra.mxu0 0.0
  %3846 = vmatprep.subr.mxu0 0.0
  %3847 = vmatpush1.msra.mxu0 0.0
  %3848 = vmatprep.subr.mxu0 0.0
  %3849 = vmatpush1.msra.mxu0 0.0
  %3850 = vmatprep.subr.mxu0 0.0
  %3851 = vmatpush1.msra.mxu0 0.0
  %3852 = vmatprep.subr.mxu0 0.0
  %3853 = vmatpush1.msra.mxu0 0.0
  %3854 = vmatprep.subr.mxu0 0.0
  %3855 = vmatpush1.msra.mxu0 0.0
  %3856 = vmatprep.subr.mxu0 0.0
  %3857 = vmatpush1.msra.mxu0 %v3822
  %3858 = vmatprep.subr.mxu0 0.0
  %3859 = vmatpush1.msra.mxu0 %v3820
  %3860 = vmatprep.subr.mxu0 0.0
  %3861 = vmatpush2.msra.mxu0 0.0
  %3862 = vmatprep.subr.mxu0 0.0
  %3863 = vmatpush2.msra.mxu0 0.0
  %3864 = vmatprep.subr.mxu0 0.0
  %3865 = vmatpush2.msra.mxu0 0.0
  %3866 = vmatprep.subr.mxu0 0.0
  %3867 = vmatpush2.msra.mxu0 0.0
  %3868 = vmatprep.subr.mxu0 0.0
  %3869 = vmatpush2.msra.mxu0 0.0
  %3870 = vmatprep.subr.mxu0 0.0
  %3871 = vmatpush2.msra.mxu0 0.0
  %3872 = vmatprep.subr.mxu0 0.0
  %3873 = vmatpush2.msra.mxu0 0.0
  %3874 = vmatprep.subr.mxu0 0.0
  %3875 = vmatpush2.msra.mxu0 0.0
  %3876 = vmatprep.subr.mxu0 0.0
  %3877 = vmatpush2.msra.mxu0 0.0
  %3878 = vmatprep.subr.mxu0 0.0
  %3879 = vmatpush2.msra.mxu0 0.0
  %3880 = vmatprep.subr.mxu0 0.0
  %3881 = vmatpush2.msra.mxu0 0.0
  %3882 = vmatprep.subr.mxu0 0.0
  %3883 = vmatpush2.msra.mxu0 0.0
  %3884 = vmatprep.subr.mxu0 0.0
  %3885 = vmatpush2.msra.mxu0 0.0
  %3886 = vmatprep.subr.mxu0 0.0
  %3887 = vmatpush2.msra.mxu0 0.0
  %3888 = vmatprep.subr.mxu0 0.0
  %3889 = vmatpush2.msra.mxu0 0.0
  %3890 = vmatprep.subr.mxu0 0.0
  %3891 = vmatpush2.msra.mxu0 0.0
  %3892 = vmatprep.mubr.f32.mxu0 0.0
  %3893 = vmatmul.mubr.f32.gmra.mxu0 %v3826
  %v3894 = vpop.f32.mrf.mxu0
  %v3895 = vadd.f32 0.0, %v3894
  %v3896 = vpop.f32.mrf.mxu0
  %3897 = vdwg.mxu0
  %v3898 = vadd.f32 %v3816, %v3895
  %s3899 = scalar_lea.vmem %s7, 112
  %v3900 = vld [vmem:[%s3899] sm:$0xff]
  %3901 = vrot.lane.b32.xlu0 %v2755, 100
  %v3902 = vpop.permute.xlu0 %3901
  %3903 = vrot.lane.b32.xlu0 %v2756, 100
  %v3904 = vpop.permute.xlu0 %3903
  %v3908 = vsel %vm2768, %v3900, 0
  %3910 = vmatprep.subr.mxu0 0.0
  %3911 = vmatpush1.msra.mxu0 0.0
  %3912 = vmatprep.subr.mxu0 0.0
  %3913 = vmatpush1.msra.mxu0 0.0
  %3914 = vmatprep.subr.mxu0 0.0
  %3915 = vmatpush1.msra.mxu0 0.0
  %3916 = vmatprep.subr.mxu0 0.0
  %3917 = vmatpush1.msra.mxu0 0.0
  %3918 = vmatprep.subr.mxu0 0.0
  %3919 = vmatpush1.msra.mxu0 0.0
  %3920 = vmatprep.subr.mxu0 0.0
  %3921 = vmatpush1.msra.mxu0 0.0
  %3922 = vmatprep.subr.mxu0 0.0
  %3923 = vmatpush1.msra.mxu0 0.0
  %3924 = vmatprep.subr.mxu0 0.0
  %3925 = vmatpush1.msra.mxu0 0.0
  %3926 = vmatprep.subr.mxu0 0.0
  %3927 = vmatpush1.msra.mxu0 0.0
  %3928 = vmatprep.subr.mxu0 0.0
  %3929 = vmatpush1.msra.mxu0 0.0
  %3930 = vmatprep.subr.mxu0 0.0
  %3931 = vmatpush1.msra.mxu0 0.0
  %3932 = vmatprep.subr.mxu0 0.0
  %3933 = vmatpush1.msra.mxu0 0.0
  %3934 = vmatprep.subr.mxu0 0.0
  %3935 = vmatpush1.msra.mxu0 0.0
  %3936 = vmatprep.subr.mxu0 0.0
  %3937 = vmatpush1.msra.mxu0 0.0
  %3938 = vmatprep.subr.mxu0 0.0
  %3939 = vmatpush1.msra.mxu0 %v3904
  %3940 = vmatprep.subr.mxu0 0.0
  %3941 = vmatpush1.msra.mxu0 %v3902
  %3942 = vmatprep.subr.mxu0 0.0
  %3943 = vmatpush2.msra.mxu0 0.0
  %3944 = vmatprep.subr.mxu0 0.0
  %3945 = vmatpush2.msra.mxu0 0.0
  %3946 = vmatprep.subr.mxu0 0.0
  %3947 = vmatpush2.msra.mxu0 0.0
  %3948 = vmatprep.subr.mxu0 0.0
  %3949 = vmatpush2.msra.mxu0 0.0
  %3950 = vmatprep.subr.mxu0 0.0
  %3951 = vmatpush2.msra.mxu0 0.0
  %3952 = vmatprep.subr.mxu0 0.0
  %3953 = vmatpush2.msra.mxu0 0.0
  %3954 = vmatprep.subr.mxu0 0.0
  %3955 = vmatpush2.msra.mxu0 0.0
  %3956 = vmatprep.subr.mxu0 0.0
  %3957 = vmatpush2.msra.mxu0 0.0
  %3958 = vmatprep.subr.mxu0 0.0
  %3959 = vmatpush2.msra.mxu0 0.0
  %3960 = vmatprep.subr.mxu0 0.0
  %3961 = vmatpush2.msra.mxu0 0.0
  %3962 = vmatprep.subr.mxu0 0.0
  %3963 = vmatpush2.msra.mxu0 0.0
  %3964 = vmatprep.subr.mxu0 0.0
  %3965 = vmatpush2.msra.mxu0 0.0
  %3966 = vmatprep.subr.mxu0 0.0
  %3967 = vmatpush2.msra.mxu0 0.0
  %3968 = vmatprep.subr.mxu0 0.0
  %3969 = vmatpush2.msra.mxu0 0.0
  %3970 = vmatprep.subr.mxu0 0.0
  %3971 = vmatpush2.msra.mxu0 0.0
  %3972 = vmatprep.subr.mxu0 0.0
  %3973 = vmatpush2.msra.mxu0 0.0
  %3974 = vmatprep.mubr.f32.mxu0 0.0
  %3975 = vmatmul.mubr.f32.gmra.mxu0 %v3908
  %v3976 = vpop.f32.mrf.mxu0
  %v3977 = vadd.f32 0.0, %v3976
  %v3978 = vpop.f32.mrf.mxu0
  %3979 = vdwg.mxu0
  %v3980 = vadd.f32 %v3898, %v3977
  %s3981 = scalar_lea.vmem %s7, 120
  %v3982 = vld [vmem:[%s3981] sm:$0xff]
  %3983 = vrot.lane.b32.xlu0 %v2755, 98
  %v3984 = vpop.permute.xlu0 %3983
  %3985 = vrot.lane.b32.xlu0 %v2756, 98
  %v3986 = vpop.permute.xlu0 %3985
  %v3990 = vsel %vm2768, %v3982, 0
  %3992 = vmatprep.subr.mxu0 0.0
  %3993 = vmatpush1.msra.mxu0 0.0
  %3994 = vmatprep.subr.mxu0 0.0
  %3995 = vmatpush1.msra.mxu0 0.0
  %3996 = vmatprep.subr.mxu0 0.0
  %3997 = vmatpush1.msra.mxu0 0.0
  %3998 = vmatprep.subr.mxu0 0.0
  %3999 = vmatpush1.msra.mxu0 0.0
  %4000 = vmatprep.subr.mxu0 0.0
  %4001 = vmatpush1.msra.mxu0 0.0
  %4002 = vmatprep.subr.mxu0 0.0
  %4003 = vmatpush1.msra.mxu0 0.0
  %4004 = vmatprep.subr.mxu0 0.0
  %4005 = vmatpush1.msra.mxu0 0.0
  %4006 = vmatprep.subr.mxu0 0.0
  %4007 = vmatpush1.msra.mxu0 0.0
  %4008 = vmatprep.subr.mxu0 0.0
  %4009 = vmatpush1.msra.mxu0 0.0
  %4010 = vmatprep.subr.mxu0 0.0
  %4011 = vmatpush1.msra.mxu0 0.0
  %4012 = vmatprep.subr.mxu0 0.0
  %4013 = vmatpush1.msra.mxu0 0.0
  %4014 = vmatprep.subr.mxu0 0.0
  %4015 = vmatpush1.msra.mxu0 0.0
  %4016 = vmatprep.subr.mxu0 0.0
  %4017 = vmatpush1.msra.mxu0 0.0
  %4018 = vmatprep.subr.mxu0 0.0
  %4019 = vmatpush1.msra.mxu0 0.0
  %4020 = vmatprep.subr.mxu0 0.0
  %4021 = vmatpush1.msra.mxu0 %v3986
  %4022 = vmatprep.subr.mxu0 0.0
  %4023 = vmatpush1.msra.mxu0 %v3984
  %4024 = vmatprep.subr.mxu0 0.0
  %4025 = vmatpush2.msra.mxu0 0.0
  %4026 = vmatprep.subr.mxu0 0.0
  %4027 = vmatpush2.msra.mxu0 0.0
  %4028 = vmatprep.subr.mxu0 0.0
  %4029 = vmatpush2.msra.mxu0 0.0
  %4030 = vmatprep.subr.mxu0 0.0
  %4031 = vmatpush2.msra.mxu0 0.0
  %4032 = vmatprep.subr.mxu0 0.0
  %4033 = vmatpush2.msra.mxu0 0.0
  %4034 = vmatprep.subr.mxu0 0.0
  %4035 = vmatpush2.msra.mxu0 0.0
  %4036 = vmatprep.subr.mxu0 0.0
  %4037 = vmatpush2.msra.mxu0 0.0
  %4038 = vmatprep.subr.mxu0 0.0
  %4039 = vmatpush2.msra.mxu0 0.0
  %4040 = vmatprep.subr.mxu0 0.0
  %4041 = vmatpush2.msra.mxu0 0.0
  %4042 = vmatprep.subr.mxu0 0.0
  %4043 = vmatpush2.msra.mxu0 0.0
  %4044 = vmatprep.subr.mxu0 0.0
  %4045 = vmatpush2.msra.mxu0 0.0
  %4046 = vmatprep.subr.mxu0 0.0
  %4047 = vmatpush2.msra.mxu0 0.0
  %4048 = vmatprep.subr.mxu0 0.0
  %4049 = vmatpush2.msra.mxu0 0.0
  %4050 = vmatprep.subr.mxu0 0.0
  %4051 = vmatpush2.msra.mxu0 0.0
  %4052 = vmatprep.subr.mxu0 0.0
  %4053 = vmatpush2.msra.mxu0 0.0
  %4054 = vmatprep.subr.mxu0 0.0
  %4055 = vmatpush2.msra.mxu0 0.0
  %4056 = vmatprep.mubr.f32.mxu0 0.0
  %4057 = vmatmul.mubr.f32.gmra.mxu0 %v3990
  %v4058 = vpop.f32.mrf.mxu0
  %v4059 = vadd.f32 0.0, %v4058
  %v4060 = vpop.f32.mrf.mxu0
  %4061 = vdwg.mxu0
  %v4062 = vadd.f32 %v3980, %v4059
  %s4063 = scalar_lea.vmem %s7, 128
  %v4064 = vld [vmem:[%s4063] sm:$0xff]
  %4065 = vrot.lane.b32.xlu0 %v2755, 96
  %v4066 = vpop.permute.xlu0 %4065
  %4067 = vrot.lane.b32.xlu0 %v2756, 96
  %v4068 = vpop.permute.xlu0 %4067
  %v4072 = vsel %vm2768, %v4064, 0
  %4074 = vmatprep.subr.mxu0 0.0
  %4075 = vmatpush1.msra.mxu0 0.0
  %4076 = vmatprep.subr.mxu0 0.0
  %4077 = vmatpush1.msra.mxu0 0.0
  %4078 = vmatprep.subr.mxu0 0.0
  %4079 = vmatpush1.msra.mxu0 0.0
  %4080 = vmatprep.subr.mxu0 0.0
  %4081 = vmatpush1.msra.mxu0 0.0
  %4082 = vmatprep.subr.mxu0 0.0
  %4083 = vmatpush1.msra.mxu0 0.0
  %4084 = vmatprep.subr.mxu0 0.0
  %4085 = vmatpush1.msra.mxu0 0.0
  %4086 = vmatprep.subr.mxu0 0.0
  %4087 = vmatpush1.msra.mxu0 0.0
  %4088 = vmatprep.subr.mxu0 0.0
  %4089 = vmatpush1.msra.mxu0 0.0
  %4090 = vmatprep.subr.mxu0 0.0
  %4091 = vmatpush1.msra.mxu0 0.0
  %4092 = vmatprep.subr.mxu0 0.0
  %4093 = vmatpush1.msra.mxu0 0.0
  %4094 = vmatprep.subr.mxu0 0.0
  %4095 = vmatpush1.msra.mxu0 0.0
  %4096 = vmatprep.subr.mxu0 0.0
  %4097 = vmatpush1.msra.mxu0 0.0
  %4098 = vmatprep.subr.mxu0 0.0
  %4099 = vmatpush1.msra.mxu0 0.0
  %4100 = vmatprep.subr.mxu0 0.0
  %4101 = vmatpush1.msra.mxu0 0.0
  %4102 = vmatprep.subr.mxu0 0.0
  %4103 = vmatpush1.msra.mxu0 %v4068
  %4104 = vmatprep.subr.mxu0 0.0
  %4105 = vmatpush1.msra.mxu0 %v4066
  %4106 = vmatprep.subr.mxu0 0.0
  %4107 = vmatpush2.msra.mxu0 0.0
  %4108 = vmatprep.subr.mxu0 0.0
  %4109 = vmatpush2.msra.mxu0 0.0
  %4110 = vmatprep.subr.mxu0 0.0
  %4111 = vmatpush2.msra.mxu0 0.0
  %4112 = vmatprep.subr.mxu0 0.0
  %4113 = vmatpush2.msra.mxu0 0.0
  %4114 = vmatprep.subr.mxu0 0.0
  %4115 = vmatpush2.msra.mxu0 0.0
  %4116 = vmatprep.subr.mxu0 0.0
  %4117 = vmatpush2.msra.mxu0 0.0
  %4118 = vmatprep.subr.mxu0 0.0
  %4119 = vmatpush2.msra.mxu0 0.0
  %4120 = vmatprep.subr.mxu0 0.0
  %4121 = vmatpush2.msra.mxu0 0.0
  %4122 = vmatprep.subr.mxu0 0.0
  %4123 = vmatpush2.msra.mxu0 0.0
  %4124 = vmatprep.subr.mxu0 0.0
  %4125 = vmatpush2.msra.mxu0 0.0
  %4126 = vmatprep.subr.mxu0 0.0
  %4127 = vmatpush2.msra.mxu0 0.0
  %4128 = vmatprep.subr.mxu0 0.0
  %4129 = vmatpush2.msra.mxu0 0.0
  %4130 = vmatprep.subr.mxu0 0.0
  %4131 = vmatpush2.msra.mxu0 0.0
  %4132 = vmatprep.subr.mxu0 0.0
  %4133 = vmatpush2.msra.mxu0 0.0
  %4134 = vmatprep.subr.mxu0 0.0
  %4135 = vmatpush2.msra.mxu0 0.0
  %4136 = vmatprep.subr.mxu0 0.0
  %4137 = vmatpush2.msra.mxu0 0.0
  %4138 = vmatprep.mubr.f32.mxu0 0.0
  %4139 = vmatmul.mubr.f32.gmra.mxu0 %v4072
  %v4140 = vpop.f32.mrf.mxu0
  %v4141 = vadd.f32 0.0, %v4140
  %v4142 = vpop.f32.mrf.mxu0
  %4143 = vdwg.mxu0
  %v4144 = vadd.f32 %v4062, %v4141
  %s4145 = scalar_lea.vmem %s7, 136
  %v4146 = vld [vmem:[%s4145] sm:$0xff]
  %4147 = vrot.lane.b32.xlu0 %v2755, 94
  %v4148 = vpop.permute.xlu0 %4147
  %4149 = vrot.lane.b32.xlu0 %v2756, 94
  %v4150 = vpop.permute.xlu0 %4149
  %v4154 = vsel %vm2768, %v4146, 0
  %4156 = vmatprep.subr.mxu0 0.0
  %4157 = vmatpush1.msra.mxu0 0.0
  %4158 = vmatprep.subr.mxu0 0.0
  %4159 = vmatpush1.msra.mxu0 0.0
  %4160 = vmatprep.subr.mxu0 0.0
  %4161 = vmatpush1.msra.mxu0 0.0
  %4162 = vmatprep.subr.mxu0 0.0
  %4163 = vmatpush1.msra.mxu0 0.0
  %4164 = vmatprep.subr.mxu0 0.0
  %4165 = vmatpush1.msra.mxu0 0.0
  %4166 = vmatprep.subr.mxu0 0.0
  %4167 = vmatpush1.msra.mxu0 0.0
  %4168 = vmatprep.subr.mxu0 0.0
  %4169 = vmatpush1.msra.mxu0 0.0
  %4170 = vmatprep.subr.mxu0 0.0
  %4171 = vmatpush1.msra.mxu0 0.0
  %4172 = vmatprep.subr.mxu0 0.0
  %4173 = vmatpush1.msra.mxu0 0.0
  %4174 = vmatprep.subr.mxu0 0.0
  %4175 = vmatpush1.msra.mxu0 0.0
  %4176 = vmatprep.subr.mxu0 0.0
  %4177 = vmatpush1.msra.mxu0 0.0
  %4178 = vmatprep.subr.mxu0 0.0
  %4179 = vmatpush1.msra.mxu0 0.0
  %4180 = vmatprep.subr.mxu0 0.0
  %4181 = vmatpush1.msra.mxu0 0.0
  %4182 = vmatprep.subr.mxu0 0.0
  %4183 = vmatpush1.msra.mxu0 0.0
  %4184 = vmatprep.subr.mxu0 0.0
  %4185 = vmatpush1.msra.mxu0 %v4150
  %4186 = vmatprep.subr.mxu0 0.0
  %4187 = vmatpush1.msra.mxu0 %v4148
  %4188 = vmatprep.subr.mxu0 0.0
  %4189 = vmatpush2.msra.mxu0 0.0
  %4190 = vmatprep.subr.mxu0 0.0
  %4191 = vmatpush2.msra.mxu0 0.0
  %4192 = vmatprep.subr.mxu0 0.0
  %4193 = vmatpush2.msra.mxu0 0.0
  %4194 = vmatprep.subr.mxu0 0.0
  %4195 = vmatpush2.msra.mxu0 0.0
  %4196 = vmatprep.subr.mxu0 0.0
  %4197 = vmatpush2.msra.mxu0 0.0
  %4198 = vmatprep.subr.mxu0 0.0
  %4199 = vmatpush2.msra.mxu0 0.0
  %4200 = vmatprep.subr.mxu0 0.0
  %4201 = vmatpush2.msra.mxu0 0.0
  %4202 = vmatprep.subr.mxu0 0.0
  %4203 = vmatpush2.msra.mxu0 0.0
  %4204 = vmatprep.subr.mxu0 0.0
  %4205 = vmatpush2.msra.mxu0 0.0
  %4206 = vmatprep.subr.mxu0 0.0
  %4207 = vmatpush2.msra.mxu0 0.0
  %4208 = vmatprep.subr.mxu0 0.0
  %4209 = vmatpush2.msra.mxu0 0.0
  %4210 = vmatprep.subr.mxu0 0.0
  %4211 = vmatpush2.msra.mxu0 0.0
  %4212 = vmatprep.subr.mxu0 0.0
  %4213 = vmatpush2.msra.mxu0 0.0
  %4214 = vmatprep.subr.mxu0 0.0
  %4215 = vmatpush2.msra.mxu0 0.0
  %4216 = vmatprep.subr.mxu0 0.0
  %4217 = vmatpush2.msra.mxu0 0.0
  %4218 = vmatprep.subr.mxu0 0.0
  %4219 = vmatpush2.msra.mxu0 0.0
  %4220 = vmatprep.mubr.f32.mxu0 0.0
  %4221 = vmatmul.mubr.f32.gmra.mxu0 %v4154
  %v4222 = vpop.f32.mrf.mxu0
  %v4223 = vadd.f32 0.0, %v4222
  %v4224 = vpop.f32.mrf.mxu0
  %4225 = vdwg.mxu0
  %v4226 = vadd.f32 %v4144, %v4223
  %s4227 = scalar_lea.vmem %s7, 144
  %v4228 = vld [vmem:[%s4227] sm:$0xff]
  %4229 = vrot.lane.b32.xlu0 %v2755, 92
  %v4230 = vpop.permute.xlu0 %4229
  %4231 = vrot.lane.b32.xlu0 %v2756, 92
  %v4232 = vpop.permute.xlu0 %4231
  %v4236 = vsel %vm2768, %v4228, 0
  %4238 = vmatprep.subr.mxu0 0.0
  %4239 = vmatpush1.msra.mxu0 0.0
  %4240 = vmatprep.subr.mxu0 0.0
  %4241 = vmatpush1.msra.mxu0 0.0
  %4242 = vmatprep.subr.mxu0 0.0
  %4243 = vmatpush1.msra.mxu0 0.0
  %4244 = vmatprep.subr.mxu0 0.0
  %4245 = vmatpush1.msra.mxu0 0.0
  %4246 = vmatprep.subr.mxu0 0.0
  %4247 = vmatpush1.msra.mxu0 0.0
  %4248 = vmatprep.subr.mxu0 0.0
  %4249 = vmatpush1.msra.mxu0 0.0
  %4250 = vmatprep.subr.mxu0 0.0
  %4251 = vmatpush1.msra.mxu0 0.0
  %4252 = vmatprep.subr.mxu0 0.0
  %4253 = vmatpush1.msra.mxu0 0.0
  %4254 = vmatprep.subr.mxu0 0.0
  %4255 = vmatpush1.msra.mxu0 0.0
  %4256 = vmatprep.subr.mxu0 0.0
  %4257 = vmatpush1.msra.mxu0 0.0
  %4258 = vmatprep.subr.mxu0 0.0
  %4259 = vmatpush1.msra.mxu0 0.0
  %4260 = vmatprep.subr.mxu0 0.0
  %4261 = vmatpush1.msra.mxu0 0.0
  %4262 = vmatprep.subr.mxu0 0.0
  %4263 = vmatpush1.msra.mxu0 0.0
  %4264 = vmatprep.subr.mxu0 0.0
  %4265 = vmatpush1.msra.mxu0 0.0
  %4266 = vmatprep.subr.mxu0 0.0
  %4267 = vmatpush1.msra.mxu0 %v4232
  %4268 = vmatprep.subr.mxu0 0.0
  %4269 = vmatpush1.msra.mxu0 %v4230
  %4270 = vmatprep.subr.mxu0 0.0
  %4271 = vmatpush2.msra.mxu0 0.0
  %4272 = vmatprep.subr.mxu0 0.0
  %4273 = vmatpush2.msra.mxu0 0.0
  %4274 = vmatprep.subr.mxu0 0.0
  %4275 = vmatpush2.msra.mxu0 0.0
  %4276 = vmatprep.subr.mxu0 0.0
  %4277 = vmatpush2.msra.mxu0 0.0
  %4278 = vmatprep.subr.mxu0 0.0
  %4279 = vmatpush2.msra.mxu0 0.0
  %4280 = vmatprep.subr.mxu0 0.0
  %4281 = vmatpush2.msra.mxu0 0.0
  %4282 = vmatprep.subr.mxu0 0.0
  %4283 = vmatpush2.msra.mxu0 0.0
  %4284 = vmatprep.subr.mxu0 0.0
  %4285 = vmatpush2.msra.mxu0 0.0
  %4286 = vmatprep.subr.mxu0 0.0
  %4287 = vmatpush2.msra.mxu0 0.0
  %4288 = vmatprep.subr.mxu0 0.0
  %4289 = vmatpush2.msra.mxu0 0.0
  %4290 = vmatprep.subr.mxu0 0.0
  %4291 = vmatpush2.msra.mxu0 0.0
  %4292 = vmatprep.subr.mxu0 0.0
  %4293 = vmatpush2.msra.mxu0 0.0
  %4294 = vmatprep.subr.mxu0 0.0
  %4295 = vmatpush2.msra.mxu0 0.0
  %4296 = vmatprep.subr.mxu0 0.0
  %4297 = vmatpush2.msra.mxu0 0.0
  %4298 = vmatprep.subr.mxu0 0.0
  %4299 = vmatpush2.msra.mxu0 0.0
  %4300 = vmatprep.subr.mxu0 0.0
  %4301 = vmatpush2.msra.mxu0 0.0
  %4302 = vmatprep.mubr.f32.mxu0 0.0
  %4303 = vmatmul.mubr.f32.gmra.mxu0 %v4236
  %v4304 = vpop.f32.mrf.mxu0
  %v4305 = vadd.f32 0.0, %v4304
  %v4306 = vpop.f32.mrf.mxu0
  %4307 = vdwg.mxu0
  %v4308 = vadd.f32 %v4226, %v4305
  %s4309 = scalar_lea.vmem %s7, 152
  %v4310 = vld [vmem:[%s4309] sm:$0xff]
  %4311 = vrot.lane.b32.xlu0 %v2755, 90
  %v4312 = vpop.permute.xlu0 %4311
  %4313 = vrot.lane.b32.xlu0 %v2756, 90
  %v4314 = vpop.permute.xlu0 %4313
  %v4318 = vsel %vm2768, %v4310, 0
  %4320 = vmatprep.subr.mxu0 0.0
  %4321 = vmatpush1.msra.mxu0 0.0
  %4322 = vmatprep.subr.mxu0 0.0
  %4323 = vmatpush1.msra.mxu0 0.0
  %4324 = vmatprep.subr.mxu0 0.0
  %4325 = vmatpush1.msra.mxu0 0.0
  %4326 = vmatprep.subr.mxu0 0.0
  %4327 = vmatpush1.msra.mxu0 0.0
  %4328 = vmatprep.subr.mxu0 0.0
  %4329 = vmatpush1.msra.mxu0 0.0
  %4330 = vmatprep.subr.mxu0 0.0
  %4331 = vmatpush1.msra.mxu0 0.0
  %4332 = vmatprep.subr.mxu0 0.0
  %4333 = vmatpush1.msra.mxu0 0.0
  %4334 = vmatprep.subr.mxu0 0.0
  %4335 = vmatpush1.msra.mxu0 0.0
  %4336 = vmatprep.subr.mxu0 0.0
  %4337 = vmatpush1.msra.mxu0 0.0
  %4338 = vmatprep.subr.mxu0 0.0
  %4339 = vmatpush1.msra.mxu0 0.0
  %4340 = vmatprep.subr.mxu0 0.0
  %4341 = vmatpush1.msra.mxu0 0.0
  %4342 = vmatprep.subr.mxu0 0.0
  %4343 = vmatpush1.msra.mxu0 0.0
  %4344 = vmatprep.subr.mxu0 0.0
  %4345 = vmatpush1.msra.mxu0 0.0
  %4346 = vmatprep.subr.mxu0 0.0
  %4347 = vmatpush1.msra.mxu0 0.0
  %4348 = vmatprep.subr.mxu0 0.0
  %4349 = vmatpush1.msra.mxu0 %v4314
  %4350 = vmatprep.subr.mxu0 0.0
  %4351 = vmatpush1.msra.mxu0 %v4312
  %4352 = vmatprep.subr.mxu0 0.0
  %4353 = vmatpush2.msra.mxu0 0.0
  %4354 = vmatprep.subr.mxu0 0.0
  %4355 = vmatpush2.msra.mxu0 0.0
  %4356 = vmatprep.subr.mxu0 0.0
  %4357 = vmatpush2.msra.mxu0 0.0
  %4358 = vmatprep.subr.mxu0 0.0
  %4359 = vmatpush2.msra.mxu0 0.0
  %4360 = vmatprep.subr.mxu0 0.0
  %4361 = vmatpush2.msra.mxu0 0.0
  %4362 = vmatprep.subr.mxu0 0.0
  %4363 = vmatpush2.msra.mxu0 0.0
  %4364 = vmatprep.subr.mxu0 0.0
  %4365 = vmatpush2.msra.mxu0 0.0
  %4366 = vmatprep.subr.mxu0 0.0
  %4367 = vmatpush2.msra.mxu0 0.0
  %4368 = vmatprep.subr.mxu0 0.0
  %4369 = vmatpush2.msra.mxu0 0.0
  %4370 = vmatprep.subr.mxu0 0.0
  %4371 = vmatpush2.msra.mxu0 0.0
  %4372 = vmatprep.subr.mxu0 0.0
  %4373 = vmatpush2.msra.mxu0 0.0
  %4374 = vmatprep.subr.mxu0 0.0
  %4375 = vmatpush2.msra.mxu0 0.0
  %4376 = vmatprep.subr.mxu0 0.0
  %4377 = vmatpush2.msra.mxu0 0.0
  %4378 = vmatprep.subr.mxu0 0.0
  %4379 = vmatpush2.msra.mxu0 0.0
  %4380 = vmatprep.subr.mxu0 0.0
  %4381 = vmatpush2.msra.mxu0 0.0
  %4382 = vmatprep.subr.mxu0 0.0
  %4383 = vmatpush2.msra.mxu0 0.0
  %4384 = vmatprep.mubr.f32.mxu0 0.0
  %4385 = vmatmul.mubr.f32.gmra.mxu0 %v4318
  %v4386 = vpop.f32.mrf.mxu0
  %v4387 = vadd.f32 0.0, %v4386
  %v4388 = vpop.f32.mrf.mxu0
  %4389 = vdwg.mxu0
  %v4390 = vadd.f32 %v4308, %v4387
  %s4391 = scalar_lea.vmem %s7, 160
  %v4392 = vld [vmem:[%s4391] sm:$0xff]
  %4393 = vrot.lane.b32.xlu0 %v2755, 88
  %v4394 = vpop.permute.xlu0 %4393
  %4395 = vrot.lane.b32.xlu0 %v2756, 88
  %v4396 = vpop.permute.xlu0 %4395
  %v4400 = vsel %vm2768, %v4392, 0
  %4402 = vmatprep.subr.mxu0 0.0
  %4403 = vmatpush1.msra.mxu0 0.0
  %4404 = vmatprep.subr.mxu0 0.0
  %4405 = vmatpush1.msra.mxu0 0.0
  %4406 = vmatprep.subr.mxu0 0.0
  %4407 = vmatpush1.msra.mxu0 0.0
  %4408 = vmatprep.subr.mxu0 0.0
  %4409 = vmatpush1.msra.mxu0 0.0
  %4410 = vmatprep.subr.mxu0 0.0
  %4411 = vmatpush1.msra.mxu0 0.0
  %4412 = vmatprep.subr.mxu0 0.0
  %4413 = vmatpush1.msra.mxu0 0.0
  %4414 = vmatprep.subr.mxu0 0.0
  %4415 = vmatpush1.msra.mxu0 0.0
  %4416 = vmatprep.subr.mxu0 0.0
  %4417 = vmatpush1.msra.mxu0 0.0
  %4418 = vmatprep.subr.mxu0 0.0
  %4419 = vmatpush1.msra.mxu0 0.0
  %4420 = vmatprep.subr.mxu0 0.0
  %4421 = vmatpush1.msra.mxu0 0.0
  %4422 = vmatprep.subr.mxu0 0.0
  %4423 = vmatpush1.msra.mxu0 0.0
  %4424 = vmatprep.subr.mxu0 0.0
  %4425 = vmatpush1.msra.mxu0 0.0
  %4426 = vmatprep.subr.mxu0 0.0
  %4427 = vmatpush1.msra.mxu0 0.0
  %4428 = vmatprep.subr.mxu0 0.0
  %4429 = vmatpush1.msra.mxu0 0.0
  %4430 = vmatprep.subr.mxu0 0.0
  %4431 = vmatpush1.msra.mxu0 %v4396
  %4432 = vmatprep.subr.mxu0 0.0
  %4433 = vmatpush1.msra.mxu0 %v4394
  %4434 = vmatprep.subr.mxu0 0.0
  %4435 = vmatpush2.msra.mxu0 0.0
  %4436 = vmatprep.subr.mxu0 0.0
  %4437 = vmatpush2.msra.mxu0 0.0
  %4438 = vmatprep.subr.mxu0 0.0
  %4439 = vmatpush2.msra.mxu0 0.0
  %4440 = vmatprep.subr.mxu0 0.0
  %4441 = vmatpush2.msra.mxu0 0.0
  %4442 = vmatprep.subr.mxu0 0.0
  %4443 = vmatpush2.msra.mxu0 0.0
  %4444 = vmatprep.subr.mxu0 0.0
  %4445 = vmatpush2.msra.mxu0 0.0
  %4446 = vmatprep.subr.mxu0 0.0
  %4447 = vmatpush2.msra.mxu0 0.0
  %4448 = vmatprep.subr.mxu0 0.0
  %4449 = vmatpush2.msra.mxu0 0.0
  %4450 = vmatprep.subr.mxu0 0.0
  %4451 = vmatpush2.msra.mxu0 0.0
  %4452 = vmatprep.subr.mxu0 0.0
  %4453 = vmatpush2.msra.mxu0 0.0
  %4454 = vmatprep.subr.mxu0 0.0
  %4455 = vmatpush2.msra.mxu0 0.0
  %4456 = vmatprep.subr.mxu0 0.0
  %4457 = vmatpush2.msra.mxu0 0.0
  %4458 = vmatprep.subr.mxu0 0.0
  %4459 = vmatpush2.msra.mxu0 0.0
  %4460 = vmatprep.subr.mxu0 0.0
  %4461 = vmatpush2.msra.mxu0 0.0
  %4462 = vmatprep.subr.mxu0 0.0
  %4463 = vmatpush2.msra.mxu0 0.0
  %4464 = vmatprep.subr.mxu0 0.0
  %4465 = vmatpush2.msra.mxu0 0.0
  %4466 = vmatprep.mubr.f32.mxu0 0.0
  %4467 = vmatmul.mubr.f32.gmra.mxu0 %v4400
  %v4468 = vpop.f32.mrf.mxu0
  %v4469 = vadd.f32 0.0, %v4468
  %v4470 = vpop.f32.mrf.mxu0
  %4471 = vdwg.mxu0
  %v4472 = vadd.f32 %v4390, %v4469
  %s4473 = scalar_lea.vmem %s7, 168
  %v4474 = vld [vmem:[%s4473] sm:$0xff]
  %4475 = vrot.lane.b32.xlu0 %v2755, 86
  %v4476 = vpop.permute.xlu0 %4475
  %4477 = vrot.lane.b32.xlu0 %v2756, 86
  %v4478 = vpop.permute.xlu0 %4477
  %v4482 = vsel %vm2768, %v4474, 0
  %4484 = vmatprep.subr.mxu0 0.0
  %4485 = vmatpush1.msra.mxu0 0.0
  %4486 = vmatprep.subr.mxu0 0.0
  %4487 = vmatpush1.msra.mxu0 0.0
  %4488 = vmatprep.subr.mxu0 0.0
  %4489 = vmatpush1.msra.mxu0 0.0
  %4490 = vmatprep.subr.mxu0 0.0
  %4491 = vmatpush1.msra.mxu0 0.0
  %4492 = vmatprep.subr.mxu0 0.0
  %4493 = vmatpush1.msra.mxu0 0.0
  %4494 = vmatprep.subr.mxu0 0.0
  %4495 = vmatpush1.msra.mxu0 0.0
  %4496 = vmatprep.subr.mxu0 0.0
  %4497 = vmatpush1.msra.mxu0 0.0
  %4498 = vmatprep.subr.mxu0 0.0
  %4499 = vmatpush1.msra.mxu0 0.0
  %4500 = vmatprep.subr.mxu0 0.0
  %4501 = vmatpush1.msra.mxu0 0.0
  %4502 = vmatprep.subr.mxu0 0.0
  %4503 = vmatpush1.msra.mxu0 0.0
  %4504 = vmatprep.subr.mxu0 0.0
  %4505 = vmatpush1.msra.mxu0 0.0
  %4506 = vmatprep.subr.mxu0 0.0
  %4507 = vmatpush1.msra.mxu0 0.0
  %4508 = vmatprep.subr.mxu0 0.0
  %4509 = vmatpush1.msra.mxu0 0.0
  %4510 = vmatprep.subr.mxu0 0.0
  %4511 = vmatpush1.msra.mxu0 0.0
  %4512 = vmatprep.subr.mxu0 0.0
  %4513 = vmatpush1.msra.mxu0 %v4478
  %4514 = vmatprep.subr.mxu0 0.0
  %4515 = vmatpush1.msra.mxu0 %v4476
  %4516 = vmatprep.subr.mxu0 0.0
  %4517 = vmatpush2.msra.mxu0 0.0
  %4518 = vmatprep.subr.mxu0 0.0
  %4519 = vmatpush2.msra.mxu0 0.0
  %4520 = vmatprep.subr.mxu0 0.0
  %4521 = vmatpush2.msra.mxu0 0.0
  %4522 = vmatprep.subr.mxu0 0.0
  %4523 = vmatpush2.msra.mxu0 0.0
  %4524 = vmatprep.subr.mxu0 0.0
  %4525 = vmatpush2.msra.mxu0 0.0
  %4526 = vmatprep.subr.mxu0 0.0
  %4527 = vmatpush2.msra.mxu0 0.0
  %4528 = vmatprep.subr.mxu0 0.0
  %4529 = vmatpush2.msra.mxu0 0.0
  %4530 = vmatprep.subr.mxu0 0.0
  %4531 = vmatpush2.msra.mxu0 0.0
  %4532 = vmatprep.subr.mxu0 0.0
  %4533 = vmatpush2.msra.mxu0 0.0
  %4534 = vmatprep.subr.mxu0 0.0
  %4535 = vmatpush2.msra.mxu0 0.0
  %4536 = vmatprep.subr.mxu0 0.0
  %4537 = vmatpush2.msra.mxu0 0.0
  %4538 = vmatprep.subr.mxu0 0.0
  %4539 = vmatpush2.msra.mxu0 0.0
  %4540 = vmatprep.subr.mxu0 0.0
  %4541 = vmatpush2.msra.mxu0 0.0
  %4542 = vmatprep.subr.mxu0 0.0
  %4543 = vmatpush2.msra.mxu0 0.0
  %4544 = vmatprep.subr.mxu0 0.0
  %4545 = vmatpush2.msra.mxu0 0.0
  %4546 = vmatprep.subr.mxu0 0.0
  %4547 = vmatpush2.msra.mxu0 0.0
  %4548 = vmatprep.mubr.f32.mxu0 0.0
  %4549 = vmatmul.mubr.f32.gmra.mxu0 %v4482
  %v4550 = vpop.f32.mrf.mxu0
  %v4551 = vadd.f32 0.0, %v4550
  %v4552 = vpop.f32.mrf.mxu0
  %4553 = vdwg.mxu0
  %v4554 = vadd.f32 %v4472, %v4551
  %s4555 = scalar_lea.vmem %s7, 176
  %v4556 = vld [vmem:[%s4555] sm:$0xff]
  %4557 = vrot.lane.b32.xlu0 %v2755, 84
  %v4558 = vpop.permute.xlu0 %4557
  %4559 = vrot.lane.b32.xlu0 %v2756, 84
  %v4560 = vpop.permute.xlu0 %4559
  %v4564 = vsel %vm2768, %v4556, 0
  %4566 = vmatprep.subr.mxu0 0.0
  %4567 = vmatpush1.msra.mxu0 0.0
  %4568 = vmatprep.subr.mxu0 0.0
  %4569 = vmatpush1.msra.mxu0 0.0
  %4570 = vmatprep.subr.mxu0 0.0
  %4571 = vmatpush1.msra.mxu0 0.0
  %4572 = vmatprep.subr.mxu0 0.0
  %4573 = vmatpush1.msra.mxu0 0.0
  %4574 = vmatprep.subr.mxu0 0.0
  %4575 = vmatpush1.msra.mxu0 0.0
  %4576 = vmatprep.subr.mxu0 0.0
  %4577 = vmatpush1.msra.mxu0 0.0
  %4578 = vmatprep.subr.mxu0 0.0
  %4579 = vmatpush1.msra.mxu0 0.0
  %4580 = vmatprep.subr.mxu0 0.0
  %4581 = vmatpush1.msra.mxu0 0.0
  %4582 = vmatprep.subr.mxu0 0.0
  %4583 = vmatpush1.msra.mxu0 0.0
  %4584 = vmatprep.subr.mxu0 0.0
  %4585 = vmatpush1.msra.mxu0 0.0
  %4586 = vmatprep.subr.mxu0 0.0
  %4587 = vmatpush1.msra.mxu0 0.0
  %4588 = vmatprep.subr.mxu0 0.0
  %4589 = vmatpush1.msra.mxu0 0.0
  %4590 = vmatprep.subr.mxu0 0.0
  %4591 = vmatpush1.msra.mxu0 0.0
  %4592 = vmatprep.subr.mxu0 0.0
  %4593 = vmatpush1.msra.mxu0 0.0
  %4594 = vmatprep.subr.mxu0 0.0
  %4595 = vmatpush1.msra.mxu0 %v4560
  %4596 = vmatprep.subr.mxu0 0.0
  %4597 = vmatpush1.msra.mxu0 %v4558
  %4598 = vmatprep.subr.mxu0 0.0
  %4599 = vmatpush2.msra.mxu0 0.0
  %4600 = vmatprep.subr.mxu0 0.0
  %4601 = vmatpush2.msra.mxu0 0.0
  %4602 = vmatprep.subr.mxu0 0.0
  %4603 = vmatpush2.msra.mxu0 0.0
  %4604 = vmatprep.subr.mxu0 0.0
  %4605 = vmatpush2.msra.mxu0 0.0
  %4606 = vmatprep.subr.mxu0 0.0
  %4607 = vmatpush2.msra.mxu0 0.0
  %4608 = vmatprep.subr.mxu0 0.0
  %4609 = vmatpush2.msra.mxu0 0.0
  %4610 = vmatprep.subr.mxu0 0.0
  %4611 = vmatpush2.msra.mxu0 0.0
  %4612 = vmatprep.subr.mxu0 0.0
  %4613 = vmatpush2.msra.mxu0 0.0
  %4614 = vmatprep.subr.mxu0 0.0
  %4615 = vmatpush2.msra.mxu0 0.0
  %4616 = vmatprep.subr.mxu0 0.0
  %4617 = vmatpush2.msra.mxu0 0.0
  %4618 = vmatprep.subr.mxu0 0.0
  %4619 = vmatpush2.msra.mxu0 0.0
  %4620 = vmatprep.subr.mxu0 0.0
  %4621 = vmatpush2.msra.mxu0 0.0
  %4622 = vmatprep.subr.mxu0 0.0
  %4623 = vmatpush2.msra.mxu0 0.0
  %4624 = vmatprep.subr.mxu0 0.0
  %4625 = vmatpush2.msra.mxu0 0.0
  %4626 = vmatprep.subr.mxu0 0.0
  %4627 = vmatpush2.msra.mxu0 0.0
  %4628 = vmatprep.subr.mxu0 0.0
  %4629 = vmatpush2.msra.mxu0 0.0
  %4630 = vmatprep.mubr.f32.mxu0 0.0
  %4631 = vmatmul.mubr.f32.gmra.mxu0 %v4564
  %v4632 = vpop.f32.mrf.mxu0
  %v4633 = vadd.f32 0.0, %v4632
  %v4634 = vpop.f32.mrf.mxu0
  %4635 = vdwg.mxu0
  %v4636 = vadd.f32 %v4554, %v4633
  %s4637 = scalar_lea.vmem %s7, 184
  %v4638 = vld [vmem:[%s4637] sm:$0xff]
  %4639 = vrot.lane.b32.xlu0 %v2755, 82
  %v4640 = vpop.permute.xlu0 %4639
  %4641 = vrot.lane.b32.xlu0 %v2756, 82
  %v4642 = vpop.permute.xlu0 %4641
  %v4646 = vsel %vm2768, %v4638, 0
  %4648 = vmatprep.subr.mxu0 0.0
  %4649 = vmatpush1.msra.mxu0 0.0
  %4650 = vmatprep.subr.mxu0 0.0
  %4651 = vmatpush1.msra.mxu0 0.0
  %4652 = vmatprep.subr.mxu0 0.0
  %4653 = vmatpush1.msra.mxu0 0.0
  %4654 = vmatprep.subr.mxu0 0.0
  %4655 = vmatpush1.msra.mxu0 0.0
  %4656 = vmatprep.subr.mxu0 0.0
  %4657 = vmatpush1.msra.mxu0 0.0
  %4658 = vmatprep.subr.mxu0 0.0
  %4659 = vmatpush1.msra.mxu0 0.0
  %4660 = vmatprep.subr.mxu0 0.0
  %4661 = vmatpush1.msra.mxu0 0.0
  %4662 = vmatprep.subr.mxu0 0.0
  %4663 = vmatpush1.msra.mxu0 0.0
  %4664 = vmatprep.subr.mxu0 0.0
  %4665 = vmatpush1.msra.mxu0 0.0
  %4666 = vmatprep.subr.mxu0 0.0
  %4667 = vmatpush1.msra.mxu0 0.0
  %4668 = vmatprep.subr.mxu0 0.0
  %4669 = vmatpush1.msra.mxu0 0.0
  %4670 = vmatprep.subr.mxu0 0.0
  %4671 = vmatpush1.msra.mxu0 0.0
  %4672 = vmatprep.subr.mxu0 0.0
  %4673 = vmatpush1.msra.mxu0 0.0
  %4674 = vmatprep.subr.mxu0 0.0
  %4675 = vmatpush1.msra.mxu0 0.0
  %4676 = vmatprep.subr.mxu0 0.0
  %4677 = vmatpush1.msra.mxu0 %v4642
  %4678 = vmatprep.subr.mxu0 0.0
  %4679 = vmatpush1.msra.mxu0 %v4640
  %4680 = vmatprep.subr.mxu0 0.0
  %4681 = vmatpush2.msra.mxu0 0.0
  %4682 = vmatprep.subr.mxu0 0.0
  %4683 = vmatpush2.msra.mxu0 0.0
  %4684 = vmatprep.subr.mxu0 0.0
  %4685 = vmatpush2.msra.mxu0 0.0
  %4686 = vmatprep.subr.mxu0 0.0
  %4687 = vmatpush2.msra.mxu0 0.0
  %4688 = vmatprep.subr.mxu0 0.0
  %4689 = vmatpush2.msra.mxu0 0.0
  %4690 = vmatprep.subr.mxu0 0.0
  %4691 = vmatpush2.msra.mxu0 0.0
  %4692 = vmatprep.subr.mxu0 0.0
  %4693 = vmatpush2.msra.mxu0 0.0
  %4694 = vmatprep.subr.mxu0 0.0
  %4695 = vmatpush2.msra.mxu0 0.0
  %4696 = vmatprep.subr.mxu0 0.0
  %4697 = vmatpush2.msra.mxu0 0.0
  %4698 = vmatprep.subr.mxu0 0.0
  %4699 = vmatpush2.msra.mxu0 0.0
  %4700 = vmatprep.subr.mxu0 0.0
  %4701 = vmatpush2.msra.mxu0 0.0
  %4702 = vmatprep.subr.mxu0 0.0
  %4703 = vmatpush2.msra.mxu0 0.0
  %4704 = vmatprep.subr.mxu0 0.0
  %4705 = vmatpush2.msra.mxu0 0.0
  %4706 = vmatprep.subr.mxu0 0.0
  %4707 = vmatpush2.msra.mxu0 0.0
  %4708 = vmatprep.subr.mxu0 0.0
  %4709 = vmatpush2.msra.mxu0 0.0
  %4710 = vmatprep.subr.mxu0 0.0
  %4711 = vmatpush2.msra.mxu0 0.0
  %4712 = vmatprep.mubr.f32.mxu0 0.0
  %4713 = vmatmul.mubr.f32.gmra.mxu0 %v4646
  %v4714 = vpop.f32.mrf.mxu0
  %v4715 = vadd.f32 0.0, %v4714
  %v4716 = vpop.f32.mrf.mxu0
  %4717 = vdwg.mxu0
  %v4718 = vadd.f32 %v4636, %v4715
  %s4719 = scalar_lea.vmem %s7, 192
  %v4720 = vld [vmem:[%s4719] sm:$0xff]
  %4721 = vrot.lane.b32.xlu0 %v2755, 80
  %v4722 = vpop.permute.xlu0 %4721
  %4723 = vrot.lane.b32.xlu0 %v2756, 80
  %v4724 = vpop.permute.xlu0 %4723
  %v4728 = vsel %vm2768, %v4720, 0
  %4730 = vmatprep.subr.mxu0 0.0
  %4731 = vmatpush1.msra.mxu0 0.0
  %4732 = vmatprep.subr.mxu0 0.0
  %4733 = vmatpush1.msra.mxu0 0.0
  %4734 = vmatprep.subr.mxu0 0.0
  %4735 = vmatpush1.msra.mxu0 0.0
  %4736 = vmatprep.subr.mxu0 0.0
  %4737 = vmatpush1.msra.mxu0 0.0
  %4738 = vmatprep.subr.mxu0 0.0
  %4739 = vmatpush1.msra.mxu0 0.0
  %4740 = vmatprep.subr.mxu0 0.0
  %4741 = vmatpush1.msra.mxu0 0.0
  %4742 = vmatprep.subr.mxu0 0.0
  %4743 = vmatpush1.msra.mxu0 0.0
  %4744 = vmatprep.subr.mxu0 0.0
  %4745 = vmatpush1.msra.mxu0 0.0
  %4746 = vmatprep.subr.mxu0 0.0
  %4747 = vmatpush1.msra.mxu0 0.0
  %4748 = vmatprep.subr.mxu0 0.0
  %4749 = vmatpush1.msra.mxu0 0.0
  %4750 = vmatprep.subr.mxu0 0.0
  %4751 = vmatpush1.msra.mxu0 0.0
  %4752 = vmatprep.subr.mxu0 0.0
  %4753 = vmatpush1.msra.mxu0 0.0
  %4754 = vmatprep.subr.mxu0 0.0
  %4755 = vmatpush1.msra.mxu0 0.0
  %4756 = vmatprep.subr.mxu0 0.0
  %4757 = vmatpush1.msra.mxu0 0.0
  %4758 = vmatprep.subr.mxu0 0.0
  %4759 = vmatpush1.msra.mxu0 %v4724
  %4760 = vmatprep.subr.mxu0 0.0
  %4761 = vmatpush1.msra.mxu0 %v4722
  %4762 = vmatprep.subr.mxu0 0.0
  %4763 = vmatpush2.msra.mxu0 0.0
  %4764 = vmatprep.subr.mxu0 0.0
  %4765 = vmatpush2.msra.mxu0 0.0
  %4766 = vmatprep.subr.mxu0 0.0
  %4767 = vmatpush2.msra.mxu0 0.0
  %4768 = vmatprep.subr.mxu0 0.0
  %4769 = vmatpush2.msra.mxu0 0.0
  %4770 = vmatprep.subr.mxu0 0.0
  %4771 = vmatpush2.msra.mxu0 0.0
  %4772 = vmatprep.subr.mxu0 0.0
  %4773 = vmatpush2.msra.mxu0 0.0
  %4774 = vmatprep.subr.mxu0 0.0
  %4775 = vmatpush2.msra.mxu0 0.0
  %4776 = vmatprep.subr.mxu0 0.0
  %4777 = vmatpush2.msra.mxu0 0.0
  %4778 = vmatprep.subr.mxu0 0.0
  %4779 = vmatpush2.msra.mxu0 0.0
  %4780 = vmatprep.subr.mxu0 0.0
  %4781 = vmatpush2.msra.mxu0 0.0
  %4782 = vmatprep.subr.mxu0 0.0
  %4783 = vmatpush2.msra.mxu0 0.0
  %4784 = vmatprep.subr.mxu0 0.0
  %4785 = vmatpush2.msra.mxu0 0.0
  %4786 = vmatprep.subr.mxu0 0.0
  %4787 = vmatpush2.msra.mxu0 0.0
  %4788 = vmatprep.subr.mxu0 0.0
  %4789 = vmatpush2.msra.mxu0 0.0
  %4790 = vmatprep.subr.mxu0 0.0
  %4791 = vmatpush2.msra.mxu0 0.0
  %4792 = vmatprep.subr.mxu0 0.0
  %4793 = vmatpush2.msra.mxu0 0.0
  %4794 = vmatprep.mubr.f32.mxu0 0.0
  %4795 = vmatmul.mubr.f32.gmra.mxu0 %v4728
  %v4796 = vpop.f32.mrf.mxu0
  %v4797 = vadd.f32 0.0, %v4796
  %v4798 = vpop.f32.mrf.mxu0
  %4799 = vdwg.mxu0
  %v4800 = vadd.f32 %v4718, %v4797
  %s4801 = scalar_lea.vmem %s7, 200
  %v4802 = vld [vmem:[%s4801] sm:$0xff]
  %4803 = vrot.lane.b32.xlu0 %v2755, 78
  %v4804 = vpop.permute.xlu0 %4803
  %4805 = vrot.lane.b32.xlu0 %v2756, 78
  %v4806 = vpop.permute.xlu0 %4805
  %v4810 = vsel %vm2768, %v4802, 0
  %4812 = vmatprep.subr.mxu0 0.0
  %4813 = vmatpush1.msra.mxu0 0.0
  %4814 = vmatprep.subr.mxu0 0.0
  %4815 = vmatpush1.msra.mxu0 0.0
  %4816 = vmatprep.subr.mxu0 0.0
  %4817 = vmatpush1.msra.mxu0 0.0
  %4818 = vmatprep.subr.mxu0 0.0
  %4819 = vmatpush1.msra.mxu0 0.0
  %4820 = vmatprep.subr.mxu0 0.0
  %4821 = vmatpush1.msra.mxu0 0.0
  %4822 = vmatprep.subr.mxu0 0.0
  %4823 = vmatpush1.msra.mxu0 0.0
  %4824 = vmatprep.subr.mxu0 0.0
  %4825 = vmatpush1.msra.mxu0 0.0
  %4826 = vmatprep.subr.mxu0 0.0
  %4827 = vmatpush1.msra.mxu0 0.0
  %4828 = vmatprep.subr.mxu0 0.0
  %4829 = vmatpush1.msra.mxu0 0.0
  %4830 = vmatprep.subr.mxu0 0.0
  %4831 = vmatpush1.msra.mxu0 0.0
  %4832 = vmatprep.subr.mxu0 0.0
  %4833 = vmatpush1.msra.mxu0 0.0
  %4834 = vmatprep.subr.mxu0 0.0
  %4835 = vmatpush1.msra.mxu0 0.0
  %4836 = vmatprep.subr.mxu0 0.0
  %4837 = vmatpush1.msra.mxu0 0.0
  %4838 = vmatprep.subr.mxu0 0.0
  %4839 = vmatpush1.msra.mxu0 0.0
  %4840 = vmatprep.subr.mxu0 0.0
  %4841 = vmatpush1.msra.mxu0 %v4806
  %4842 = vmatprep.subr.mxu0 0.0
  %4843 = vmatpush1.msra.mxu0 %v4804
  %4844 = vmatprep.subr.mxu0 0.0
  %4845 = vmatpush2.msra.mxu0 0.0
  %4846 = vmatprep.subr.mxu0 0.0
  %4847 = vmatpush2.msra.mxu0 0.0
  %4848 = vmatprep.subr.mxu0 0.0
  %4849 = vmatpush2.msra.mxu0 0.0
  %4850 = vmatprep.subr.mxu0 0.0
  %4851 = vmatpush2.msra.mxu0 0.0
  %4852 = vmatprep.subr.mxu0 0.0
  %4853 = vmatpush2.msra.mxu0 0.0
  %4854 = vmatprep.subr.mxu0 0.0
  %4855 = vmatpush2.msra.mxu0 0.0
  %4856 = vmatprep.subr.mxu0 0.0
  %4857 = vmatpush2.msra.mxu0 0.0
  %4858 = vmatprep.subr.mxu0 0.0
  %4859 = vmatpush2.msra.mxu0 0.0
  %4860 = vmatprep.subr.mxu0 0.0
  %4861 = vmatpush2.msra.mxu0 0.0
  %4862 = vmatprep.subr.mxu0 0.0
  %4863 = vmatpush2.msra.mxu0 0.0
  %4864 = vmatprep.subr.mxu0 0.0
  %4865 = vmatpush2.msra.mxu0 0.0
  %4866 = vmatprep.subr.mxu0 0.0
  %4867 = vmatpush2.msra.mxu0 0.0
  %4868 = vmatprep.subr.mxu0 0.0
  %4869 = vmatpush2.msra.mxu0 0.0
  %4870 = vmatprep.subr.mxu0 0.0
  %4871 = vmatpush2.msra.mxu0 0.0
  %4872 = vmatprep.subr.mxu0 0.0
  %4873 = vmatpush2.msra.mxu0 0.0
  %4874 = vmatprep.subr.mxu0 0.0
  %4875 = vmatpush2.msra.mxu0 0.0
  %4876 = vmatprep.mubr.f32.mxu0 0.0
  %4877 = vmatmul.mubr.f32.gmra.mxu0 %v4810
  %v4878 = vpop.f32.mrf.mxu0
  %v4879 = vadd.f32 0.0, %v4878
  %v4880 = vpop.f32.mrf.mxu0
  %4881 = vdwg.mxu0
  %v4882 = vadd.f32 %v4800, %v4879
  %s4883 = scalar_lea.vmem %s7, 208
  %v4884 = vld [vmem:[%s4883] sm:$0xff]
  %4885 = vrot.lane.b32.xlu0 %v2755, 76
  %v4886 = vpop.permute.xlu0 %4885
  %4887 = vrot.lane.b32.xlu0 %v2756, 76
  %v4888 = vpop.permute.xlu0 %4887
  %v4892 = vsel %vm2768, %v4884, 0
  %4894 = vmatprep.subr.mxu0 0.0
  %4895 = vmatpush1.msra.mxu0 0.0
  %4896 = vmatprep.subr.mxu0 0.0
  %4897 = vmatpush1.msra.mxu0 0.0
  %4898 = vmatprep.subr.mxu0 0.0
  %4899 = vmatpush1.msra.mxu0 0.0
  %4900 = vmatprep.subr.mxu0 0.0
  %4901 = vmatpush1.msra.mxu0 0.0
  %4902 = vmatprep.subr.mxu0 0.0
  %4903 = vmatpush1.msra.mxu0 0.0
  %4904 = vmatprep.subr.mxu0 0.0
  %4905 = vmatpush1.msra.mxu0 0.0
  %4906 = vmatprep.subr.mxu0 0.0
  %4907 = vmatpush1.msra.mxu0 0.0
  %4908 = vmatprep.subr.mxu0 0.0
  %4909 = vmatpush1.msra.mxu0 0.0
  %4910 = vmatprep.subr.mxu0 0.0
  %4911 = vmatpush1.msra.mxu0 0.0
  %4912 = vmatprep.subr.mxu0 0.0
  %4913 = vmatpush1.msra.mxu0 0.0
  %4914 = vmatprep.subr.mxu0 0.0
  %4915 = vmatpush1.msra.mxu0 0.0
  %4916 = vmatprep.subr.mxu0 0.0
  %4917 = vmatpush1.msra.mxu0 0.0
  %4918 = vmatprep.subr.mxu0 0.0
  %4919 = vmatpush1.msra.mxu0 0.0
  %4920 = vmatprep.subr.mxu0 0.0
  %4921 = vmatpush1.msra.mxu0 0.0
  %4922 = vmatprep.subr.mxu0 0.0
  %4923 = vmatpush1.msra.mxu0 %v4888
  %4924 = vmatprep.subr.mxu0 0.0
  %4925 = vmatpush1.msra.mxu0 %v4886
  %4926 = vmatprep.subr.mxu0 0.0
  %4927 = vmatpush2.msra.mxu0 0.0
  %4928 = vmatprep.subr.mxu0 0.0
  %4929 = vmatpush2.msra.mxu0 0.0
  %4930 = vmatprep.subr.mxu0 0.0
  %4931 = vmatpush2.msra.mxu0 0.0
  %4932 = vmatprep.subr.mxu0 0.0
  %4933 = vmatpush2.msra.mxu0 0.0
  %4934 = vmatprep.subr.mxu0 0.0
  %4935 = vmatpush2.msra.mxu0 0.0
  %4936 = vmatprep.subr.mxu0 0.0
  %4937 = vmatpush2.msra.mxu0 0.0
  %4938 = vmatprep.subr.mxu0 0.0
  %4939 = vmatpush2.msra.mxu0 0.0
  %4940 = vmatprep.subr.mxu0 0.0
  %4941 = vmatpush2.msra.mxu0 0.0
  %4942 = vmatprep.subr.mxu0 0.0
  %4943 = vmatpush2.msra.mxu0 0.0
  %4944 = vmatprep.subr.mxu0 0.0
  %4945 = vmatpush2.msra.mxu0 0.0
  %4946 = vmatprep.subr.mxu0 0.0
  %4947 = vmatpush2.msra.mxu0 0.0
  %4948 = vmatprep.subr.mxu0 0.0
  %4949 = vmatpush2.msra.mxu0 0.0
  %4950 = vmatprep.subr.mxu0 0.0
  %4951 = vmatpush2.msra.mxu0 0.0
  %4952 = vmatprep.subr.mxu0 0.0
  %4953 = vmatpush2.msra.mxu0 0.0
  %4954 = vmatprep.subr.mxu0 0.0
  %4955 = vmatpush2.msra.mxu0 0.0
  %4956 = vmatprep.subr.mxu0 0.0
  %4957 = vmatpush2.msra.mxu0 0.0
  %4958 = vmatprep.mubr.f32.mxu0 0.0
  %4959 = vmatmul.mubr.f32.gmra.mxu0 %v4892
  %v4960 = vpop.f32.mrf.mxu0
  %v4961 = vadd.f32 0.0, %v4960
  %v4962 = vpop.f32.mrf.mxu0
  %4963 = vdwg.mxu0
  %v4964 = vadd.f32 %v4882, %v4961
  %v4965 = vld [vmem:[%s8] sm:$0xff]
  %4967 = vset.pattern.permute.xlu0 0
  %4968 = vperm.xlu0 %4967, %v4965
  %v4969 = vpop.permute.xlu0 %4968
  %v4971 = vadd.f32 %v4964, %v4969
  %vm4972 = vcmask 15360
  %4973 = vst.msk [vmem:[%s9] sm:$0xff] %vm4972, %v4971
  // Predicated region
  $region38: #{encoder_blue_forward.1} parent=0 // pred_check
    _
  $region39: #{encoder_blue_forward.1} parent=0 // pred_check_branch
    %4975 = sbr.rel (0) target = $region41
  $region40: #{encoder_blue_forward.1} parent=0 // pred_region
    _
  $region41: #{encoder_blue_forward.1} parent=0 // pred_fallthru
    _
  // Predicated region
  $region42: #{encoder_blue_forward.1} parent=0 // pred_check
    _
  $region43: #{encoder_blue_forward.1} parent=0 // pred_check_branch
    %4977 = sbr.rel (0) target = $region45
  $region44: #{encoder_blue_forward.1} parent=0 // pred_region
    _
  $region45: #{encoder_blue_forward.1} parent=0 // pred_fallthru
    _

</llo_original>
